<compile_context>
chip_gen: v6e
topology: v6e:2x2x1
jax: 0.10.0
libtpu: 0.0.40
codegen_flags: <defaults>
</compile_context>

<pallas_src>
import functools
import math

import jax
import jax.numpy as jnp
import numpy as np
from jax import lax
from jax.experimental import pallas as pl
from jax.experimental.pallas import tpu as pltpu

LN_EPS = 1e-5

_WEIGHT_ORDER = ("wqkv", "bqkv", "wo", "bo", "g1", "be1",
                 "w1", "b1", "w2", "b2", "g2", "be2")


def _layernorm(x, g, b):
    mu = jnp.mean(x, axis=-1, keepdims=True)
    var = jnp.mean((x - mu) ** 2, axis=-1, keepdims=True)
    return (x - mu) * lax.rsqrt(var + LN_EPS) * g + b


# --------------------------------------------------------------------------
# Fused encoder-stack kernel: one grid step == one batch element, all layers.
# --------------------------------------------------------------------------
def _encoder_stack_kernel(nhead, x_ref, mask_ref,
                          wqkv_ref, bqkv_ref, wo_ref, bo_ref,
                          g1_ref, be1_ref, w1_ref, b1_ref,
                          w2_ref, b2_ref, g2_ref, be2_ref,
                          o_ref):
    S, D = x_ref.shape
    hd = D // nhead
    scale = 1.0 / math.sqrt(hd)
    nlayers = wqkv_ref.shape[0]

    x = x_ref[...]                                           # (S, D)
    # Hoisted once (not per head / per layer): additive key-padding mask.
    mask_b = jnp.broadcast_to(mask_ref[...], (S, S))         # (S, S)

    for l in range(nlayers):        # static unroll: whole stack, one grid step
        # ---- one wide QKV matmul: (S, D) @ (D, 3D) ----
        qkv = (jnp.dot(x, wqkv_ref[l], preferred_element_type=jnp.float32)
               + bqkv_ref[l])                                # (S, 3D)

        # ---- per-head attention; out-projection folded per head ----
        attn = jnp.zeros((S, D), jnp.float32)
        for h in range(nhead):       # static lane slices of the QKV slab
            q = qkv[:, h * hd:(h + 1) * hd]                  # (S, hd)
            k = qkv[:, D + h * hd:D + (h + 1) * hd]          # (S, hd)
            v = qkv[:, 2 * D + h * hd:2 * D + (h + 1) * hd]  # (S, hd)
            s = lax.dot_general(q, k, (((1,), (1,)), ((), ())),
                                preferred_element_type=jnp.float32)
            s = s * scale + mask_b
            s = s - jnp.max(s, axis=-1, keepdims=True)
            p = jnp.exp(s)
            p = p / jnp.sum(p, axis=-1, keepdims=True)       # exact f32 softmax
            ctx = jnp.dot(p, v, preferred_element_type=jnp.float32)   # (S, hd)
            # out-projection rows grouped per head: (hd, D)
            attn = attn + jnp.dot(ctx, wo_ref[l, h],
                                  preferred_element_type=jnp.float32)
        attn = attn + bo_ref[l]

        # ---- post block: residual + LN1 + FFN(relu) + residual + LN2 ----
        n1 = _layernorm(x + attn, g1_ref[l], be1_ref[l])
        hidden = jnp.maximum(
            jnp.dot(n1, w1_ref[l], preferred_element_type=jnp.float32)
            + b1_ref[l], 0.0)                                # (S, DFFP)
        ff = (jnp.dot(hidden, w2_ref[l], preferred_element_type=jnp.float32)
              + b2_ref[l])
        x = _layernorm(n1 + ff, g2_ref[l], be2_ref[l])       # carry to next layer

    o_ref[...] = x                   # single HBM writeback per batch element


# --------------------------------------------------------------------------
# Wrapper: stack weights per layer (done ONCE, outside the call path),
# group out-proj rows per head, zero-pad the FFN hidden dim to 128 lanes.
# --------------------------------------------------------------------------
def _prepare_stacked_params(layer_params, nhead):
    L = len(layer_params)
    stack = lambda name: jnp.stack([p[name] for p in layer_params])

    wqkv = stack("wqkv")                                  # (L, D, 3D)
    D = wqkv.shape[1]
    hd = D // nhead
    wo = stack("wo").reshape(L, nhead, hd, D)             # rows grouped per head

    w1, b1, w2 = stack("w1"), stack("b1"), stack("w2")
    dff = w1.shape[-1]
    dffp = ((dff + 127) // 128) * 128                     # 400 -> 512 (lane aligned)
    pad = dffp - dff
    w1 = jnp.pad(w1, ((0, 0), (0, 0), (0, pad)))
    b1 = jnp.pad(b1, ((0, 0), (0, 0), (0, pad)))
    w2 = jnp.pad(w2, ((0, 0), (0, pad), (0, 0)))

    return dict(
        wqkv=wqkv, bqkv=stack("bqkv"),
        wo=wo, bo=stack("bo"),
        g1=stack("g1"), be1=stack("be1"),
        w1=w1, b1=b1, w2=w2, b2=stack("b2"),
        g2=stack("g2"), be2=stack("be2"),
    )


@functools.partial(jax.jit, static_argnames=("nhead",))
def self_attn_enc(x, key_padding_mask, stacked_params, nhead):
    """x: (B,S,D) f32; key_padding_mask: bool (B,S), True == padded key."""
    B, S, D = x.shape
    mask_add = jnp.where(key_padding_mask, -1e9, 0.0).astype(jnp.float32)[:, None, :]

    def full_spec(arr):             # whole stacked weight, constant across grid
        n = arr.ndim
        return pl.BlockSpec(arr.shape, lambda b, _n=n: (0,) * _n)

    in_specs = [
        pl.BlockSpec((None, S, D), lambda b: (b, 0, 0)),   # x (per batch element)
        pl.BlockSpec((None, 1, S), lambda b: (b, 0, 0)),   # additive mask
    ] + [full_spec(stacked_params[name]) for name in _WEIGHT_ORDER]

    return pl.pallas_call(
        functools.partial(_encoder_stack_kernel, nhead),
        out_shape=jax.ShapeDtypeStruct((B, S, D), jnp.float32),
        grid=(B,),
        in_specs=in_specs,
        out_specs=pl.BlockSpec((None, S, D), lambda b: (b, 0, 0)),
        compiler_params=pltpu.CompilerParams(
            dimension_semantics=("parallel",)),   # v7x: one batch element per TC
    )(x, mask_add, *[stacked_params[name] for name in _WEIGHT_ORDER])
    # TODO(synk): dropout layers are identity here (eval-mode / dropout=0.0).


# --------------------------------------------------------------------------
# Pure-JAX reference (same math, original unpadded/unsplit params)
# --------------------------------------------------------------------------
def _ref_layer(x, mask_add, p, H):
    B, S, D = x.shape
    hd = D // H
    qkv = x @ p["wqkv"] + p["bqkv"]
    q, k, v = jnp.split(qkv, 3, axis=-1)
    th = lambda t: t.reshape(B, S, H, hd).transpose(0, 2, 1, 3)
    qh, kh, vh = th(q), th(k), th(v)
    s = jnp.einsum("bhqd,bhkd->bhqk", qh, kh) / math.sqrt(hd) + mask_add[:, None, :, :]
    a = jax.nn.softmax(s, axis=-1)
    ctx = jnp.einsum("bhqk,bhkd->bhqd", a, vh).transpose(0, 2, 1, 3).reshape(B, S, D)
    n1 = _layernorm(x + ctx @ p["wo"] + p["bo"], p["g1"], p["be1"])
    r2 = n1 + jnp.maximum(n1 @ p["w1"] + p["b1"], 0.0) @ p["w2"] + p["b2"]
    return _layernorm(r2, p["g2"], p["be2"])


def _ref_forward(x, mask, layer_params, H):
    mask_add = jnp.where(mask, -1e9, 0.0).astype(jnp.float32)[:, None, :]
    out = x
    for p in layer_params:
        out = _ref_layer(out, mask_add, p, H)
    return out


# --------------------------------------------------------------------------
# Parameter init (deterministic, synthetic, non-trivial biases / LN params)
# --------------------------------------------------------------------------
def init_layer_params(key, D, DFF):
    ks = jax.random.split(key, 12)
    f32 = jnp.float32
    n = lambda k, shape, scale=0.05: (jax.random.normal(k, shape) * scale).astype(f32)
    return dict(
        wqkv=n(ks[0], (D, 3 * D)), bqkv=n(ks[1], (1, 3 * D)),
        wo=n(ks[2], (D, D)), bo=n(ks[3], (1, D)),
        g1=(1.0 + n(ks[4], (1, D), 0.1)).astype(f32), be1=n(ks[5], (1, D), 0.1),
        w1=n(ks[6], (D, DFF)), b1=n(ks[7], (1, DFF)),
        w2=n(ks[8], (DFF, D)), b2=n(ks[9], (1, D)),
        g2=(1.0 + n(ks[10], (1, D), 0.1)).astype(f32), be2=n(ks[11], (1, D), 0.1),
    )


# --------------------------------------------------------------------------
if __name__ == "__main__":
    B, S, D, NHEAD, NLAYERS, DFF = 2, 8, 32, 4, 2, 400  # d_model=32, nhead=4, nlayers=2

    key = jax.random.PRNGKey(0)
    kx, *layer_keys = jax.random.split(key, 1 + NLAYERS)
    x = jax.random.normal(kx, (B, S, D), dtype=jnp.float32)
    # key padding mask: batch 0 fully valid, batch 1 has last 2 positions padded
    mask = jnp.array([[False] * S, [False] * (S - 2) + [True] * 2], dtype=jnp.bool_)
    params = [init_layer_params(k, D, DFF) for k in layer_keys]

    # Stack / split / pad weights ONCE, outside the (jitted) call path.
    stacked = _prepare_stacked_params(params, NHEAD)

    out = self_attn_enc(x, mask, stacked, NHEAD)
    out = jax.block_until_ready(out)

    ref = _ref_forward(x, mask, params, NHEAD)
    np.testing.assert_allclose(np.asarray(out), np.asarray(ref), rtol=1e-4, atol=1e-4)

    print("KERNEL_OK")
</pallas_src>

<mosaic_0001>
module attributes {stable_mosaic.version = 11 : i64} {
  func.func @_encoder_stack_kernel(%arg0: i32, %arg1: memref<1x8x32xf32, #tpu.memory_space<vmem>>, %arg2: memref<1x1x8xf32, #tpu.memory_space<vmem>>, %arg3: memref<2x32x96xf32, #tpu.memory_space<vmem>>, %arg4: memref<2x1x96xf32, #tpu.memory_space<vmem>>, %arg5: memref<2x4x8x32xf32, #tpu.memory_space<vmem>>, %arg6: memref<2x1x32xf32, #tpu.memory_space<vmem>>, %arg7: memref<2x1x32xf32, #tpu.memory_space<vmem>>, %arg8: memref<2x1x32xf32, #tpu.memory_space<vmem>>, %arg9: memref<2x32x512xf32, #tpu.memory_space<vmem>>, %arg10: memref<2x1x512xf32, #tpu.memory_space<vmem>>, %arg11: memref<2x512x32xf32, #tpu.memory_space<vmem>>, %arg12: memref<2x1x32xf32, #tpu.memory_space<vmem>>, %arg13: memref<2x1x32xf32, #tpu.memory_space<vmem>>, %arg14: memref<2x1x32xf32, #tpu.memory_space<vmem>>, %arg15: memref<1x8x32xf32, #tpu.memory_space<vmem>>) attributes {dimension_semantics = [#tpu.dimension_semantics<parallel>], iteration_bounds = array<i64: 2>, scalar_prefetch = 0 : i64, scratch_operands = 0 : i64, tpu.core_type = #tpu.core_type<tc>, window_params = [{transform_indices = @transform_0, window_bounds = array<i64: 1, 8, 32>}, {transform_indices = @transform_1, window_bounds = array<i64: 1, 1, 8>}, {pipeline_mode = #tpu.pipeline_mode<synchronous>, transform_indices = @transform_2, window_bounds = array<i64: 2, 32, 96>}, {pipeline_mode = #tpu.pipeline_mode<synchronous>, transform_indices = @transform_3, window_bounds = array<i64: 2, 1, 96>}, {pipeline_mode = #tpu.pipeline_mode<synchronous>, transform_indices = @transform_4, window_bounds = array<i64: 2, 4, 8, 32>}, {pipeline_mode = #tpu.pipeline_mode<synchronous>, transform_indices = @transform_5, window_bounds = array<i64: 2, 1, 32>}, {pipeline_mode = #tpu.pipeline_mode<synchronous>, transform_indices = @transform_6, window_bounds = array<i64: 2, 1, 32>}, {pipeline_mode = #tpu.pipeline_mode<synchronous>, transform_indices = @transform_7, window_bounds = array<i64: 2, 1, 32>}, {pipeline_mode = #tpu.pipeline_mode<synchronous>, transform_indices = @transform_8, window_bounds = array<i64: 2, 32, 512>}, {pipeline_mode = #tpu.pipeline_mode<synchronous>, transform_indices = @transform_9, window_bounds = array<i64: 2, 1, 512>}, {pipeline_mode = #tpu.pipeline_mode<synchronous>, transform_indices = @transform_10, window_bounds = array<i64: 2, 512, 32>}, {pipeline_mode = #tpu.pipeline_mode<synchronous>, transform_indices = @transform_11, window_bounds = array<i64: 2, 1, 32>}, {pipeline_mode = #tpu.pipeline_mode<synchronous>, transform_indices = @transform_12, window_bounds = array<i64: 2, 1, 32>}, {pipeline_mode = #tpu.pipeline_mode<synchronous>, transform_indices = @transform_13, window_bounds = array<i64: 2, 1, 32>}, {transform_indices = @transform_14, window_bounds = array<i64: 1, 8, 32>}]} {
    %c0 = arith.constant 0 : index
    %c0_0 = arith.constant 0 : index
    %c0_1 = arith.constant 0 : index
    %0 = vector.load %arg1[%c0, %c0_0, %c0_1] : memref<1x8x32xf32, #tpu.memory_space<vmem>>, vector<1x8x32xf32>
    %1 = vector.shape_cast %0 : vector<1x8x32xf32> to vector<8x32xf32>
    %c0_2 = arith.constant 0 : index
    %c0_3 = arith.constant 0 : index
    %c0_4 = arith.constant 0 : index
    %2 = vector.load %arg2[%c0_2, %c0_3, %c0_4] : memref<1x1x8xf32, #tpu.memory_space<vmem>>, vector<1x1x8xf32>
    %3 = vector.shape_cast %2 : vector<1x1x8xf32> to vector<1x8xf32>
    %4 = vector.shape_cast %3 : vector<1x8xf32> to vector<1x8xf32>
    %5 = vector.broadcast %4 : vector<1x8xf32> to vector<8x8xf32>
    %c0_5 = arith.constant 0 : index
    %c0_6 = arith.constant 0 : index
    %c0_7 = arith.constant 0 : index
    %6 = vector.load %arg3[%c0_5, %c0_6, %c0_7] : memref<2x32x96xf32, #tpu.memory_space<vmem>>, vector<1x32x96xf32>
    %7 = vector.shape_cast %6 : vector<1x32x96xf32> to vector<32x96xf32>
    %cst = arith.constant dense<0.000000e+00> : vector<8x96xf32>
    %8 = tpu.matmul %1, %7, %cst {dimension_numbers = #tpu.dot_dimension_numbers<[1], [0], [0], [1], [0, 0, 1, 1], [], []>} : vector<8x32xf32>, vector<32x96xf32>, vector<8x96xf32> -> vector<8x96xf32>
    %c0_8 = arith.constant 0 : index
    %c0_9 = arith.constant 0 : index
    %c0_10 = arith.constant 0 : index
    %9 = vector.load %arg4[%c0_8, %c0_9, %c0_10] : memref<2x1x96xf32, #tpu.memory_space<vmem>>, vector<1x1x96xf32>
    %10 = vector.shape_cast %9 : vector<1x1x96xf32> to vector<1x96xf32>
    %11 = vector.broadcast %10 : vector<1x96xf32> to vector<8x96xf32>
    %12 = arith.addf %8, %11 : vector<8x96xf32>
    %cst_11 = arith.constant 0.000000e+00 : f32
    %13 = vector.broadcast %cst_11 : f32 to vector<8x32xf32>
    %14 = vector.extract_strided_slice %12 {offsets = [0, 0], sizes = [8, 8], strides = [1, 1]} : vector<8x96xf32> to vector<8x8xf32>
    %15 = vector.extract_strided_slice %12 {offsets = [0, 32], sizes = [8, 8], strides = [1, 1]} : vector<8x96xf32> to vector<8x8xf32>
    %16 = vector.extract_strided_slice %12 {offsets = [0, 64], sizes = [8, 8], strides = [1, 1]} : vector<8x96xf32> to vector<8x8xf32>
    %cst_12 = arith.constant dense<0.000000e+00> : vector<8x8xf32>
    %17 = tpu.matmul %14, %15, %cst_12 {dimension_numbers = #tpu.dot_dimension_numbers<[1], [1], [0], [0], [0, 0, 1, 0], [], []>} : vector<8x8xf32>, vector<8x8xf32>, vector<8x8xf32> -> vector<8x8xf32>
    %cst_13 = arith.constant 0.353553385 : f32
    %18 = vector.broadcast %cst_13 : f32 to vector<8x8xf32>
    %19 = arith.mulf %17, %18 : vector<8x8xf32>
    %20 = arith.addf %19, %5 : vector<8x8xf32>
    %cst_14 = arith.constant dense<0xFF800000> : vector<8xf32>
    %21 = vector.multi_reduction <maximumf>, %20, %cst_14 [1] : vector<8x8xf32> to vector<8xf32>
    %22 = vector.shape_cast %21 : vector<8xf32> to vector<8x1xf32>
    %23 = vector.broadcast %22 : vector<8x1xf32> to vector<8x8xf32>
    %24 = arith.subf %20, %23 : vector<8x8xf32>
    %25 = math.exp %24 : vector<8x8xf32>
    %cst_15 = arith.constant dense<0.000000e+00> : vector<8xf32>
    %26 = vector.multi_reduction <add>, %25, %cst_15 [1] : vector<8x8xf32> to vector<8xf32>
    %27 = vector.shape_cast %26 : vector<8xf32> to vector<8x1xf32>
    %28 = vector.broadcast %27 : vector<8x1xf32> to vector<8x8xf32>
    %29 = arith.divf %25, %28 : vector<8x8xf32>
    %cst_16 = arith.constant dense<0.000000e+00> : vector<8x8xf32>
    %30 = tpu.matmul %29, %16, %cst_16 {dimension_numbers = #tpu.dot_dimension_numbers<[1], [0], [0], [1], [0, 0, 1, 1], [], []>} : vector<8x8xf32>, vector<8x8xf32>, vector<8x8xf32> -> vector<8x8xf32>
    %c0_17 = arith.constant 0 : index
    %c0_18 = arith.constant 0 : index
    %c0_19 = arith.constant 0 : index
    %c0_20 = arith.constant 0 : index
    %31 = vector.load %arg5[%c0_17, %c0_18, %c0_19, %c0_20] : memref<2x4x8x32xf32, #tpu.memory_space<vmem>>, vector<1x1x8x32xf32>
    %32 = vector.shape_cast %31 : vector<1x1x8x32xf32> to vector<8x32xf32>
    %cst_21 = arith.constant dense<0.000000e+00> : vector<8x32xf32>
    %33 = tpu.matmul %30, %32, %cst_21 {dimension_numbers = #tpu.dot_dimension_numbers<[1], [0], [0], [1], [0, 0, 1, 1], [], []>} : vector<8x8xf32>, vector<8x32xf32>, vector<8x32xf32> -> vector<8x32xf32>
    %34 = arith.addf %13, %33 : vector<8x32xf32>
    %35 = vector.extract_strided_slice %12 {offsets = [0, 8], sizes = [8, 8], strides = [1, 1]} : vector<8x96xf32> to vector<8x8xf32>
    %36 = vector.extract_strided_slice %12 {offsets = [0, 40], sizes = [8, 8], strides = [1, 1]} : vector<8x96xf32> to vector<8x8xf32>
    %37 = vector.extract_strided_slice %12 {offsets = [0, 72], sizes = [8, 8], strides = [1, 1]} : vector<8x96xf32> to vector<8x8xf32>
    %cst_22 = arith.constant dense<0.000000e+00> : vector<8x8xf32>
    %38 = tpu.matmul %35, %36, %cst_22 {dimension_numbers = #tpu.dot_dimension_numbers<[1], [1], [0], [0], [0, 0, 1, 0], [], []>} : vector<8x8xf32>, vector<8x8xf32>, vector<8x8xf32> -> vector<8x8xf32>
    %cst_23 = arith.constant 0.353553385 : f32
    %39 = vector.broadcast %cst_23 : f32 to vector<8x8xf32>
    %40 = arith.mulf %38, %39 : vector<8x8xf32>
    %41 = arith.addf %40, %5 : vector<8x8xf32>
    %cst_24 = arith.constant dense<0xFF800000> : vector<8xf32>
    %42 = vector.multi_reduction <maximumf>, %41, %cst_24 [1] : vector<8x8xf32> to vector<8xf32>
    %43 = vector.shape_cast %42 : vector<8xf32> to vector<8x1xf32>
    %44 = vector.broadcast %43 : vector<8x1xf32> to vector<8x8xf32>
    %45 = arith.subf %41, %44 : vector<8x8xf32>
    %46 = math.exp %45 : vector<8x8xf32>
    %cst_25 = arith.constant dense<0.000000e+00> : vector<8xf32>
    %47 = vector.multi_reduction <add>, %46, %cst_25 [1] : vector<8x8xf32> to vector<8xf32>
    %48 = vector.shape_cast %47 : vector<8xf32> to vector<8x1xf32>
    %49 = vector.broadcast %48 : vector<8x1xf32> to vector<8x8xf32>
    %50 = arith.divf %46, %49 : vector<8x8xf32>
    %cst_26 = arith.constant dense<0.000000e+00> : vector<8x8xf32>
    %51 = tpu.matmul %50, %37, %cst_26 {dimension_numbers = #tpu.dot_dimension_numbers<[1], [0], [0], [1], [0, 0, 1, 1], [], []>} : vector<8x8xf32>, vector<8x8xf32>, vector<8x8xf32> -> vector<8x8xf32>
    %c0_27 = arith.constant 0 : index
    %c1 = arith.constant 1 : index
    %c0_28 = arith.constant 0 : index
    %c0_29 = arith.constant 0 : index
    %52 = vector.load %arg5[%c0_27, %c1, %c0_28, %c0_29] : memref<2x4x8x32xf32, #tpu.memory_space<vmem>>, vector<1x1x8x32xf32>
    %53 = vector.shape_cast %52 : vector<1x1x8x32xf32> to vector<8x32xf32>
    %cst_30 = arith.constant dense<0.000000e+00> : vector<8x32xf32>
    %54 = tpu.matmul %51, %53, %cst_30 {dimension_numbers = #tpu.dot_dimension_numbers<[1], [0], [0], [1], [0, 0, 1, 1], [], []>} : vector<8x8xf32>, vector<8x32xf32>, vector<8x32xf32> -> vector<8x32xf32>
    %55 = arith.addf %34, %54 : vector<8x32xf32>
    %56 = vector.extract_strided_slice %12 {offsets = [0, 16], sizes = [8, 8], strides = [1, 1]} : vector<8x96xf32> to vector<8x8xf32>
    %57 = vector.extract_strided_slice %12 {offsets = [0, 48], sizes = [8, 8], strides = [1, 1]} : vector<8x96xf32> to vector<8x8xf32>
    %58 = vector.extract_strided_slice %12 {offsets = [0, 80], sizes = [8, 8], strides = [1, 1]} : vector<8x96xf32> to vector<8x8xf32>
    %cst_31 = arith.constant dense<0.000000e+00> : vector<8x8xf32>
    %59 = tpu.matmul %56, %57, %cst_31 {dimension_numbers = #tpu.dot_dimension_numbers<[1], [1], [0], [0], [0, 0, 1, 0], [], []>} : vector<8x8xf32>, vector<8x8xf32>, vector<8x8xf32> -> vector<8x8xf32>
    %cst_32 = arith.constant 0.353553385 : f32
    %60 = vector.broadcast %cst_32 : f32 to vector<8x8xf32>
    %61 = arith.mulf %59, %60 : vector<8x8xf32>
    %62 = arith.addf %61, %5 : vector<8x8xf32>
    %cst_33 = arith.constant dense<0xFF800000> : vector<8xf32>
    %63 = vector.multi_reduction <maximumf>, %62, %cst_33 [1] : vector<8x8xf32> to vector<8xf32>
    %64 = vector.shape_cast %63 : vector<8xf32> to vector<8x1xf32>
    %65 = vector.broadcast %64 : vector<8x1xf32> to vector<8x8xf32>
    %66 = arith.subf %62, %65 : vector<8x8xf32>
    %67 = math.exp %66 : vector<8x8xf32>
    %cst_34 = arith.constant dense<0.000000e+00> : vector<8xf32>
    %68 = vector.multi_reduction <add>, %67, %cst_34 [1] : vector<8x8xf32> to vector<8xf32>
    %69 = vector.shape_cast %68 : vector<8xf32> to vector<8x1xf32>
    %70 = vector.broadcast %69 : vector<8x1xf32> to vector<8x8xf32>
    %71 = arith.divf %67, %70 : vector<8x8xf32>
    %cst_35 = arith.constant dense<0.000000e+00> : vector<8x8xf32>
    %72 = tpu.matmul %71, %58, %cst_35 {dimension_numbers = #tpu.dot_dimension_numbers<[1], [0], [0], [1], [0, 0, 1, 1], [], []>} : vector<8x8xf32>, vector<8x8xf32>, vector<8x8xf32> -> vector<8x8xf32>
    %c0_36 = arith.constant 0 : index
    %c2 = arith.constant 2 : index
    %c0_37 = arith.constant 0 : index
    %c0_38 = arith.constant 0 : index
    %73 = vector.load %arg5[%c0_36, %c2, %c0_37, %c0_38] : memref<2x4x8x32xf32, #tpu.memory_space<vmem>>, vector<1x1x8x32xf32>
    %74 = vector.shape_cast %73 : vector<1x1x8x32xf32> to vector<8x32xf32>
    %cst_39 = arith.constant dense<0.000000e+00> : vector<8x32xf32>
    %75 = tpu.matmul %72, %74, %cst_39 {dimension_numbers = #tpu.dot_dimension_numbers<[1], [0], [0], [1], [0, 0, 1, 1], [], []>} : vector<8x8xf32>, vector<8x32xf32>, vector<8x32xf32> -> vector<8x32xf32>
    %76 = arith.addf %55, %75 : vector<8x32xf32>
    %77 = vector.extract_strided_slice %12 {offsets = [0, 24], sizes = [8, 8], strides = [1, 1]} : vector<8x96xf32> to vector<8x8xf32>
    %78 = vector.extract_strided_slice %12 {offsets = [0, 56], sizes = [8, 8], strides = [1, 1]} : vector<8x96xf32> to vector<8x8xf32>
    %79 = vector.extract_strided_slice %12 {offsets = [0, 88], sizes = [8, 8], strides = [1, 1]} : vector<8x96xf32> to vector<8x8xf32>
    %cst_40 = arith.constant dense<0.000000e+00> : vector<8x8xf32>
    %80 = tpu.matmul %77, %78, %cst_40 {dimension_numbers = #tpu.dot_dimension_numbers<[1], [1], [0], [0], [0, 0, 1, 0], [], []>} : vector<8x8xf32>, vector<8x8xf32>, vector<8x8xf32> -> vector<8x8xf32>
    %cst_41 = arith.constant 0.353553385 : f32
    %81 = vector.broadcast %cst_41 : f32 to vector<8x8xf32>
    %82 = arith.mulf %80, %81 : vector<8x8xf32>
    %83 = arith.addf %82, %5 : vector<8x8xf32>
    %cst_42 = arith.constant dense<0xFF800000> : vector<8xf32>
    %84 = vector.multi_reduction <maximumf>, %83, %cst_42 [1] : vector<8x8xf32> to vector<8xf32>
    %85 = vector.shape_cast %84 : vector<8xf32> to vector<8x1xf32>
    %86 = vector.broadcast %85 : vector<8x1xf32> to vector<8x8xf32>
    %87 = arith.subf %83, %86 : vector<8x8xf32>
    %88 = math.exp %87 : vector<8x8xf32>
    %cst_43 = arith.constant dense<0.000000e+00> : vector<8xf32>
    %89 = vector.multi_reduction <add>, %88, %cst_43 [1] : vector<8x8xf32> to vector<8xf32>
    %90 = vector.shape_cast %89 : vector<8xf32> to vector<8x1xf32>
    %91 = vector.broadcast %90 : vector<8x1xf32> to vector<8x8xf32>
    %92 = arith.divf %88, %91 : vector<8x8xf32>
    %cst_44 = arith.constant dense<0.000000e+00> : vector<8x8xf32>
    %93 = tpu.matmul %92, %79, %cst_44 {dimension_numbers = #tpu.dot_dimension_numbers<[1], [0], [0], [1], [0, 0, 1, 1], [], []>} : vector<8x8xf32>, vector<8x8xf32>, vector<8x8xf32> -> vector<8x8xf32>
    %c0_45 = arith.constant 0 : index
    %c3 = arith.constant 3 : index
    %c0_46 = arith.constant 0 : index
    %c0_47 = arith.constant 0 : index
    %94 = vector.load %arg5[%c0_45, %c3, %c0_46, %c0_47] : memref<2x4x8x32xf32, #tpu.memory_space<vmem>>, vector<1x1x8x32xf32>
    %95 = vector.shape_cast %94 : vector<1x1x8x32xf32> to vector<8x32xf32>
    %cst_48 = arith.constant dense<0.000000e+00> : vector<8x32xf32>
    %96 = tpu.matmul %93, %95, %cst_48 {dimension_numbers = #tpu.dot_dimension_numbers<[1], [0], [0], [1], [0, 0, 1, 1], [], []>} : vector<8x8xf32>, vector<8x32xf32>, vector<8x32xf32> -> vector<8x32xf32>
    %97 = arith.addf %76, %96 : vector<8x32xf32>
    %c0_49 = arith.constant 0 : index
    %c0_50 = arith.constant 0 : index
    %c0_51 = arith.constant 0 : index
    %98 = vector.load %arg6[%c0_49, %c0_50, %c0_51] : memref<2x1x32xf32, #tpu.memory_space<vmem>>, vector<1x1x32xf32>
    %99 = vector.shape_cast %98 : vector<1x1x32xf32> to vector<1x32xf32>
    %100 = vector.broadcast %99 : vector<1x32xf32> to vector<8x32xf32>
    %101 = arith.addf %97, %100 : vector<8x32xf32>
    %102 = arith.addf %1, %101 : vector<8x32xf32>
    %c0_52 = arith.constant 0 : index
    %c0_53 = arith.constant 0 : index
    %c0_54 = arith.constant 0 : index
    %103 = vector.load %arg7[%c0_52, %c0_53, %c0_54] : memref<2x1x32xf32, #tpu.memory_space<vmem>>, vector<1x1x32xf32>
    %104 = vector.shape_cast %103 : vector<1x1x32xf32> to vector<1x32xf32>
    %c0_55 = arith.constant 0 : index
    %c0_56 = arith.constant 0 : index
    %c0_57 = arith.constant 0 : index
    %105 = vector.load %arg8[%c0_55, %c0_56, %c0_57] : memref<2x1x32xf32, #tpu.memory_space<vmem>>, vector<1x1x32xf32>
    %106 = vector.shape_cast %105 : vector<1x1x32xf32> to vector<1x32xf32>
    %cst_58 = arith.constant dense<0.000000e+00> : vector<8xf32>
    %107 = vector.multi_reduction <add>, %102, %cst_58 [1] : vector<8x32xf32> to vector<8xf32>
    %108 = vector.shape_cast %107 : vector<8xf32> to vector<8x1xf32>
    %cst_59 = arith.constant 3.200000e+01 : f32
    %109 = vector.broadcast %cst_59 : f32 to vector<8x1xf32>
    %110 = arith.divf %108, %109 : vector<8x1xf32>
    %111 = vector.broadcast %110 : vector<8x1xf32> to vector<8x32xf32>
    %112 = arith.subf %102, %111 : vector<8x32xf32>
    %113 = arith.mulf %112, %112 : vector<8x32xf32>
    %cst_60 = arith.constant dense<0.000000e+00> : vector<8xf32>
    %114 = vector.multi_reduction <add>, %113, %cst_60 [1] : vector<8x32xf32> to vector<8xf32>
    %115 = vector.shape_cast %114 : vector<8xf32> to vector<8x1xf32>
    %cst_61 = arith.constant 3.200000e+01 : f32
    %116 = vector.broadcast %cst_61 : f32 to vector<8x1xf32>
    %117 = arith.divf %115, %116 : vector<8x1xf32>
    %118 = vector.broadcast %110 : vector<8x1xf32> to vector<8x32xf32>
    %119 = arith.subf %102, %118 : vector<8x32xf32>
    %cst_62 = arith.constant 9.99999974E-6 : f32
    %120 = vector.broadcast %cst_62 : f32 to vector<8x1xf32>
    %121 = arith.addf %117, %120 : vector<8x1xf32>
    %122 = math.rsqrt %121 : vector<8x1xf32>
    %123 = vector.broadcast %122 : vector<8x1xf32> to vector<8x32xf32>
    %124 = arith.mulf %119, %123 : vector<8x32xf32>
    %125 = vector.broadcast %104 : vector<1x32xf32> to vector<8x32xf32>
    %126 = arith.mulf %124, %125 : vector<8x32xf32>
    %127 = vector.broadcast %106 : vector<1x32xf32> to vector<8x32xf32>
    %128 = arith.addf %126, %127 : vector<8x32xf32>
    %c0_63 = arith.constant 0 : index
    %c0_64 = arith.constant 0 : index
    %c0_65 = arith.constant 0 : index
    %129 = vector.load %arg9[%c0_63, %c0_64, %c0_65] : memref<2x32x512xf32, #tpu.memory_space<vmem>>, vector<1x32x512xf32>
    %130 = vector.shape_cast %129 : vector<1x32x512xf32> to vector<32x512xf32>
    %cst_66 = arith.constant dense<0.000000e+00> : vector<8x512xf32>
    %131 = tpu.matmul %128, %130, %cst_66 {dimension_numbers = #tpu.dot_dimension_numbers<[1], [0], [0], [1], [0, 0, 1, 1], [], []>} : vector<8x32xf32>, vector<32x512xf32>, vector<8x512xf32> -> vector<8x512xf32>
    %c0_67 = arith.constant 0 : index
    %c0_68 = arith.constant 0 : index
    %c0_69 = arith.constant 0 : index
    %132 = vector.load %arg10[%c0_67, %c0_68, %c0_69] : memref<2x1x512xf32, #tpu.memory_space<vmem>>, vector<1x1x512xf32>
    %133 = vector.shape_cast %132 : vector<1x1x512xf32> to vector<1x512xf32>
    %134 = vector.broadcast %133 : vector<1x512xf32> to vector<8x512xf32>
    %135 = arith.addf %131, %134 : vector<8x512xf32>
    %cst_70 = arith.constant 0.000000e+00 : f32
    %136 = vector.broadcast %cst_70 : f32 to vector<8x512xf32>
    %137 = arith.maximumf %135, %136 : vector<8x512xf32>
    %c0_71 = arith.constant 0 : index
    %c0_72 = arith.constant 0 : index
    %c0_73 = arith.constant 0 : index
    %138 = vector.load %arg11[%c0_71, %c0_72, %c0_73] : memref<2x512x32xf32, #tpu.memory_space<vmem>>, vector<1x512x32xf32>
    %139 = vector.shape_cast %138 : vector<1x512x32xf32> to vector<512x32xf32>
    %cst_74 = arith.constant dense<0.000000e+00> : vector<8x32xf32>
    %140 = tpu.matmul %137, %139, %cst_74 {dimension_numbers = #tpu.dot_dimension_numbers<[1], [0], [0], [1], [0, 0, 1, 1], [], []>} : vector<8x512xf32>, vector<512x32xf32>, vector<8x32xf32> -> vector<8x32xf32>
    %c0_75 = arith.constant 0 : index
    %c0_76 = arith.constant 0 : index
    %c0_77 = arith.constant 0 : index
    %141 = vector.load %arg12[%c0_75, %c0_76, %c0_77] : memref<2x1x32xf32, #tpu.memory_space<vmem>>, vector<1x1x32xf32>
    %142 = vector.shape_cast %141 : vector<1x1x32xf32> to vector<1x32xf32>
    %143 = vector.broadcast %142 : vector<1x32xf32> to vector<8x32xf32>
    %144 = arith.addf %140, %143 : vector<8x32xf32>
    %145 = arith.addf %128, %144 : vector<8x32xf32>
    %c0_78 = arith.constant 0 : index
    %c0_79 = arith.constant 0 : index
    %c0_80 = arith.constant 0 : index
    %146 = vector.load %arg13[%c0_78, %c0_79, %c0_80] : memref<2x1x32xf32, #tpu.memory_space<vmem>>, vector<1x1x32xf32>
    %147 = vector.shape_cast %146 : vector<1x1x32xf32> to vector<1x32xf32>
    %c0_81 = arith.constant 0 : index
    %c0_82 = arith.constant 0 : index
    %c0_83 = arith.constant 0 : index
    %148 = vector.load %arg14[%c0_81, %c0_82, %c0_83] : memref<2x1x32xf32, #tpu.memory_space<vmem>>, vector<1x1x32xf32>
    %149 = vector.shape_cast %148 : vector<1x1x32xf32> to vector<1x32xf32>
    %cst_84 = arith.constant dense<0.000000e+00> : vector<8xf32>
    %150 = vector.multi_reduction <add>, %145, %cst_84 [1] : vector<8x32xf32> to vector<8xf32>
    %151 = vector.shape_cast %150 : vector<8xf32> to vector<8x1xf32>
    %cst_85 = arith.constant 3.200000e+01 : f32
    %152 = vector.broadcast %cst_85 : f32 to vector<8x1xf32>
    %153 = arith.divf %151, %152 : vector<8x1xf32>
    %154 = vector.broadcast %153 : vector<8x1xf32> to vector<8x32xf32>
    %155 = arith.subf %145, %154 : vector<8x32xf32>
    %156 = arith.mulf %155, %155 : vector<8x32xf32>
    %cst_86 = arith.constant dense<0.000000e+00> : vector<8xf32>
    %157 = vector.multi_reduction <add>, %156, %cst_86 [1] : vector<8x32xf32> to vector<8xf32>
    %158 = vector.shape_cast %157 : vector<8xf32> to vector<8x1xf32>
    %cst_87 = arith.constant 3.200000e+01 : f32
    %159 = vector.broadcast %cst_87 : f32 to vector<8x1xf32>
    %160 = arith.divf %158, %159 : vector<8x1xf32>
    %161 = vector.broadcast %153 : vector<8x1xf32> to vector<8x32xf32>
    %162 = arith.subf %145, %161 : vector<8x32xf32>
    %cst_88 = arith.constant 9.99999974E-6 : f32
    %163 = vector.broadcast %cst_88 : f32 to vector<8x1xf32>
    %164 = arith.addf %160, %163 : vector<8x1xf32>
    %165 = math.rsqrt %164 : vector<8x1xf32>
    %166 = vector.broadcast %165 : vector<8x1xf32> to vector<8x32xf32>
    %167 = arith.mulf %162, %166 : vector<8x32xf32>
    %168 = vector.broadcast %147 : vector<1x32xf32> to vector<8x32xf32>
    %169 = arith.mulf %167, %168 : vector<8x32xf32>
    %170 = vector.broadcast %149 : vector<1x32xf32> to vector<8x32xf32>
    %171 = arith.addf %169, %170 : vector<8x32xf32>
    %c1_89 = arith.constant 1 : index
    %c0_90 = arith.constant 0 : index
    %c0_91 = arith.constant 0 : index
    %172 = vector.load %arg3[%c1_89, %c0_90, %c0_91] : memref<2x32x96xf32, #tpu.memory_space<vmem>>, vector<1x32x96xf32>
    %173 = vector.shape_cast %172 : vector<1x32x96xf32> to vector<32x96xf32>
    %cst_92 = arith.constant dense<0.000000e+00> : vector<8x96xf32>
    %174 = tpu.matmul %171, %173, %cst_92 {dimension_numbers = #tpu.dot_dimension_numbers<[1], [0], [0], [1], [0, 0, 1, 1], [], []>} : vector<8x32xf32>, vector<32x96xf32>, vector<8x96xf32> -> vector<8x96xf32>
    %c1_93 = arith.constant 1 : index
    %c0_94 = arith.constant 0 : index
    %c0_95 = arith.constant 0 : index
    %175 = vector.load %arg4[%c1_93, %c0_94, %c0_95] : memref<2x1x96xf32, #tpu.memory_space<vmem>>, vector<1x1x96xf32>
    %176 = vector.shape_cast %175 : vector<1x1x96xf32> to vector<1x96xf32>
    %177 = vector.broadcast %176 : vector<1x96xf32> to vector<8x96xf32>
    %178 = arith.addf %174, %177 : vector<8x96xf32>
    %cst_96 = arith.constant 0.000000e+00 : f32
    %179 = vector.broadcast %cst_96 : f32 to vector<8x32xf32>
    %180 = vector.extract_strided_slice %178 {offsets = [0, 0], sizes = [8, 8], strides = [1, 1]} : vector<8x96xf32> to vector<8x8xf32>
    %181 = vector.extract_strided_slice %178 {offsets = [0, 32], sizes = [8, 8], strides = [1, 1]} : vector<8x96xf32> to vector<8x8xf32>
    %182 = vector.extract_strided_slice %178 {offsets = [0, 64], sizes = [8, 8], strides = [1, 1]} : vector<8x96xf32> to vector<8x8xf32>
    %cst_97 = arith.constant dense<0.000000e+00> : vector<8x8xf32>
    %183 = tpu.matmul %180, %181, %cst_97 {dimension_numbers = #tpu.dot_dimension_numbers<[1], [1], [0], [0], [0, 0, 1, 0], [], []>} : vector<8x8xf32>, vector<8x8xf32>, vector<8x8xf32> -> vector<8x8xf32>
    %cst_98 = arith.constant 0.353553385 : f32
    %184 = vector.broadcast %cst_98 : f32 to vector<8x8xf32>
    %185 = arith.mulf %183, %184 : vector<8x8xf32>
    %186 = arith.addf %185, %5 : vector<8x8xf32>
    %cst_99 = arith.constant dense<0xFF800000> : vector<8xf32>
    %187 = vector.multi_reduction <maximumf>, %186, %cst_99 [1] : vector<8x8xf32> to vector<8xf32>
    %188 = vector.shape_cast %187 : vector<8xf32> to vector<8x1xf32>
    %189 = vector.broadcast %188 : vector<8x1xf32> to vector<8x8xf32>
    %190 = arith.subf %186, %189 : vector<8x8xf32>
    %191 = math.exp %190 : vector<8x8xf32>
    %cst_100 = arith.constant dense<0.000000e+00> : vector<8xf32>
    %192 = vector.multi_reduction <add>, %191, %cst_100 [1] : vector<8x8xf32> to vector<8xf32>
    %193 = vector.shape_cast %192 : vector<8xf32> to vector<8x1xf32>
    %194 = vector.broadcast %193 : vector<8x1xf32> to vector<8x8xf32>
    %195 = arith.divf %191, %194 : vector<8x8xf32>
    %cst_101 = arith.constant dense<0.000000e+00> : vector<8x8xf32>
    %196 = tpu.matmul %195, %182, %cst_101 {dimension_numbers = #tpu.dot_dimension_numbers<[1], [0], [0], [1], [0, 0, 1, 1], [], []>} : vector<8x8xf32>, vector<8x8xf32>, vector<8x8xf32> -> vector<8x8xf32>
    %c1_102 = arith.constant 1 : index
    %c0_103 = arith.constant 0 : index
    %c0_104 = arith.constant 0 : index
    %c0_105 = arith.constant 0 : index
    %197 = vector.load %arg5[%c1_102, %c0_103, %c0_104, %c0_105] : memref<2x4x8x32xf32, #tpu.memory_space<vmem>>, vector<1x1x8x32xf32>
    %198 = vector.shape_cast %197 : vector<1x1x8x32xf32> to vector<8x32xf32>
    %cst_106 = arith.constant dense<0.000000e+00> : vector<8x32xf32>
    %199 = tpu.matmul %196, %198, %cst_106 {dimension_numbers = #tpu.dot_dimension_numbers<[1], [0], [0], [1], [0, 0, 1, 1], [], []>} : vector<8x8xf32>, vector<8x32xf32>, vector<8x32xf32> -> vector<8x32xf32>
    %200 = arith.addf %179, %199 : vector<8x32xf32>
    %201 = vector.extract_strided_slice %178 {offsets = [0, 8], sizes = [8, 8], strides = [1, 1]} : vector<8x96xf32> to vector<8x8xf32>
    %202 = vector.extract_strided_slice %178 {offsets = [0, 40], sizes = [8, 8], strides = [1, 1]} : vector<8x96xf32> to vector<8x8xf32>
    %203 = vector.extract_strided_slice %178 {offsets = [0, 72], sizes = [8, 8], strides = [1, 1]} : vector<8x96xf32> to vector<8x8xf32>
    %cst_107 = arith.constant dense<0.000000e+00> : vector<8x8xf32>
    %204 = tpu.matmul %201, %202, %cst_107 {dimension_numbers = #tpu.dot_dimension_numbers<[1], [1], [0], [0], [0, 0, 1, 0], [], []>} : vector<8x8xf32>, vector<8x8xf32>, vector<8x8xf32> -> vector<8x8xf32>
    %cst_108 = arith.constant 0.353553385 : f32
    %205 = vector.broadcast %cst_108 : f32 to vector<8x8xf32>
    %206 = arith.mulf %204, %205 : vector<8x8xf32>
    %207 = arith.addf %206, %5 : vector<8x8xf32>
    %cst_109 = arith.constant dense<0xFF800000> : vector<8xf32>
    %208 = vector.multi_reduction <maximumf>, %207, %cst_109 [1] : vector<8x8xf32> to vector<8xf32>
    %209 = vector.shape_cast %208 : vector<8xf32> to vector<8x1xf32>
    %210 = vector.broadcast %209 : vector<8x1xf32> to vector<8x8xf32>
    %211 = arith.subf %207, %210 : vector<8x8xf32>
    %212 = math.exp %211 : vector<8x8xf32>
    %cst_110 = arith.constant dense<0.000000e+00> : vector<8xf32>
    %213 = vector.multi_reduction <add>, %212, %cst_110 [1] : vector<8x8xf32> to vector<8xf32>
    %214 = vector.shape_cast %213 : vector<8xf32> to vector<8x1xf32>
    %215 = vector.broadcast %214 : vector<8x1xf32> to vector<8x8xf32>
    %216 = arith.divf %212, %215 : vector<8x8xf32>
    %cst_111 = arith.constant dense<0.000000e+00> : vector<8x8xf32>
    %217 = tpu.matmul %216, %203, %cst_111 {dimension_numbers = #tpu.dot_dimension_numbers<[1], [0], [0], [1], [0, 0, 1, 1], [], []>} : vector<8x8xf32>, vector<8x8xf32>, vector<8x8xf32> -> vector<8x8xf32>
    %c1_112 = arith.constant 1 : index
    %c1_113 = arith.constant 1 : index
    %c0_114 = arith.constant 0 : index
    %c0_115 = arith.constant 0 : index
    %218 = vector.load %arg5[%c1_112, %c1_113, %c0_114, %c0_115] : memref<2x4x8x32xf32, #tpu.memory_space<vmem>>, vector<1x1x8x32xf32>
    %219 = vector.shape_cast %218 : vector<1x1x8x32xf32> to vector<8x32xf32>
    %cst_116 = arith.constant dense<0.000000e+00> : vector<8x32xf32>
    %220 = tpu.matmul %217, %219, %cst_116 {dimension_numbers = #tpu.dot_dimension_numbers<[1], [0], [0], [1], [0, 0, 1, 1], [], []>} : vector<8x8xf32>, vector<8x32xf32>, vector<8x32xf32> -> vector<8x32xf32>
    %221 = arith.addf %200, %220 : vector<8x32xf32>
    %222 = vector.extract_strided_slice %178 {offsets = [0, 16], sizes = [8, 8], strides = [1, 1]} : vector<8x96xf32> to vector<8x8xf32>
    %223 = vector.extract_strided_slice %178 {offsets = [0, 48], sizes = [8, 8], strides = [1, 1]} : vector<8x96xf32> to vector<8x8xf32>
    %224 = vector.extract_strided_slice %178 {offsets = [0, 80], sizes = [8, 8], strides = [1, 1]} : vector<8x96xf32> to vector<8x8xf32>
    %cst_117 = arith.constant dense<0.000000e+00> : vector<8x8xf32>
    %225 = tpu.matmul %222, %223, %cst_117 {dimension_numbers = #tpu.dot_dimension_numbers<[1], [1], [0], [0], [0, 0, 1, 0], [], []>} : vector<8x8xf32>, vector<8x8xf32>, vector<8x8xf32> -> vector<8x8xf32>
    %cst_118 = arith.constant 0.353553385 : f32
    %226 = vector.broadcast %cst_118 : f32 to vector<8x8xf32>
    %227 = arith.mulf %225, %226 : vector<8x8xf32>
    %228 = arith.addf %227, %5 : vector<8x8xf32>
    %cst_119 = arith.constant dense<0xFF800000> : vector<8xf32>
    %229 = vector.multi_reduction <maximumf>, %228, %cst_119 [1] : vector<8x8xf32> to vector<8xf32>
    %230 = vector.shape_cast %229 : vector<8xf32> to vector<8x1xf32>
    %231 = vector.broadcast %230 : vector<8x1xf32> to vector<8x8xf32>
    %232 = arith.subf %228, %231 : vector<8x8xf32>
    %233 = math.exp %232 : vector<8x8xf32>
    %cst_120 = arith.constant dense<0.000000e+00> : vector<8xf32>
    %234 = vector.multi_reduction <add>, %233, %cst_120 [1] : vector<8x8xf32> to vector<8xf32>
    %235 = vector.shape_cast %234 : vector<8xf32> to vector<8x1xf32>
    %236 = vector.broadcast %235 : vector<8x1xf32> to vector<8x8xf32>
    %237 = arith.divf %233, %236 : vector<8x8xf32>
    %cst_121 = arith.constant dense<0.000000e+00> : vector<8x8xf32>
    %238 = tpu.matmul %237, %224, %cst_121 {dimension_numbers = #tpu.dot_dimension_numbers<[1], [0], [0], [1], [0, 0, 1, 1], [], []>} : vector<8x8xf32>, vector<8x8xf32>, vector<8x8xf32> -> vector<8x8xf32>
    %c1_122 = arith.constant 1 : index
    %c2_123 = arith.constant 2 : index
    %c0_124 = arith.constant 0 : index
    %c0_125 = arith.constant 0 : index
    %239 = vector.load %arg5[%c1_122, %c2_123, %c0_124, %c0_125] : memref<2x4x8x32xf32, #tpu.memory_space<vmem>>, vector<1x1x8x32xf32>
    %240 = vector.shape_cast %239 : vector<1x1x8x32xf32> to vector<8x32xf32>
    %cst_126 = arith.constant dense<0.000000e+00> : vector<8x32xf32>
    %241 = tpu.matmul %238, %240, %cst_126 {dimension_numbers = #tpu.dot_dimension_numbers<[1], [0], [0], [1], [0, 0, 1, 1], [], []>} : vector<8x8xf32>, vector<8x32xf32>, vector<8x32xf32> -> vector<8x32xf32>
    %242 = arith.addf %221, %241 : vector<8x32xf32>
    %243 = vector.extract_strided_slice %178 {offsets = [0, 24], sizes = [8, 8], strides = [1, 1]} : vector<8x96xf32> to vector<8x8xf32>
    %244 = vector.extract_strided_slice %178 {offsets = [0, 56], sizes = [8, 8], strides = [1, 1]} : vector<8x96xf32> to vector<8x8xf32>
    %245 = vector.extract_strided_slice %178 {offsets = [0, 88], sizes = [8, 8], strides = [1, 1]} : vector<8x96xf32> to vector<8x8xf32>
    %cst_127 = arith.constant dense<0.000000e+00> : vector<8x8xf32>
    %246 = tpu.matmul %243, %244, %cst_127 {dimension_numbers = #tpu.dot_dimension_numbers<[1], [1], [0], [0], [0, 0, 1, 0], [], []>} : vector<8x8xf32>, vector<8x8xf32>, vector<8x8xf32> -> vector<8x8xf32>
    %cst_128 = arith.constant 0.353553385 : f32
    %247 = vector.broadcast %cst_128 : f32 to vector<8x8xf32>
    %248 = arith.mulf %246, %247 : vector<8x8xf32>
    %249 = arith.addf %248, %5 : vector<8x8xf32>
    %cst_129 = arith.constant dense<0xFF800000> : vector<8xf32>
    %250 = vector.multi_reduction <maximumf>, %249, %cst_129 [1] : vector<8x8xf32> to vector<8xf32>
    %251 = vector.shape_cast %250 : vector<8xf32> to vector<8x1xf32>
    %252 = vector.broadcast %251 : vector<8x1xf32> to vector<8x8xf32>
    %253 = arith.subf %249, %252 : vector<8x8xf32>
    %254 = math.exp %253 : vector<8x8xf32>
    %cst_130 = arith.constant dense<0.000000e+00> : vector<8xf32>
    %255 = vector.multi_reduction <add>, %254, %cst_130 [1] : vector<8x8xf32> to vector<8xf32>
    %256 = vector.shape_cast %255 : vector<8xf32> to vector<8x1xf32>
    %257 = vector.broadcast %256 : vector<8x1xf32> to vector<8x8xf32>
    %258 = arith.divf %254, %257 : vector<8x8xf32>
    %cst_131 = arith.constant dense<0.000000e+00> : vector<8x8xf32>
    %259 = tpu.matmul %258, %245, %cst_131 {dimension_numbers = #tpu.dot_dimension_numbers<[1], [0], [0], [1], [0, 0, 1, 1], [], []>} : vector<8x8xf32>, vector<8x8xf32>, vector<8x8xf32> -> vector<8x8xf32>
    %c1_132 = arith.constant 1 : index
    %c3_133 = arith.constant 3 : index
    %c0_134 = arith.constant 0 : index
    %c0_135 = arith.constant 0 : index
    %260 = vector.load %arg5[%c1_132, %c3_133, %c0_134, %c0_135] : memref<2x4x8x32xf32, #tpu.memory_space<vmem>>, vector<1x1x8x32xf32>
    %261 = vector.shape_cast %260 : vector<1x1x8x32xf32> to vector<8x32xf32>
    %cst_136 = arith.constant dense<0.000000e+00> : vector<8x32xf32>
    %262 = tpu.matmul %259, %261, %cst_136 {dimension_numbers = #tpu.dot_dimension_numbers<[1], [0], [0], [1], [0, 0, 1, 1], [], []>} : vector<8x8xf32>, vector<8x32xf32>, vector<8x32xf32> -> vector<8x32xf32>
    %263 = arith.addf %242, %262 : vector<8x32xf32>
    %c1_137 = arith.constant 1 : index
    %c0_138 = arith.constant 0 : index
    %c0_139 = arith.constant 0 : index
    %264 = vector.load %arg6[%c1_137, %c0_138, %c0_139] : memref<2x1x32xf32, #tpu.memory_space<vmem>>, vector<1x1x32xf32>
    %265 = vector.shape_cast %264 : vector<1x1x32xf32> to vector<1x32xf32>
    %266 = vector.broadcast %265 : vector<1x32xf32> to vector<8x32xf32>
    %267 = arith.addf %263, %266 : vector<8x32xf32>
    %268 = arith.addf %171, %267 : vector<8x32xf32>
    %c1_140 = arith.constant 1 : index
    %c0_141 = arith.constant 0 : index
    %c0_142 = arith.constant 0 : index
    %269 = vector.load %arg7[%c1_140, %c0_141, %c0_142] : memref<2x1x32xf32, #tpu.memory_space<vmem>>, vector<1x1x32xf32>
    %270 = vector.shape_cast %269 : vector<1x1x32xf32> to vector<1x32xf32>
    %c1_143 = arith.constant 1 : index
    %c0_144 = arith.constant 0 : index
    %c0_145 = arith.constant 0 : index
    %271 = vector.load %arg8[%c1_143, %c0_144, %c0_145] : memref<2x1x32xf32, #tpu.memory_space<vmem>>, vector<1x1x32xf32>
    %272 = vector.shape_cast %271 : vector<1x1x32xf32> to vector<1x32xf32>
    %cst_146 = arith.constant dense<0.000000e+00> : vector<8xf32>
    %273 = vector.multi_reduction <add>, %268, %cst_146 [1] : vector<8x32xf32> to vector<8xf32>
    %274 = vector.shape_cast %273 : vector<8xf32> to vector<8x1xf32>
    %cst_147 = arith.constant 3.200000e+01 : f32
    %275 = vector.broadcast %cst_147 : f32 to vector<8x1xf32>
    %276 = arith.divf %274, %275 : vector<8x1xf32>
    %277 = vector.broadcast %276 : vector<8x1xf32> to vector<8x32xf32>
    %278 = arith.subf %268, %277 : vector<8x32xf32>
    %279 = arith.mulf %278, %278 : vector<8x32xf32>
    %cst_148 = arith.constant dense<0.000000e+00> : vector<8xf32>
    %280 = vector.multi_reduction <add>, %279, %cst_148 [1] : vector<8x32xf32> to vector<8xf32>
    %281 = vector.shape_cast %280 : vector<8xf32> to vector<8x1xf32>
    %cst_149 = arith.constant 3.200000e+01 : f32
    %282 = vector.broadcast %cst_149 : f32 to vector<8x1xf32>
    %283 = arith.divf %281, %282 : vector<8x1xf32>
    %284 = vector.broadcast %276 : vector<8x1xf32> to vector<8x32xf32>
    %285 = arith.subf %268, %284 : vector<8x32xf32>
    %cst_150 = arith.constant 9.99999974E-6 : f32
    %286 = vector.broadcast %cst_150 : f32 to vector<8x1xf32>
    %287 = arith.addf %283, %286 : vector<8x1xf32>
    %288 = math.rsqrt %287 : vector<8x1xf32>
    %289 = vector.broadcast %288 : vector<8x1xf32> to vector<8x32xf32>
    %290 = arith.mulf %285, %289 : vector<8x32xf32>
    %291 = vector.broadcast %270 : vector<1x32xf32> to vector<8x32xf32>
    %292 = arith.mulf %290, %291 : vector<8x32xf32>
    %293 = vector.broadcast %272 : vector<1x32xf32> to vector<8x32xf32>
    %294 = arith.addf %292, %293 : vector<8x32xf32>
    %c1_151 = arith.constant 1 : index
    %c0_152 = arith.constant 0 : index
    %c0_153 = arith.constant 0 : index
    %295 = vector.load %arg9[%c1_151, %c0_152, %c0_153] : memref<2x32x512xf32, #tpu.memory_space<vmem>>, vector<1x32x512xf32>
    %296 = vector.shape_cast %295 : vector<1x32x512xf32> to vector<32x512xf32>
    %cst_154 = arith.constant dense<0.000000e+00> : vector<8x512xf32>
    %297 = tpu.matmul %294, %296, %cst_154 {dimension_numbers = #tpu.dot_dimension_numbers<[1], [0], [0], [1], [0, 0, 1, 1], [], []>} : vector<8x32xf32>, vector<32x512xf32>, vector<8x512xf32> -> vector<8x512xf32>
    %c1_155 = arith.constant 1 : index
    %c0_156 = arith.constant 0 : index
    %c0_157 = arith.constant 0 : index
    %298 = vector.load %arg10[%c1_155, %c0_156, %c0_157] : memref<2x1x512xf32, #tpu.memory_space<vmem>>, vector<1x1x512xf32>
    %299 = vector.shape_cast %298 : vector<1x1x512xf32> to vector<1x512xf32>
    %300 = vector.broadcast %299 : vector<1x512xf32> to vector<8x512xf32>
    %301 = arith.addf %297, %300 : vector<8x512xf32>
    %cst_158 = arith.constant 0.000000e+00 : f32
    %302 = vector.broadcast %cst_158 : f32 to vector<8x512xf32>
    %303 = arith.maximumf %301, %302 : vector<8x512xf32>
    %c1_159 = arith.constant 1 : index
    %c0_160 = arith.constant 0 : index
    %c0_161 = arith.constant 0 : index
    %304 = vector.load %arg11[%c1_159, %c0_160, %c0_161] : memref<2x512x32xf32, #tpu.memory_space<vmem>>, vector<1x512x32xf32>
    %305 = vector.shape_cast %304 : vector<1x512x32xf32> to vector<512x32xf32>
    %cst_162 = arith.constant dense<0.000000e+00> : vector<8x32xf32>
    %306 = tpu.matmul %303, %305, %cst_162 {dimension_numbers = #tpu.dot_dimension_numbers<[1], [0], [0], [1], [0, 0, 1, 1], [], []>} : vector<8x512xf32>, vector<512x32xf32>, vector<8x32xf32> -> vector<8x32xf32>
    %c1_163 = arith.constant 1 : index
    %c0_164 = arith.constant 0 : index
    %c0_165 = arith.constant 0 : index
    %307 = vector.load %arg12[%c1_163, %c0_164, %c0_165] : memref<2x1x32xf32, #tpu.memory_space<vmem>>, vector<1x1x32xf32>
    %308 = vector.shape_cast %307 : vector<1x1x32xf32> to vector<1x32xf32>
    %309 = vector.broadcast %308 : vector<1x32xf32> to vector<8x32xf32>
    %310 = arith.addf %306, %309 : vector<8x32xf32>
    %311 = arith.addf %294, %310 : vector<8x32xf32>
    %c1_166 = arith.constant 1 : index
    %c0_167 = arith.constant 0 : index
    %c0_168 = arith.constant 0 : index
    %312 = vector.load %arg13[%c1_166, %c0_167, %c0_168] : memref<2x1x32xf32, #tpu.memory_space<vmem>>, vector<1x1x32xf32>
    %313 = vector.shape_cast %312 : vector<1x1x32xf32> to vector<1x32xf32>
    %c1_169 = arith.constant 1 : index
    %c0_170 = arith.constant 0 : index
    %c0_171 = arith.constant 0 : index
    %314 = vector.load %arg14[%c1_169, %c0_170, %c0_171] : memref<2x1x32xf32, #tpu.memory_space<vmem>>, vector<1x1x32xf32>
    %315 = vector.shape_cast %314 : vector<1x1x32xf32> to vector<1x32xf32>
    %cst_172 = arith.constant dense<0.000000e+00> : vector<8xf32>
    %316 = vector.multi_reduction <add>, %311, %cst_172 [1] : vector<8x32xf32> to vector<8xf32>
    %317 = vector.shape_cast %316 : vector<8xf32> to vector<8x1xf32>
    %cst_173 = arith.constant 3.200000e+01 : f32
    %318 = vector.broadcast %cst_173 : f32 to vector<8x1xf32>
    %319 = arith.divf %317, %318 : vector<8x1xf32>
    %320 = vector.broadcast %319 : vector<8x1xf32> to vector<8x32xf32>
    %321 = arith.subf %311, %320 : vector<8x32xf32>
    %322 = arith.mulf %321, %321 : vector<8x32xf32>
    %cst_174 = arith.constant dense<0.000000e+00> : vector<8xf32>
    %323 = vector.multi_reduction <add>, %322, %cst_174 [1] : vector<8x32xf32> to vector<8xf32>
    %324 = vector.shape_cast %323 : vector<8xf32> to vector<8x1xf32>
    %cst_175 = arith.constant 3.200000e+01 : f32
    %325 = vector.broadcast %cst_175 : f32 to vector<8x1xf32>
    %326 = arith.divf %324, %325 : vector<8x1xf32>
    %327 = vector.broadcast %319 : vector<8x1xf32> to vector<8x32xf32>
    %328 = arith.subf %311, %327 : vector<8x32xf32>
    %cst_176 = arith.constant 9.99999974E-6 : f32
    %329 = vector.broadcast %cst_176 : f32 to vector<8x1xf32>
    %330 = arith.addf %326, %329 : vector<8x1xf32>
    %331 = math.rsqrt %330 : vector<8x1xf32>
    %332 = vector.broadcast %331 : vector<8x1xf32> to vector<8x32xf32>
    %333 = arith.mulf %328, %332 : vector<8x32xf32>
    %334 = vector.broadcast %313 : vector<1x32xf32> to vector<8x32xf32>
    %335 = arith.mulf %333, %334 : vector<8x32xf32>
    %336 = vector.broadcast %315 : vector<1x32xf32> to vector<8x32xf32>
    %337 = arith.addf %335, %336 : vector<8x32xf32>
    %c0_177 = arith.constant 0 : index
    %c0_178 = arith.constant 0 : index
    %c0_179 = arith.constant 0 : index
    %338 = vector.load %arg15[%c0_177, %c0_178, %c0_179] : memref<1x8x32xf32, #tpu.memory_space<vmem>>, vector<1x8x32xf32>
    %339 = vector.shape_cast %338 : vector<1x8x32xf32> to vector<8x32xf32>
    %340 = vector.shape_cast %337 : vector<8x32xf32> to vector<1x8x32xf32>
    tpu.vector_store %arg15[%c0_177, %c0_178, %c0_179], %340 {strides = array<i32>} : memref<1x8x32xf32, #tpu.memory_space<vmem>>, vector<1x8x32xf32>,
    return
  }
  func.func @transform_0(%arg0: i32) -> (i32, i32, i32) {
    %c0_i32 = arith.constant 0 : i32
    %c0_i32_0 = arith.constant 0 : i32
    %c0_i32_1 = arith.constant 0 : i32
    return %arg0, %c0_i32, %c0_i32_0 : i32, i32, i32
  }
  func.func @transform_1(%arg0: i32) -> (i32, i32, i32) {
    %c0_i32 = arith.constant 0 : i32
    %c0_i32_0 = arith.constant 0 : i32
    %c0_i32_1 = arith.constant 0 : i32
    return %arg0, %c0_i32, %c0_i32_0 : i32, i32, i32
  }
  func.func @transform_2(%arg0: i32) -> (i32, i32, i32) {
    %c0_i32 = arith.constant 0 : i32
    %c0_i32_0 = arith.constant 0 : i32
    %c0_i32_1 = arith.constant 0 : i32
    %c0_i32_2 = arith.constant 0 : i32
    return %c0_i32, %c0_i32_0, %c0_i32_1 : i32, i32, i32
  }
  func.func @transform_3(%arg0: i32) -> (i32, i32, i32) {
    %c0_i32 = arith.constant 0 : i32
    %c0_i32_0 = arith.constant 0 : i32
    %c0_i32_1 = arith.constant 0 : i32
    %c0_i32_2 = arith.constant 0 : i32
    return %c0_i32, %c0_i32_0, %c0_i32_1 : i32, i32, i32
  }
  func.func @transform_4(%arg0: i32) -> (i32, i32, i32, i32) {
    %c0_i32 = arith.constant 0 : i32
    %c0_i32_0 = arith.constant 0 : i32
    %c0_i32_1 = arith.constant 0 : i32
    %c0_i32_2 = arith.constant 0 : i32
    %c0_i32_3 = arith.constant 0 : i32
    return %c0_i32, %c0_i32_0, %c0_i32_1, %c0_i32_2 : i32, i32, i32, i32
  }
  func.func @transform_5(%arg0: i32) -> (i32, i32, i32) {
    %c0_i32 = arith.constant 0 : i32
    %c0_i32_0 = arith.constant 0 : i32
    %c0_i32_1 = arith.constant 0 : i32
    %c0_i32_2 = arith.constant 0 : i32
    return %c0_i32, %c0_i32_0, %c0_i32_1 : i32, i32, i32
  }
  func.func @transform_6(%arg0: i32) -> (i32, i32, i32) {
    %c0_i32 = arith.constant 0 : i32
    %c0_i32_0 = arith.constant 0 : i32
    %c0_i32_1 = arith.constant 0 : i32
    %c0_i32_2 = arith.constant 0 : i32
    return %c0_i32, %c0_i32_0, %c0_i32_1 : i32, i32, i32
  }
  func.func @transform_7(%arg0: i32) -> (i32, i32, i32) {
    %c0_i32 = arith.constant 0 : i32
    %c0_i32_0 = arith.constant 0 : i32
    %c0_i32_1 = arith.constant 0 : i32
    %c0_i32_2 = arith.constant 0 : i32
    return %c0_i32, %c0_i32_0, %c0_i32_1 : i32, i32, i32
  }
  func.func @transform_8(%arg0: i32) -> (i32, i32, i32) {
    %c0_i32 = arith.constant 0 : i32
    %c0_i32_0 = arith.constant 0 : i32
    %c0_i32_1 = arith.constant 0 : i32
    %c0_i32_2 = arith.constant 0 : i32
    return %c0_i32, %c0_i32_0, %c0_i32_1 : i32, i32, i32
  }
  func.func @transform_9(%arg0: i32) -> (i32, i32, i32) {
    %c0_i32 = arith.constant 0 : i32
    %c0_i32_0 = arith.constant 0 : i32
    %c0_i32_1 = arith.constant 0 : i32
    %c0_i32_2 = arith.constant 0 : i32
    return %c0_i32, %c0_i32_0, %c0_i32_1 : i32, i32, i32
  }
  func.func @transform_10(%arg0: i32) -> (i32, i32, i32) {
    %c0_i32 = arith.constant 0 : i32
    %c0_i32_0 = arith.constant 0 : i32
    %c0_i32_1 = arith.constant 0 : i32
    %c0_i32_2 = arith.constant 0 : i32
    return %c0_i32, %c0_i32_0, %c0_i32_1 : i32, i32, i32
  }
  func.func @transform_11(%arg0: i32) -> (i32, i32, i32) {
    %c0_i32 = arith.constant 0 : i32
    %c0_i32_0 = arith.constant 0 : i32
    %c0_i32_1 = arith.constant 0 : i32
    %c0_i32_2 = arith.constant 0 : i32
    return %c0_i32, %c0_i32_0, %c0_i32_1 : i32, i32, i32
  }
  func.func @transform_12(%arg0: i32) -> (i32, i32, i32) {
    %c0_i32 = arith.constant 0 : i32
    %c0_i32_0 = arith.constant 0 : i32
    %c0_i32_1 = arith.constant 0 : i32
    %c0_i32_2 = arith.constant 0 : i32
    return %c0_i32, %c0_i32_0, %c0_i32_1 : i32, i32, i32
  }
  func.func @transform_13(%arg0: i32) -> (i32, i32, i32) {
    %c0_i32 = arith.constant 0 : i32
    %c0_i32_0 = arith.constant 0 : i32
    %c0_i32_1 = arith.constant 0 : i32
    %c0_i32_2 = arith.constant 0 : i32
    return %c0_i32, %c0_i32_0, %c0_i32_1 : i32, i32, i32
  }
  func.func @transform_14(%arg0: i32) -> (i32, i32, i32) {
    %c0_i32 = arith.constant 0 : i32
    %c0_i32_0 = arith.constant 0 : i32
    %c0_i32_1 = arith.constant 0 : i32
    return %arg0, %c0_i32, %c0_i32_0 : i32, i32, i32
  }
}

</mosaic_0001>

<llo_original>
// kernel: self_attn_enc.1
$region0: #{self_attn_enc.1}
  #allocation0 [shape = 'u32[]', space=smem, size = 0x4, offset = 0x4, fixed_abs, tag = 'smem constant byte address 0x4 - core index']
  #allocation1 [shape = 'u32[144,128]{1,0:T(1,128)}', space=vmem, size = 0x12000, scoped, tag = 'internal scratch']
  %s0 = inlined_call_operand.vmem [shape: f32[2,8,32], index: 0, kind: input, shape index: {}]
  %s1 = inlined_call_operand.vmem [shape: f32[2,1,8], index: 1, kind: input, shape index: {}]
  %s2 = inlined_call_operand.vmem [shape: f32[2,32,96], index: 2, kind: input, shape index: {}]
  %s3 = inlined_call_operand.vmem [shape: f32[2,1,96], index: 3, kind: input, shape index: {}]
  %s4 = inlined_call_operand.vmem [shape: f32[2,4,8,32], index: 4, kind: input, shape index: {}]
  %s5 = inlined_call_operand.vmem [shape: f32[2,1,32], index: 5, kind: input, shape index: {}]
  %s6 = inlined_call_operand.vmem [shape: f32[2,1,32], index: 6, kind: input, shape index: {}]
  %s7 = inlined_call_operand.vmem [shape: f32[2,1,32], index: 7, kind: input, shape index: {}]
  %s8 = inlined_call_operand.vmem [shape: f32[2,32,512], index: 8, kind: input, shape index: {}]
  %s9 = inlined_call_operand.vmem [shape: f32[2,1,512], index: 9, kind: input, shape index: {}]
  %s10 = inlined_call_operand.vmem [shape: f32[2,512,32], index: 10, kind: input, shape index: {}]
  %s11 = inlined_call_operand.vmem [shape: f32[2,1,32], index: 11, kind: input, shape index: {}]
  %s12 = inlined_call_operand.vmem [shape: f32[2,1,32], index: 12, kind: input, shape index: {}]
  %s13 = inlined_call_operand.vmem [shape: f32[2,1,32], index: 13, kind: input, shape index: {}]
  %s14 = inlined_call_operand.hbm [shape: f32[2,8,32], index: 14, kind: output, shape index: {}]
  %s15 = sld [smem:[#allocation0]]
  $region89: #{self_attn_enc.1} parent=0
    _
  %s17 = ssub.s32 1, %s15
  %s18 = scalar_select 0, %s17, %s15
  $region1: #{self_attn_enc.1} parent=0
    #allocation2 [shape = 'u8[8192]{0}', space=vmem, size = 0x2000, scoped, tag = 'output window, operand 0']
    #allocation3 [shape = 's32[2]{0}', space=sflag, size = 0x8, scoped, tag = 'scoped memory for self_attn_enc.1']
    %19 = vsyncpa [#allocation3], 0
    %s20 = scalar_lea.sflag [#allocation3], 1
    %21 = vsyncpa %s20, 0
    loop: start=0, step=1, limit=4
    $region2: #{self_attn_enc.1} parent=1 // loop_pre_header
      _
    $region3: #{self_attn_enc.1} parent=1 // loop_header
      %s23 = sphi 0, %s27
      %p24 = scmp.ge.s32.totalorder %s23, 4
      %s33 = sphi 0, %s35
      %s36 = sphi 0, %s33
      %s37 = sphi 0, %s36
      %s53 = sphi 0, %s37
      %s59 = sphi 0, %s61
      %s62 = sphi 0, %s59
      %s63 = sphi 0, %s62
      %s79 = sphi 0, %s63
      %s83 = sphi 0, %s83
      %s85 = sphi 0, %s83
      %s86 = sphi 0, %s85
      %s100 = sphi 0, %s86
      %s104 = sphi 0, %s104
      %s106 = sphi 0, %s104
      %s107 = sphi 0, %s106
      %s121 = sphi 0, %s107
      %s125 = sphi 0, %s125
      %s127 = sphi 0, %s125
      %s128 = sphi 0, %s127
      %s142 = sphi 0, %s128
      %s146 = sphi 0, %s146
      %s148 = sphi 0, %s146
      %s149 = sphi 0, %s148
      %s163 = sphi 0, %s149
      %s167 = sphi 0, %s167
      %s169 = sphi 0, %s167
      %s170 = sphi 0, %s169
      %s184 = sphi 0, %s170
      %s188 = sphi 0, %s188
      %s190 = sphi 0, %s188
      %s191 = sphi 0, %s190
      %s205 = sphi 0, %s191
      %s209 = sphi 0, %s209
      %s211 = sphi 0, %s209
      %s212 = sphi 0, %s211
      %s226 = sphi 0, %s212
      %s230 = sphi 0, %s230
      %s232 = sphi 0, %s230
      %s233 = sphi 0, %s232
      %s247 = sphi 0, %s233
      %s251 = sphi 0, %s251
      %s253 = sphi 0, %s251
      %s254 = sphi 0, %s253
      %s268 = sphi 0, %s254
      %s272 = sphi 0, %s272
      %s274 = sphi 0, %s272
      %s275 = sphi 0, %s274
      %s289 = sphi 0, %s275
      %s293 = sphi 0, %s293
      %s295 = sphi 0, %s293
      %s296 = sphi 0, %s295
      %s310 = sphi 0, %s296
      %s314 = sphi 0, %s314
      %s316 = sphi 0, %s314
      %s317 = sphi 0, %s316
      %s331 = sphi 0, %s317
      %s337 = sphi 0, %s339
      %s340 = sphi 0, %s337
      %s341 = sphi 0, %s340
      %s357 = sphi 0, %s341
    $region4: #{self_attn_enc.1} parent=1 // loop_header_branch
      %26 = sbr.rel (%p24) target = $region8
    $region5: #{self_attn_enc.1} parent=1 // loop_body
      %s28 = ssub.s32 %s23, 1
      %s29 = ssub.s32 %s23, 2
      %s30 = sadd.s32 %s23, 1
      %s31 = ssub.s32 %s23, %s30
      %p32 = scmp.eq.s32.totalorder %s31, 0
      %s34 = sadd.s32 %s33, 1
      %s35 = scalar_select %p32, %s33, %s34
      %p38 = pneg %p32
      %p39 = scmp.eq.s32.totalorder %s23, 1
      %p40 = por %p38, %p39
      %p41 = scmp.ne.s32.totalorder %s33, %s36
      %p42 = scmp.eq.s32.totalorder %s23, 0
      %p43 = por %p41, %p42
      %p44 = scmp.ne.s32.totalorder %s33, %s36
      %p45 = scmp.eq.s32.totalorder %s28, 1
      %p46 = por %p44, %p45
      %p47 = scmp.ne.s32.totalorder %s36, %s37
      %p48 = scmp.eq.s32.totalorder %s28, 0
      %p49 = por %p47, %p48
      %p50 = scmp.ne.s32.totalorder %s36, %s37
      %p51 = scmp.eq.s32.totalorder %s29, 1
      %p52 = por %p50, %p51
      %p54 = scmp.ne.s32.totalorder %s37, %s53
      %p55 = scmp.eq.s32.totalorder %s29, 0
      %p56 = por %p54, %p55
      %s57 = ssub.s32 %s23, %s30
      %p58 = scmp.eq.s32.totalorder %s57, 0
      %s60 = sadd.s32 %s59, 1
      %s61 = scalar_select %p58, %s59, %s60
      %p64 = pneg %p58
      %p65 = scmp.eq.s32.totalorder %s23, 1
      %p66 = por %p64, %p65
      %p67 = scmp.ne.s32.totalorder %s59, %s62
      %p68 = scmp.eq.s32.totalorder %s23, 0
      %p69 = por %p67, %p68
      %p70 = scmp.ne.s32.totalorder %s59, %s62
      %p71 = scmp.eq.s32.totalorder %s28, 1
      %p72 = por %p70, %p71
      %p73 = scmp.ne.s32.totalorder %s62, %s63
      %p74 = scmp.eq.s32.totalorder %s28, 0
      %p75 = por %p73, %p74
      %p76 = scmp.ne.s32.totalorder %s62, %s63
      %p77 = scmp.eq.s32.totalorder %s29, 1
      %p78 = por %p76, %p77
      %p80 = scmp.ne.s32.totalorder %s63, %s79
      %p81 = scmp.eq.s32.totalorder %s29, 0
      %p82 = por %p80, %p81
      %s84 = sadd.s32 %s83, 1
      %p87 = scmp.eq.s32.totalorder %s23, 1
      %p88 = scmp.ne.s32.totalorder %s83, %s85
      %p89 = scmp.eq.s32.totalorder %s23, 0
      %p90 = por %p88, %p89
      %p91 = scmp.ne.s32.totalorder %s83, %s85
      %p92 = scmp.eq.s32.totalorder %s28, 1
      %p93 = por %p91, %p92
      %p94 = scmp.ne.s32.totalorder %s85, %s86
      %p95 = scmp.eq.s32.totalorder %s28, 0
      %p96 = por %p94, %p95
      %p97 = scmp.ne.s32.totalorder %s85, %s86
      %p98 = scmp.eq.s32.totalorder %s29, 1
      %p99 = por %p97, %p98
      %p101 = scmp.ne.s32.totalorder %s86, %s100
      %p102 = scmp.eq.s32.totalorder %s29, 0
      %p103 = por %p101, %p102
      %s105 = sadd.s32 %s104, 1
      %p108 = scmp.eq.s32.totalorder %s23, 1
      %p109 = scmp.ne.s32.totalorder %s104, %s106
      %p110 = scmp.eq.s32.totalorder %s23, 0
      %p111 = por %p109, %p110
      %p112 = scmp.ne.s32.totalorder %s104, %s106
      %p113 = scmp.eq.s32.totalorder %s28, 1
      %p114 = por %p112, %p113
      %p115 = scmp.ne.s32.totalorder %s106, %s107
      %p116 = scmp.eq.s32.totalorder %s28, 0
      %p117 = por %p115, %p116
      %p118 = scmp.ne.s32.totalorder %s106, %s107
      %p119 = scmp.eq.s32.totalorder %s29, 1
      %p120 = por %p118, %p119
      %p122 = scmp.ne.s32.totalorder %s107, %s121
      %p123 = scmp.eq.s32.totalorder %s29, 0
      %p124 = por %p122, %p123
      %s126 = sadd.s32 %s125, 1
      %p129 = scmp.eq.s32.totalorder %s23, 1
      %p130 = scmp.ne.s32.totalorder %s125, %s127
      %p131 = scmp.eq.s32.totalorder %s23, 0
      %p132 = por %p130, %p131
      %p133 = scmp.ne.s32.totalorder %s125, %s127
      %p134 = scmp.eq.s32.totalorder %s28, 1
      %p135 = por %p133, %p134
      %p136 = scmp.ne.s32.totalorder %s127, %s128
      %p137 = scmp.eq.s32.totalorder %s28, 0
      %p138 = por %p136, %p137
      %p139 = scmp.ne.s32.totalorder %s127, %s128
      %p140 = scmp.eq.s32.totalorder %s29, 1
      %p141 = por %p139, %p140
      %p143 = scmp.ne.s32.totalorder %s128, %s142
      %p144 = scmp.eq.s32.totalorder %s29, 0
      %p145 = por %p143, %p144
      %s147 = sadd.s32 %s146, 1
      %p150 = scmp.eq.s32.totalorder %s23, 1
      %p151 = scmp.ne.s32.totalorder %s146, %s148
      %p152 = scmp.eq.s32.totalorder %s23, 0
      %p153 = por %p151, %p152
      %p154 = scmp.ne.s32.totalorder %s146, %s148
      %p155 = scmp.eq.s32.totalorder %s28, 1
      %p156 = por %p154, %p155
      %p157 = scmp.ne.s32.totalorder %s148, %s149
      %p158 = scmp.eq.s32.totalorder %s28, 0
      %p159 = por %p157, %p158
      %p160 = scmp.ne.s32.totalorder %s148, %s149
      %p161 = scmp.eq.s32.totalorder %s29, 1
      %p162 = por %p160, %p161
      %p164 = scmp.ne.s32.totalorder %s149, %s163
      %p165 = scmp.eq.s32.totalorder %s29, 0
      %p166 = por %p164, %p165
      %s168 = sadd.s32 %s167, 1
      %p171 = scmp.eq.s32.totalorder %s23, 1
      %p172 = scmp.ne.s32.totalorder %s167, %s169
      %p173 = scmp.eq.s32.totalorder %s23, 0
      %p174 = por %p172, %p173
      %p175 = scmp.ne.s32.totalorder %s167, %s169
      %p176 = scmp.eq.s32.totalorder %s28, 1
      %p177 = por %p175, %p176
      %p178 = scmp.ne.s32.totalorder %s169, %s170
      %p179 = scmp.eq.s32.totalorder %s28, 0
      %p180 = por %p178, %p179
      %p181 = scmp.ne.s32.totalorder %s169, %s170
      %p182 = scmp.eq.s32.totalorder %s29, 1
      %p183 = por %p181, %p182
      %p185 = scmp.ne.s32.totalorder %s170, %s184
      %p186 = scmp.eq.s32.totalorder %s29, 0
      %p187 = por %p185, %p186
      %s189 = sadd.s32 %s188, 1
      %p192 = scmp.eq.s32.totalorder %s23, 1
      %p193 = scmp.ne.s32.totalorder %s188, %s190
      %p194 = scmp.eq.s32.totalorder %s23, 0
      %p195 = por %p193, %p194
      %p196 = scmp.ne.s32.totalorder %s188, %s190
      %p197 = scmp.eq.s32.totalorder %s28, 1
      %p198 = por %p196, %p197
      %p199 = scmp.ne.s32.totalorder %s190, %s191
      %p200 = scmp.eq.s32.totalorder %s28, 0
      %p201 = por %p199, %p200
      %p202 = scmp.ne.s32.totalorder %s190, %s191
      %p203 = scmp.eq.s32.totalorder %s29, 1
      %p204 = por %p202, %p203
      %p206 = scmp.ne.s32.totalorder %s191, %s205
      %p207 = scmp.eq.s32.totalorder %s29, 0
      %p208 = por %p206, %p207
      %s210 = sadd.s32 %s209, 1
      %p213 = scmp.eq.s32.totalorder %s23, 1
      %p214 = scmp.ne.s32.totalorder %s209, %s211
      %p215 = scmp.eq.s32.totalorder %s23, 0
      %p216 = por %p214, %p215
      %p217 = scmp.ne.s32.totalorder %s209, %s211
      %p218 = scmp.eq.s32.totalorder %s28, 1
      %p219 = por %p217, %p218
      %p220 = scmp.ne.s32.totalorder %s211, %s212
      %p221 = scmp.eq.s32.totalorder %s28, 0
      %p222 = por %p220, %p221
      %p223 = scmp.ne.s32.totalorder %s211, %s212
      %p224 = scmp.eq.s32.totalorder %s29, 1
      %p225 = por %p223, %p224
      %p227 = scmp.ne.s32.totalorder %s212, %s226
      %p228 = scmp.eq.s32.totalorder %s29, 0
      %p229 = por %p227, %p228
      %s231 = sadd.s32 %s230, 1
      %p234 = scmp.eq.s32.totalorder %s23, 1
      %p235 = scmp.ne.s32.totalorder %s230, %s232
      %p236 = scmp.eq.s32.totalorder %s23, 0
      %p237 = por %p235, %p236
      %p238 = scmp.ne.s32.totalorder %s230, %s232
      %p239 = scmp.eq.s32.totalorder %s28, 1
      %p240 = por %p238, %p239
      %p241 = scmp.ne.s32.totalorder %s232, %s233
      %p242 = scmp.eq.s32.totalorder %s28, 0
      %p243 = por %p241, %p242
      %p244 = scmp.ne.s32.totalorder %s232, %s233
      %p245 = scmp.eq.s32.totalorder %s29, 1
      %p246 = por %p244, %p245
      %p248 = scmp.ne.s32.totalorder %s233, %s247
      %p249 = scmp.eq.s32.totalorder %s29, 0
      %p250 = por %p248, %p249
      %s252 = sadd.s32 %s251, 1
      %p255 = scmp.eq.s32.totalorder %s23, 1
      %p256 = scmp.ne.s32.totalorder %s251, %s253
      %p257 = scmp.eq.s32.totalorder %s23, 0
      %p258 = por %p256, %p257
      %p259 = scmp.ne.s32.totalorder %s251, %s253
      %p260 = scmp.eq.s32.totalorder %s28, 1
      %p261 = por %p259, %p260
      %p262 = scmp.ne.s32.totalorder %s253, %s254
      %p263 = scmp.eq.s32.totalorder %s28, 0
      %p264 = por %p262, %p263
      %p265 = scmp.ne.s32.totalorder %s253, %s254
      %p266 = scmp.eq.s32.totalorder %s29, 1
      %p267 = por %p265, %p266
      %p269 = scmp.ne.s32.totalorder %s254, %s268
      %p270 = scmp.eq.s32.totalorder %s29, 0
      %p271 = por %p269, %p270
      %s273 = sadd.s32 %s272, 1
      %p276 = scmp.eq.s32.totalorder %s23, 1
      %p277 = scmp.ne.s32.totalorder %s272, %s274
      %p278 = scmp.eq.s32.totalorder %s23, 0
      %p279 = por %p277, %p278
      %p280 = scmp.ne.s32.totalorder %s272, %s274
      %p281 = scmp.eq.s32.totalorder %s28, 1
      %p282 = por %p280, %p281
      %p283 = scmp.ne.s32.totalorder %s274, %s275
      %p284 = scmp.eq.s32.totalorder %s28, 0
      %p285 = por %p283, %p284
      %p286 = scmp.ne.s32.totalorder %s274, %s275
      %p287 = scmp.eq.s32.totalorder %s29, 1
      %p288 = por %p286, %p287
      %p290 = scmp.ne.s32.totalorder %s275, %s289
      %p291 = scmp.eq.s32.totalorder %s29, 0
      %p292 = por %p290, %p291
      %s294 = sadd.s32 %s293, 1
      %p297 = scmp.eq.s32.totalorder %s23, 1
      %p298 = scmp.ne.s32.totalorder %s293, %s295
      %p299 = scmp.eq.s32.totalorder %s23, 0
      %p300 = por %p298, %p299
      %p301 = scmp.ne.s32.totalorder %s293, %s295
      %p302 = scmp.eq.s32.totalorder %s28, 1
      %p303 = por %p301, %p302
      %p304 = scmp.ne.s32.totalorder %s295, %s296
      %p305 = scmp.eq.s32.totalorder %s28, 0
      %p306 = por %p304, %p305
      %p307 = scmp.ne.s32.totalorder %s295, %s296
      %p308 = scmp.eq.s32.totalorder %s29, 1
      %p309 = por %p307, %p308
      %p311 = scmp.ne.s32.totalorder %s296, %s310
      %p312 = scmp.eq.s32.totalorder %s29, 0
      %p313 = por %p311, %p312
      %s315 = sadd.s32 %s314, 1
      %p318 = scmp.eq.s32.totalorder %s23, 1
      %p319 = scmp.ne.s32.totalorder %s314, %s316
      %p320 = scmp.eq.s32.totalorder %s23, 0
      %p321 = por %p319, %p320
      %p322 = scmp.ne.s32.totalorder %s314, %s316
      %p323 = scmp.eq.s32.totalorder %s28, 1
      %p324 = por %p322, %p323
      %p325 = scmp.ne.s32.totalorder %s316, %s317
      %p326 = scmp.eq.s32.totalorder %s28, 0
      %p327 = por %p325, %p326
      %p328 = scmp.ne.s32.totalorder %s316, %s317
      %p329 = scmp.eq.s32.totalorder %s29, 1
      %p330 = por %p328, %p329
      %p332 = scmp.ne.s32.totalorder %s317, %s331
      %p333 = scmp.eq.s32.totalorder %s29, 0
      %p334 = por %p332, %p333
      %s335 = ssub.s32 %s23, %s30
      %p336 = scmp.eq.s32.totalorder %s335, 0
      %s338 = sadd.s32 %s337, 1
      %s339 = scalar_select %p336, %s337, %s338
      %p342 = pneg %p336
      %p343 = scmp.eq.s32.totalorder %s23, 1
      %p344 = por %p342, %p343
      %p345 = scmp.ne.s32.totalorder %s337, %s340
      %p346 = scmp.eq.s32.totalorder %s23, 0
      %p347 = por %p345, %p346
      %p348 = scmp.ne.s32.totalorder %s337, %s340
      %p349 = scmp.eq.s32.totalorder %s28, 1
      %p350 = por %p348, %p349
      %p351 = scmp.ne.s32.totalorder %s340, %s341
      %p352 = scmp.eq.s32.totalorder %s28, 0
      %p353 = por %p351, %p352
      %p354 = scmp.ne.s32.totalorder %s340, %s341
      %p355 = scmp.eq.s32.totalorder %s29, 1
      %p356 = por %p354, %p355
      %p358 = scmp.ne.s32.totalorder %s341, %s357
      %p359 = scmp.eq.s32.totalorder %s29, 0
      %p360 = por %p358, %p359
      %p361 = scmp.le.s32.totalorder 1, %s23
      %p362 = scmp.lt.s32.totalorder %s23, 3
      %p363 = pnand %p361, %p362
      %p364 = pneg %p363
      // Predicated region
      $region9: #{self_attn_enc.1} parent=5 // pred_check
        _
      $region10: #{self_attn_enc.1} parent=5 // pred_check_branch
        %366 = sbr.rel (%p363) target = $region12
      $region11: #{self_attn_enc.1} parent=5 // pred_region
        %s367 = ssub.s32 %s23, 1
        // Predicated region
        $region13: #{self_attn_enc.1} parent=11 // pred_check
          %p368 = pneg %p96
        $region14: #{self_attn_enc.1} parent=11 // pred_check_branch
          %370 = sbr.rel (%p368) target = $region16
        $region15: #{self_attn_enc.1} parent=11 // pred_region
          _
        $region16: #{self_attn_enc.1} parent=11 // pred_fallthru
          _
        // Predicated region
        $region17: #{self_attn_enc.1} parent=11 // pred_check
          %p371 = pneg %p117
        $region18: #{self_attn_enc.1} parent=11 // pred_check_branch
          %373 = sbr.rel (%p371) target = $region20
        $region19: #{self_attn_enc.1} parent=11 // pred_region
          _
        $region20: #{self_attn_enc.1} parent=11 // pred_fallthru
          _
        // Predicated region
        $region21: #{self_attn_enc.1} parent=11 // pred_check
          %p374 = pneg %p138
        $region22: #{self_attn_enc.1} parent=11 // pred_check_branch
          %376 = sbr.rel (%p374) target = $region24
        $region23: #{self_attn_enc.1} parent=11 // pred_region
          _
        $region24: #{self_attn_enc.1} parent=11 // pred_fallthru
          _
        // Predicated region
        $region25: #{self_attn_enc.1} parent=11 // pred_check
          %p377 = pneg %p159
        $region26: #{self_attn_enc.1} parent=11 // pred_check_branch
          %379 = sbr.rel (%p377) target = $region28
        $region27: #{self_attn_enc.1} parent=11 // pred_region
          _
        $region28: #{self_attn_enc.1} parent=11 // pred_fallthru
          _
        // Predicated region
        $region29: #{self_attn_enc.1} parent=11 // pred_check
          %p380 = pneg %p180
        $region30: #{self_attn_enc.1} parent=11 // pred_check_branch
          %382 = sbr.rel (%p380) target = $region32
        $region31: #{self_attn_enc.1} parent=11 // pred_region
          _
        $region32: #{self_attn_enc.1} parent=11 // pred_fallthru
          _
        // Predicated region
        $region33: #{self_attn_enc.1} parent=11 // pred_check
          %p383 = pneg %p201
        $region34: #{self_attn_enc.1} parent=11 // pred_check_branch
          %385 = sbr.rel (%p383) target = $region36
        $region35: #{self_attn_enc.1} parent=11 // pred_region
          _
        $region36: #{self_attn_enc.1} parent=11 // pred_fallthru
          _
        // Predicated region
        $region37: #{self_attn_enc.1} parent=11 // pred_check
          %p386 = pneg %p222
        $region38: #{self_attn_enc.1} parent=11 // pred_check_branch
          %388 = sbr.rel (%p386) target = $region40
        $region39: #{self_attn_enc.1} parent=11 // pred_region
          _
        $region40: #{self_attn_enc.1} parent=11 // pred_fallthru
          _
        // Predicated region
        $region41: #{self_attn_enc.1} parent=11 // pred_check
          %p389 = pneg %p243
        $region42: #{self_attn_enc.1} parent=11 // pred_check_branch
          %391 = sbr.rel (%p389) target = $region44
        $region43: #{self_attn_enc.1} parent=11 // pred_region
          _
        $region44: #{self_attn_enc.1} parent=11 // pred_fallthru
          _
        // Predicated region
        $region45: #{self_attn_enc.1} parent=11 // pred_check
          %p392 = pneg %p264
        $region46: #{self_attn_enc.1} parent=11 // pred_check_branch
          %394 = sbr.rel (%p392) target = $region48
        $region47: #{self_attn_enc.1} parent=11 // pred_region
          _
        $region48: #{self_attn_enc.1} parent=11 // pred_fallthru
          _
        // Predicated region
        $region49: #{self_attn_enc.1} parent=11 // pred_check
          %p395 = pneg %p285
        $region50: #{self_attn_enc.1} parent=11 // pred_check_branch
          %397 = sbr.rel (%p395) target = $region52
        $region51: #{self_attn_enc.1} parent=11 // pred_region
          _
        $region52: #{self_attn_enc.1} parent=11 // pred_fallthru
          _
        // Predicated region
        $region53: #{self_attn_enc.1} parent=11 // pred_check
          %p398 = pneg %p306
        $region54: #{self_attn_enc.1} parent=11 // pred_check_branch
          %400 = sbr.rel (%p398) target = $region56
        $region55: #{self_attn_enc.1} parent=11 // pred_region
          _
        $region56: #{self_attn_enc.1} parent=11 // pred_fallthru
          _
        // Predicated region
        $region57: #{self_attn_enc.1} parent=11 // pred_check
          %p401 = pneg %p327
        $region58: #{self_attn_enc.1} parent=11 // pred_check_branch
          %403 = sbr.rel (%p401) target = $region60
        $region59: #{self_attn_enc.1} parent=11 // pred_region
          _
        $region60: #{self_attn_enc.1} parent=11 // pred_fallthru
          _
      $region12: #{self_attn_enc.1} parent=5 // pred_fallthru
        _
      %p404 = scmp.lt.s32.totalorder %s23, 2
      // Predicated region
      $region61: #{self_attn_enc.1} parent=5 // pred_check
        %p405 = pneg %p404
      $region62: #{self_attn_enc.1} parent=5 // pred_check_branch
        %407 = sbr.rel (%p405) target = $region64
      $region63: #{self_attn_enc.1} parent=5 // pred_region
        // Predicated region
        $region65: #{self_attn_enc.1} parent=63 // pred_check
          %p408 = pneg %p43
        $region66: #{self_attn_enc.1} parent=63 // pred_check_branch
          %410 = sbr.rel (%p408) target = $region68
        $region67: #{self_attn_enc.1} parent=63 // pred_region
          %p411 = scmp.lt.s32.totalorder %s23, 1
          %s412 = scalar_select %p411, %s23, 1
          %s413 = smul.addr %s412, 8
          %s414 = scalar_lea.vmem %s0, %s413
        $region68: #{self_attn_enc.1} parent=63 // pred_fallthru
          _
        // Predicated region
        $region69: #{self_attn_enc.1} parent=63 // pred_check
          %p415 = pneg %p69
        $region70: #{self_attn_enc.1} parent=63 // pred_check_branch
          %417 = sbr.rel (%p415) target = $region72
        $region71: #{self_attn_enc.1} parent=63 // pred_region
          %p418 = scmp.lt.s32.totalorder %s23, 1
          %s419 = scalar_select %p418, %s23, 1
          %s420 = scalar_lea.vmem %s1, %s419
        $region72: #{self_attn_enc.1} parent=63 // pred_fallthru
          _
      $region64: #{self_attn_enc.1} parent=5 // pred_fallthru
        _
      %p421 = scmp.le.s32.totalorder 1, %s23
      %p422 = scmp.lt.s32.totalorder %s23, 3
      %p423 = pnand %p421, %p422
      %p424 = pneg %p423
      // Predicated region
      $region73: #{self_attn_enc.1} parent=5 // pred_check
        _
      $region74: #{self_attn_enc.1} parent=5 // pred_check_branch
        %426 = sbr.rel (%p423) target = $region76
      $region75: #{self_attn_enc.1} parent=5 // pred_region
        %s427 = ssub.s32 %s23, 1
        %p428 = scmp.lt.s32.totalorder %s28, 1
        %s429 = scalar_select %p428, %s28, 1
        %s430 = smul.addr %s429, 8
        %s431 = scalar_lea.vmem %s0, %s430
        %p432 = pneg %p49
        %p433 = pneg %p46
        %p434 = scmp.lt.s32.totalorder %s28, 1
        %s435 = scalar_select %p434, %s28, 1
        %s436 = scalar_lea.vmem %s1, %s435
        %p437 = pneg %p75
        %p438 = pneg %p72
        %p439 = pneg %p96
        %p440 = pneg %p93
        %p441 = pneg %p117
        %p442 = pneg %p114
        %p443 = pneg %p138
        %p444 = pneg %p135
        %p445 = pneg %p159
        %p446 = pneg %p156
        %p447 = pneg %p180
        %p448 = pneg %p177
        %p449 = pneg %p201
        %p450 = pneg %p198
        %p451 = pneg %p222
        %p452 = pneg %p219
        %p453 = pneg %p243
        %p454 = pneg %p240
        %p455 = pneg %p264
        %p456 = pneg %p261
        %p457 = pneg %p285
        %p458 = pneg %p282
        %p459 = pneg %p306
        %p460 = pneg %p303
        %p461 = pneg %p327
        %p462 = pneg %p324
        %p463 = pneg %p353
        %p464 = pneg %p350
        %s465 = sand.u32 %s340, 1
        %s466 = scalar_lea.sflag [#allocation3], %s465
        %s467 = sand.u32 %s340, 1
        %s468 = smul.addr %s467, 8
        %s469 = scalar_lea.vmem [#allocation2], %s468
        %p470 = scmp.lt.s32.totalorder %s28, 1
        %s471 = scalar_select %p470, %s28, 1
        %s472 = smul.addr %s471, 8
        %s473 = scalar_lea.vmem %s0, %s472
        %p474 = scmp.lt.s32.totalorder %s28, 1
        %s475 = scalar_select %p474, %s28, 1
        %s476 = scalar_lea.vmem %s1, %s475
        %v477 = vld [vmem:[%s473] sm:$0xff]
        %v478 = vld [vmem:[%s476] sm:$0x1]
        %v480 = vlaneseq
        %v481 = vshrl.u32 %v480, 7
        %v482 = vsub.s32 0, %v481
        %v483 = vrot.slane %v478, %v482
        %v485 = vld [vmem:[%s2] sm:$0xff]
        %v486 = vld [vmem:[%s2 + $0x8] sm:$0xff]
        %v487 = vld [vmem:[%s2 + $0x10] sm:$0xff]
        %v488 = vld [vmem:[%s2 + $0x18] sm:$0xff]
        %v489 = vld [vmem:[%s3] sm:$0x1]
        %v491 = vlaneseq
        %v492 = vshrl.u32 %v491, 7
        %v493 = vsub.s32 0, %v492
        %v494 = vrot.slane %v489, %v493
        %vm496 = vcmask 261120
        %v498 = vsel %vm496, %v477, 0
        %500 = vmatprep.subr.mxu0 0.0
        %501 = vmatpush1.msra.mxu0 0.0
        %502 = vmatprep.subr.mxu0 0.0
        %503 = vmatpush1.msra.mxu0 0.0
        %504 = vmatprep.subr.mxu0 0.0
        %505 = vmatpush1.msra.mxu0 0.0
        %506 = vmatprep.subr.mxu0 0.0
        %507 = vmatpush1.msra.mxu0 0.0
        %508 = vmatprep.subr.mxu0 0.0
        %509 = vmatpush1.msra.mxu0 0.0
        %510 = vmatprep.subr.mxu0 0.0
        %511 = vmatpush1.msra.mxu0 0.0
        %512 = vmatprep.subr.mxu0 0.0
        %513 = vmatpush1.msra.mxu0 0.0
        %514 = vmatprep.subr.mxu0 0.0
        %515 = vmatpush1.msra.mxu0 0.0
        %516 = vmatprep.subr.mxu0 0.0
        %517 = vmatpush1.msra.mxu0 0.0
        %518 = vmatprep.subr.mxu0 0.0
        %519 = vmatpush1.msra.mxu0 0.0
        %520 = vmatprep.subr.mxu0 0.0
        %521 = vmatpush1.msra.mxu0 0.0
        %522 = vmatprep.subr.mxu0 0.0
        %523 = vmatpush1.msra.mxu0 0.0
        %524 = vmatprep.subr.mxu0 0.0
        %525 = vmatpush1.msra.mxu0 %v488
        %526 = vmatprep.subr.mxu0 0.0
        %527 = vmatpush1.msra.mxu0 %v487
        %528 = vmatprep.subr.mxu0 0.0
        %529 = vmatpush1.msra.mxu0 %v486
        %530 = vmatprep.subr.mxu0 0.0
        %531 = vmatpush1.msra.mxu0 %v485
        %532 = vmatprep.subr.mxu0 0.0
        %533 = vmatpush2.msra.mxu0 0.0
        %534 = vmatprep.subr.mxu0 0.0
        %535 = vmatpush2.msra.mxu0 0.0
        %536 = vmatprep.subr.mxu0 0.0
        %537 = vmatpush2.msra.mxu0 0.0
        %538 = vmatprep.subr.mxu0 0.0
        %539 = vmatpush2.msra.mxu0 0.0
        %540 = vmatprep.subr.mxu0 0.0
        %541 = vmatpush2.msra.mxu0 0.0
        %542 = vmatprep.subr.mxu0 0.0
        %543 = vmatpush2.msra.mxu0 0.0
        %544 = vmatprep.subr.mxu0 0.0
        %545 = vmatpush2.msra.mxu0 0.0
        %546 = vmatprep.subr.mxu0 0.0
        %547 = vmatpush2.msra.mxu0 0.0
        %548 = vmatprep.subr.mxu0 0.0
        %549 = vmatpush2.msra.mxu0 0.0
        %550 = vmatprep.subr.mxu0 0.0
        %551 = vmatpush2.msra.mxu0 0.0
        %552 = vmatprep.subr.mxu0 0.0
        %553 = vmatpush2.msra.mxu0 0.0
        %554 = vmatprep.subr.mxu0 0.0
        %555 = vmatpush2.msra.mxu0 0.0
        %556 = vmatprep.subr.mxu0 0.0
        %557 = vmatpush2.msra.mxu0 0.0
        %558 = vmatprep.subr.mxu0 0.0
        %559 = vmatpush2.msra.mxu0 0.0
        %560 = vmatprep.subr.mxu0 0.0
        %561 = vmatpush2.msra.mxu0 0.0
        %562 = vmatprep.subr.mxu0 0.0
        %563 = vmatpush2.msra.mxu0 0.0
        %564 = vmatprep.mubr.f32.mxu0 0.0
        %565 = vmatmul.mubr.f32.gmra.mxu0 %v498
        %v566 = vpop.f32.mrf.mxu0
        %v567 = vadd.f32 %v494, %v566
        %v568 = vpop.f32.mrf.mxu0
        %569 = vdwg.mxu0
        %571 = vrot.lane.b32.xlu0 %v567, 96
        %v572 = vpop.permute.xlu0 %571
        %vm573 = vcmask 64512
        %v574 = vsel %vm573, %v567, 0
        %v576 = vsel %vm573, %v572, 0
        %578 = vmatprep.subr.mxu0 0.0
        %579 = vmatpush1.xpose.msra.mxu0 0.0
        %580 = vmatprep.subr.mxu0 0.0
        %581 = vmatpush1.xpose.msra.mxu0 0.0
        %582 = vmatprep.subr.mxu0 0.0
        %583 = vmatpush1.xpose.msra.mxu0 0.0
        %584 = vmatprep.subr.mxu0 0.0
        %585 = vmatpush1.xpose.msra.mxu0 0.0
        %586 = vmatprep.subr.mxu0 0.0
        %587 = vmatpush1.xpose.msra.mxu0 0.0
        %588 = vmatprep.subr.mxu0 0.0
        %589 = vmatpush1.xpose.msra.mxu0 0.0
        %590 = vmatprep.subr.mxu0 0.0
        %591 = vmatpush1.xpose.msra.mxu0 0.0
        %592 = vmatprep.subr.mxu0 0.0
        %593 = vmatpush1.xpose.msra.mxu0 0.0
        %594 = vmatprep.subr.mxu0 0.0
        %595 = vmatpush1.xpose.msra.mxu0 0.0
        %596 = vmatprep.subr.mxu0 0.0
        %597 = vmatpush1.xpose.msra.mxu0 0.0
        %598 = vmatprep.subr.mxu0 0.0
        %599 = vmatpush1.xpose.msra.mxu0 0.0
        %600 = vmatprep.subr.mxu0 0.0
        %601 = vmatpush1.xpose.msra.mxu0 0.0
        %602 = vmatprep.subr.mxu0 0.0
        %603 = vmatpush1.xpose.msra.mxu0 0.0
        %604 = vmatprep.subr.mxu0 0.0
        %605 = vmatpush1.xpose.msra.mxu0 0.0
        %606 = vmatprep.subr.mxu0 0.0
        %607 = vmatpush1.xpose.msra.mxu0 0.0
        %608 = vmatprep.subr.mxu0 0.0
        %609 = vmatpush1.xpose.msra.mxu0 %v576
        %610 = vmatprep.subr.mxu0 0.0
        %611 = vmatpush2.xpose.msra.mxu0 0.0
        %612 = vmatprep.subr.mxu0 0.0
        %613 = vmatpush2.xpose.msra.mxu0 0.0
        %614 = vmatprep.subr.mxu0 0.0
        %615 = vmatpush2.xpose.msra.mxu0 0.0
        %616 = vmatprep.subr.mxu0 0.0
        %617 = vmatpush2.xpose.msra.mxu0 0.0
        %618 = vmatprep.subr.mxu0 0.0
        %619 = vmatpush2.xpose.msra.mxu0 0.0
        %620 = vmatprep.subr.mxu0 0.0
        %621 = vmatpush2.xpose.msra.mxu0 0.0
        %622 = vmatprep.subr.mxu0 0.0
        %623 = vmatpush2.xpose.msra.mxu0 0.0
        %624 = vmatprep.subr.mxu0 0.0
        %625 = vmatpush2.xpose.msra.mxu0 0.0
        %626 = vmatprep.subr.mxu0 0.0
        %627 = vmatpush2.xpose.msra.mxu0 0.0
        %628 = vmatprep.subr.mxu0 0.0
        %629 = vmatpush2.xpose.msra.mxu0 0.0
        %630 = vmatprep.subr.mxu0 0.0
        %631 = vmatpush2.xpose.msra.mxu0 0.0
        %632 = vmatprep.subr.mxu0 0.0
        %633 = vmatpush2.xpose.msra.mxu0 0.0
        %634 = vmatprep.subr.mxu0 0.0
        %635 = vmatpush2.xpose.msra.mxu0 0.0
        %636 = vmatprep.subr.mxu0 0.0
        %637 = vmatpush2.xpose.msra.mxu0 0.0
        %638 = vmatprep.subr.mxu0 0.0
        %639 = vmatpush2.xpose.msra.mxu0 0.0
        %640 = vmatprep.subr.mxu0 0.0
        %641 = vmatpush2.xpose.msra.mxu0 0.0
        %642 = vmatprep.mubr.f32.mxu0 0.0
        %643 = vmatmul.mubr.f32.gmra.mxu0 %v574
        %v644 = vpop.f32.mrf.mxu0
        %v645 = vadd.f32 0.0, %v644
        %v646 = vpop.f32.mrf.mxu0
        %647 = vdwg.mxu0
        %v648 = vmul.f32 %v645, 0.35355338
        %v649 = vadd.f32 %v648, %v483
        %v650 = vsel %vm573, %v649, -inf
        %651 = vmax.xlane.f32.xlu0 %v650
        %v652 = vpop.xlane.xlu0 %651
        %v653 = vsub.f32 %v649, %v652
        %v654 = vmul.f32 %v653, 1.442695
        %v655 = vpow.pop %v654
        %v656 = vsel %vm573, %v655, 0.0
        %657 = vadd.xlane.f32.xlu0 %v656
        %v658 = vpop.xlane.xlu0 %657
        %v659 = vrcp.pop %v658
        %v660 = vmul.f32 %v655, %v659
        %661 = vrot.lane.b32.xlu0 %v567, 64
        %v662 = vpop.permute.xlu0 %661
        %v665 = vsel %vm573, %v660, 0
        %667 = vmatprep.subr.mxu0 0.0
        %668 = vmatpush1.msra.mxu0 0.0
        %669 = vmatprep.subr.mxu0 0.0
        %670 = vmatpush1.msra.mxu0 0.0
        %671 = vmatprep.subr.mxu0 0.0
        %672 = vmatpush1.msra.mxu0 0.0
        %673 = vmatprep.subr.mxu0 0.0
        %674 = vmatpush1.msra.mxu0 0.0
        %675 = vmatprep.subr.mxu0 0.0
        %676 = vmatpush1.msra.mxu0 0.0
        %677 = vmatprep.subr.mxu0 0.0
        %678 = vmatpush1.msra.mxu0 0.0
        %679 = vmatprep.subr.mxu0 0.0
        %680 = vmatpush1.msra.mxu0 0.0
        %681 = vmatprep.subr.mxu0 0.0
        %682 = vmatpush1.msra.mxu0 0.0
        %683 = vmatprep.subr.mxu0 0.0
        %684 = vmatpush1.msra.mxu0 0.0
        %685 = vmatprep.subr.mxu0 0.0
        %686 = vmatpush1.msra.mxu0 0.0
        %687 = vmatprep.subr.mxu0 0.0
        %688 = vmatpush1.msra.mxu0 0.0
        %689 = vmatprep.subr.mxu0 0.0
        %690 = vmatpush1.msra.mxu0 0.0
        %691 = vmatprep.subr.mxu0 0.0
        %692 = vmatpush1.msra.mxu0 0.0
        %693 = vmatprep.subr.mxu0 0.0
        %694 = vmatpush1.msra.mxu0 0.0
        %695 = vmatprep.subr.mxu0 0.0
        %696 = vmatpush1.msra.mxu0 0.0
        %697 = vmatprep.subr.mxu0 0.0
        %698 = vmatpush1.msra.mxu0 %v662
        %699 = vmatprep.subr.mxu0 0.0
        %700 = vmatpush2.msra.mxu0 0.0
        %701 = vmatprep.subr.mxu0 0.0
        %702 = vmatpush2.msra.mxu0 0.0
        %703 = vmatprep.subr.mxu0 0.0
        %704 = vmatpush2.msra.mxu0 0.0
        %705 = vmatprep.subr.mxu0 0.0
        %706 = vmatpush2.msra.mxu0 0.0
        %707 = vmatprep.subr.mxu0 0.0
        %708 = vmatpush2.msra.mxu0 0.0
        %709 = vmatprep.subr.mxu0 0.0
        %710 = vmatpush2.msra.mxu0 0.0
        %711 = vmatprep.subr.mxu0 0.0
        %712 = vmatpush2.msra.mxu0 0.0
        %713 = vmatprep.subr.mxu0 0.0
        %714 = vmatpush2.msra.mxu0 0.0
        %715 = vmatprep.subr.mxu0 0.0
        %716 = vmatpush2.msra.mxu0 0.0
        %717 = vmatprep.subr.mxu0 0.0
        %718 = vmatpush2.msra.mxu0 0.0
        %719 = vmatprep.subr.mxu0 0.0
        %720 = vmatpush2.msra.mxu0 0.0
        %721 = vmatprep.subr.mxu0 0.0
        %722 = vmatpush2.msra.mxu0 0.0
        %723 = vmatprep.subr.mxu0 0.0
        %724 = vmatpush2.msra.mxu0 0.0
        %725 = vmatprep.subr.mxu0 0.0
        %726 = vmatpush2.msra.mxu0 0.0
        %727 = vmatprep.subr.mxu0 0.0
        %728 = vmatpush2.msra.mxu0 0.0
        %729 = vmatprep.subr.mxu0 0.0
        %730 = vmatpush2.msra.mxu0 0.0
        %731 = vmatprep.mubr.f32.mxu0 0.0
        %732 = vmatmul.mubr.f32.gmra.mxu0 %v665
        %v733 = vpop.f32.mrf.mxu0
        %v734 = vadd.f32 0.0, %v733
        %v735 = vpop.f32.mrf.mxu0
        %736 = vdwg.mxu0
        %v737 = vld [vmem:[%s4] sm:$0xff]
        %738 = vrot.lane.b32.xlu0 %v567, 120
        %v739 = vpop.permute.xlu0 %738
        %740 = vrot.lane.b32.xlu0 %v567, 88
        %v741 = vpop.permute.xlu0 %740
        %v742 = vsel %vm573, %v739, 0
        %v744 = vsel %vm573, %v741, 0
        %746 = vmatprep.subr.mxu0 0.0
        %747 = vmatpush1.xpose.msra.mxu0 0.0
        %748 = vmatprep.subr.mxu0 0.0
        %749 = vmatpush1.xpose.msra.mxu0 0.0
        %750 = vmatprep.subr.mxu0 0.0
        %751 = vmatpush1.xpose.msra.mxu0 0.0
        %752 = vmatprep.subr.mxu0 0.0
        %753 = vmatpush1.xpose.msra.mxu0 0.0
        %754 = vmatprep.subr.mxu0 0.0
        %755 = vmatpush1.xpose.msra.mxu0 0.0
        %756 = vmatprep.subr.mxu0 0.0
        %757 = vmatpush1.xpose.msra.mxu0 0.0
        %758 = vmatprep.subr.mxu0 0.0
        %759 = vmatpush1.xpose.msra.mxu0 0.0
        %760 = vmatprep.subr.mxu0 0.0
        %761 = vmatpush1.xpose.msra.mxu0 0.0
        %762 = vmatprep.subr.mxu0 0.0
        %763 = vmatpush1.xpose.msra.mxu0 0.0
        %764 = vmatprep.subr.mxu0 0.0
        %765 = vmatpush1.xpose.msra.mxu0 0.0
        %766 = vmatprep.subr.mxu0 0.0
        %767 = vmatpush1.xpose.msra.mxu0 0.0
        %768 = vmatprep.subr.mxu0 0.0
        %769 = vmatpush1.xpose.msra.mxu0 0.0
        %770 = vmatprep.subr.mxu0 0.0
        %771 = vmatpush1.xpose.msra.mxu0 0.0
        %772 = vmatprep.subr.mxu0 0.0
        %773 = vmatpush1.xpose.msra.mxu0 0.0
        %774 = vmatprep.subr.mxu0 0.0
        %775 = vmatpush1.xpose.msra.mxu0 0.0
        %776 = vmatprep.subr.mxu0 0.0
        %777 = vmatpush1.xpose.msra.mxu0 %v744
        %778 = vmatprep.subr.mxu0 0.0
        %779 = vmatpush2.xpose.msra.mxu0 0.0
        %780 = vmatprep.subr.mxu0 0.0
        %781 = vmatpush2.xpose.msra.mxu0 0.0
        %782 = vmatprep.subr.mxu0 0.0
        %783 = vmatpush2.xpose.msra.mxu0 0.0
        %784 = vmatprep.subr.mxu0 0.0
        %785 = vmatpush2.xpose.msra.mxu0 0.0
        %786 = vmatprep.subr.mxu0 0.0
        %787 = vmatpush2.xpose.msra.mxu0 0.0
        %788 = vmatprep.subr.mxu0 0.0
        %789 = vmatpush2.xpose.msra.mxu0 0.0
        %790 = vmatprep.subr.mxu0 0.0
        %791 = vmatpush2.xpose.msra.mxu0 0.0
        %792 = vmatprep.subr.mxu0 0.0
        %793 = vmatpush2.xpose.msra.mxu0 0.0
        %794 = vmatprep.subr.mxu0 0.0
        %795 = vmatpush2.xpose.msra.mxu0 0.0
        %796 = vmatprep.subr.mxu0 0.0
        %797 = vmatpush2.xpose.msra.mxu0 0.0
        %798 = vmatprep.subr.mxu0 0.0
        %799 = vmatpush2.xpose.msra.mxu0 0.0
        %800 = vmatprep.subr.mxu0 0.0
        %801 = vmatpush2.xpose.msra.mxu0 0.0
        %802 = vmatprep.subr.mxu0 0.0
        %803 = vmatpush2.xpose.msra.mxu0 0.0
        %804 = vmatprep.subr.mxu0 0.0
        %805 = vmatpush2.xpose.msra.mxu0 0.0
        %806 = vmatprep.subr.mxu0 0.0
        %807 = vmatpush2.xpose.msra.mxu0 0.0
        %808 = vmatprep.subr.mxu0 0.0
        %809 = vmatpush2.xpose.msra.mxu0 0.0
        %810 = vmatprep.mubr.f32.mxu0 0.0
        %811 = vmatmul.mubr.f32.gmra.mxu0 %v742
        %v812 = vpop.f32.mrf.mxu0
        %v813 = vadd.f32 0.0, %v812
        %v814 = vpop.f32.mrf.mxu0
        %815 = vdwg.mxu0
        %v816 = vmul.f32 %v813, 0.35355338
        %v817 = vadd.f32 %v816, %v483
        %v818 = vsel %vm573, %v817, -inf
        %819 = vmax.xlane.f32.xlu0 %v818
        %v820 = vpop.xlane.xlu0 %819
        %v821 = vsub.f32 %v817, %v820
        %v822 = vmul.f32 %v821, 1.442695
        %v823 = vpow.pop %v822
        %v824 = vsel %vm573, %v823, 0.0
        %825 = vadd.xlane.f32.xlu0 %v824
        %v826 = vpop.xlane.xlu0 %825
        %v827 = vrcp.pop %v826
        %v828 = vmul.f32 %v823, %v827
        %829 = vrot.lane.b32.xlu0 %v567, 56
        %v830 = vpop.permute.xlu0 %829
        %v833 = vsel %vm573, %v828, 0
        %835 = vmatprep.subr.mxu0 0.0
        %836 = vmatpush1.msra.mxu0 0.0
        %837 = vmatprep.subr.mxu0 0.0
        %838 = vmatpush1.msra.mxu0 0.0
        %839 = vmatprep.subr.mxu0 0.0
        %840 = vmatpush1.msra.mxu0 0.0
        %841 = vmatprep.subr.mxu0 0.0
        %842 = vmatpush1.msra.mxu0 0.0
        %843 = vmatprep.subr.mxu0 0.0
        %844 = vmatpush1.msra.mxu0 0.0
        %845 = vmatprep.subr.mxu0 0.0
        %846 = vmatpush1.msra.mxu0 0.0
        %847 = vmatprep.subr.mxu0 0.0
        %848 = vmatpush1.msra.mxu0 0.0
        %849 = vmatprep.subr.mxu0 0.0
        %850 = vmatpush1.msra.mxu0 0.0
        %851 = vmatprep.subr.mxu0 0.0
        %852 = vmatpush1.msra.mxu0 0.0
        %853 = vmatprep.subr.mxu0 0.0
        %854 = vmatpush1.msra.mxu0 0.0
        %855 = vmatprep.subr.mxu0 0.0
        %856 = vmatpush1.msra.mxu0 0.0
        %857 = vmatprep.subr.mxu0 0.0
        %858 = vmatpush1.msra.mxu0 0.0
        %859 = vmatprep.subr.mxu0 0.0
        %860 = vmatpush1.msra.mxu0 0.0
        %861 = vmatprep.subr.mxu0 0.0
        %862 = vmatpush1.msra.mxu0 0.0
        %863 = vmatprep.subr.mxu0 0.0
        %864 = vmatpush1.msra.mxu0 0.0
        %865 = vmatprep.subr.mxu0 0.0
        %866 = vmatpush1.msra.mxu0 %v830
        %867 = vmatprep.subr.mxu0 0.0
        %868 = vmatpush2.msra.mxu0 0.0
        %869 = vmatprep.subr.mxu0 0.0
        %870 = vmatpush2.msra.mxu0 0.0
        %871 = vmatprep.subr.mxu0 0.0
        %872 = vmatpush2.msra.mxu0 0.0
        %873 = vmatprep.subr.mxu0 0.0
        %874 = vmatpush2.msra.mxu0 0.0
        %875 = vmatprep.subr.mxu0 0.0
        %876 = vmatpush2.msra.mxu0 0.0
        %877 = vmatprep.subr.mxu0 0.0
        %878 = vmatpush2.msra.mxu0 0.0
        %879 = vmatprep.subr.mxu0 0.0
        %880 = vmatpush2.msra.mxu0 0.0
        %881 = vmatprep.subr.mxu0 0.0
        %882 = vmatpush2.msra.mxu0 0.0
        %883 = vmatprep.subr.mxu0 0.0
        %884 = vmatpush2.msra.mxu0 0.0
        %885 = vmatprep.subr.mxu0 0.0
        %886 = vmatpush2.msra.mxu0 0.0
        %887 = vmatprep.subr.mxu0 0.0
        %888 = vmatpush2.msra.mxu0 0.0
        %889 = vmatprep.subr.mxu0 0.0
        %890 = vmatpush2.msra.mxu0 0.0
        %891 = vmatprep.subr.mxu0 0.0
        %892 = vmatpush2.msra.mxu0 0.0
        %893 = vmatprep.subr.mxu0 0.0
        %894 = vmatpush2.msra.mxu0 0.0
        %895 = vmatprep.subr.mxu0 0.0
        %896 = vmatpush2.msra.mxu0 0.0
        %897 = vmatprep.subr.mxu0 0.0
        %898 = vmatpush2.msra.mxu0 0.0
        %899 = vmatprep.mubr.f32.mxu0 0.0
        %900 = vmatmul.mubr.f32.gmra.mxu0 %v833
        %v901 = vpop.f32.mrf.mxu0
        %v902 = vadd.f32 0.0, %v901
        %v903 = vpop.f32.mrf.mxu0
        %904 = vdwg.mxu0
        %s905 = scalar_lea.vmem %s4, 8
        %v906 = vld [vmem:[%s905] sm:$0xff]
        %v908 = vsel %vm573, %v902, 0
        %910 = vmatprep.subr.mxu0 0.0
        %911 = vmatpush1.msra.mxu0 0.0
        %912 = vmatprep.subr.mxu0 0.0
        %913 = vmatpush1.msra.mxu0 0.0
        %914 = vmatprep.subr.mxu0 0.0
        %915 = vmatpush1.msra.mxu0 0.0
        %916 = vmatprep.subr.mxu0 0.0
        %917 = vmatpush1.msra.mxu0 0.0
        %918 = vmatprep.subr.mxu0 0.0
        %919 = vmatpush1.msra.mxu0 0.0
        %920 = vmatprep.subr.mxu0 0.0
        %921 = vmatpush1.msra.mxu0 0.0
        %922 = vmatprep.subr.mxu0 0.0
        %923 = vmatpush1.msra.mxu0 0.0
        %924 = vmatprep.subr.mxu0 0.0
        %925 = vmatpush1.msra.mxu0 0.0
        %926 = vmatprep.subr.mxu0 0.0
        %927 = vmatpush1.msra.mxu0 0.0
        %928 = vmatprep.subr.mxu0 0.0
        %929 = vmatpush1.msra.mxu0 0.0
        %930 = vmatprep.subr.mxu0 0.0
        %931 = vmatpush1.msra.mxu0 0.0
        %932 = vmatprep.subr.mxu0 0.0
        %933 = vmatpush1.msra.mxu0 0.0
        %934 = vmatprep.subr.mxu0 0.0
        %935 = vmatpush1.msra.mxu0 0.0
        %936 = vmatprep.subr.mxu0 0.0
        %937 = vmatpush1.msra.mxu0 0.0
        %938 = vmatprep.subr.mxu0 0.0
        %939 = vmatpush1.msra.mxu0 0.0
        %940 = vmatprep.subr.mxu0 0.0
        %941 = vmatpush1.msra.mxu0 %v906
        %942 = vmatprep.subr.mxu0 0.0
        %943 = vmatpush2.msra.mxu0 0.0
        %944 = vmatprep.subr.mxu0 0.0
        %945 = vmatpush2.msra.mxu0 0.0
        %946 = vmatprep.subr.mxu0 0.0
        %947 = vmatpush2.msra.mxu0 0.0
        %948 = vmatprep.subr.mxu0 0.0
        %949 = vmatpush2.msra.mxu0 0.0
        %950 = vmatprep.subr.mxu0 0.0
        %951 = vmatpush2.msra.mxu0 0.0
        %952 = vmatprep.subr.mxu0 0.0
        %953 = vmatpush2.msra.mxu0 0.0
        %954 = vmatprep.subr.mxu0 0.0
        %955 = vmatpush2.msra.mxu0 0.0
        %956 = vmatprep.subr.mxu0 0.0
        %957 = vmatpush2.msra.mxu0 0.0
        %958 = vmatprep.subr.mxu0 0.0
        %959 = vmatpush2.msra.mxu0 0.0
        %960 = vmatprep.subr.mxu0 0.0
        %961 = vmatpush2.msra.mxu0 0.0
        %962 = vmatprep.subr.mxu0 0.0
        %963 = vmatpush2.msra.mxu0 0.0
        %964 = vmatprep.subr.mxu0 0.0
        %965 = vmatpush2.msra.mxu0 0.0
        %966 = vmatprep.subr.mxu0 0.0
        %967 = vmatpush2.msra.mxu0 0.0
        %968 = vmatprep.subr.mxu0 0.0
        %969 = vmatpush2.msra.mxu0 0.0
        %970 = vmatprep.subr.mxu0 0.0
        %971 = vmatpush2.msra.mxu0 0.0
        %972 = vmatprep.subr.mxu0 0.0
        %973 = vmatpush2.msra.mxu0 0.0
        %974 = vmatprep.mubr.f32.mxu0 0.0
        %975 = vmatmul.mubr.f32.gmra.mxu0 %v908
        %v976 = vpop.f32.mrf.mxu0
        %v977 = vadd.f32 0.0, %v976
        %v978 = vpop.f32.mrf.mxu0
        %979 = vdwg.mxu0
        %v981 = vsel %vm573, %v734, 0
        %983 = vmatprep.subr.mxu0 0.0
        %984 = vmatpush1.msra.mxu0 0.0
        %985 = vmatprep.subr.mxu0 0.0
        %986 = vmatpush1.msra.mxu0 0.0
        %987 = vmatprep.subr.mxu0 0.0
        %988 = vmatpush1.msra.mxu0 0.0
        %989 = vmatprep.subr.mxu0 0.0
        %990 = vmatpush1.msra.mxu0 0.0
        %991 = vmatprep.subr.mxu0 0.0
        %992 = vmatpush1.msra.mxu0 0.0
        %993 = vmatprep.subr.mxu0 0.0
        %994 = vmatpush1.msra.mxu0 0.0
        %995 = vmatprep.subr.mxu0 0.0
        %996 = vmatpush1.msra.mxu0 0.0
        %997 = vmatprep.subr.mxu0 0.0
        %998 = vmatpush1.msra.mxu0 0.0
        %999 = vmatprep.subr.mxu0 0.0
        %1000 = vmatpush1.msra.mxu0 0.0
        %1001 = vmatprep.subr.mxu0 0.0
        %1002 = vmatpush1.msra.mxu0 0.0
        %1003 = vmatprep.subr.mxu0 0.0
        %1004 = vmatpush1.msra.mxu0 0.0
        %1005 = vmatprep.subr.mxu0 0.0
        %1006 = vmatpush1.msra.mxu0 0.0
        %1007 = vmatprep.subr.mxu0 0.0
        %1008 = vmatpush1.msra.mxu0 0.0
        %1009 = vmatprep.subr.mxu0 0.0
        %1010 = vmatpush1.msra.mxu0 0.0
        %1011 = vmatprep.subr.mxu0 0.0
        %1012 = vmatpush1.msra.mxu0 0.0
        %1013 = vmatprep.subr.mxu0 0.0
        %1014 = vmatpush1.msra.mxu0 %v737
        %1015 = vmatprep.subr.mxu0 0.0
        %1016 = vmatpush2.msra.mxu0 0.0
        %1017 = vmatprep.subr.mxu0 0.0
        %1018 = vmatpush2.msra.mxu0 0.0
        %1019 = vmatprep.subr.mxu0 0.0
        %1020 = vmatpush2.msra.mxu0 0.0
        %1021 = vmatprep.subr.mxu0 0.0
        %1022 = vmatpush2.msra.mxu0 0.0
        %1023 = vmatprep.subr.mxu0 0.0
        %1024 = vmatpush2.msra.mxu0 0.0
        %1025 = vmatprep.subr.mxu0 0.0
        %1026 = vmatpush2.msra.mxu0 0.0
        %1027 = vmatprep.subr.mxu0 0.0
        %1028 = vmatpush2.msra.mxu0 0.0
        %1029 = vmatprep.subr.mxu0 0.0
        %1030 = vmatpush2.msra.mxu0 0.0
        %1031 = vmatprep.subr.mxu0 0.0
        %1032 = vmatpush2.msra.mxu0 0.0
        %1033 = vmatprep.subr.mxu0 0.0
        %1034 = vmatpush2.msra.mxu0 0.0
        %1035 = vmatprep.subr.mxu0 0.0
        %1036 = vmatpush2.msra.mxu0 0.0
        %1037 = vmatprep.subr.mxu0 0.0
        %1038 = vmatpush2.msra.mxu0 0.0
        %1039 = vmatprep.subr.mxu0 0.0
        %1040 = vmatpush2.msra.mxu0 0.0
        %1041 = vmatprep.subr.mxu0 0.0
        %1042 = vmatpush2.msra.mxu0 0.0
        %1043 = vmatprep.subr.mxu0 0.0
        %1044 = vmatpush2.msra.mxu0 0.0
        %1045 = vmatprep.subr.mxu0 0.0
        %1046 = vmatpush2.msra.mxu0 0.0
        %1047 = vmatprep.mubr.f32.mxu0 0.0
        %1048 = vmatmul.mubr.f32.gmra.mxu0 %v981
        %v1049 = vpop.f32.mrf.mxu0
        %v1050 = vadd.f32 %v977, %v1049
        %v1051 = vpop.f32.mrf.mxu0
        %1052 = vdwg.mxu0
        %1053 = vrot.lane.b32.xlu0 %v567, 112
        %v1054 = vpop.permute.xlu0 %1053
        %1055 = vrot.lane.b32.xlu0 %v567, 80
        %v1056 = vpop.permute.xlu0 %1055
        %v1057 = vsel %vm573, %v1054, 0
        %v1059 = vsel %vm573, %v1056, 0
        %1061 = vmatprep.subr.mxu0 0.0
        %1062 = vmatpush1.xpose.msra.mxu0 0.0
        %1063 = vmatprep.subr.mxu0 0.0
        %1064 = vmatpush1.xpose.msra.mxu0 0.0
        %1065 = vmatprep.subr.mxu0 0.0
        %1066 = vmatpush1.xpose.msra.mxu0 0.0
        %1067 = vmatprep.subr.mxu0 0.0
        %1068 = vmatpush1.xpose.msra.mxu0 0.0
        %1069 = vmatprep.subr.mxu0 0.0
        %1070 = vmatpush1.xpose.msra.mxu0 0.0
        %1071 = vmatprep.subr.mxu0 0.0
        %1072 = vmatpush1.xpose.msra.mxu0 0.0
        %1073 = vmatprep.subr.mxu0 0.0
        %1074 = vmatpush1.xpose.msra.mxu0 0.0
        %1075 = vmatprep.subr.mxu0 0.0
        %1076 = vmatpush1.xpose.msra.mxu0 0.0
        %1077 = vmatprep.subr.mxu0 0.0
        %1078 = vmatpush1.xpose.msra.mxu0 0.0
        %1079 = vmatprep.subr.mxu0 0.0
        %1080 = vmatpush1.xpose.msra.mxu0 0.0
        %1081 = vmatprep.subr.mxu0 0.0
        %1082 = vmatpush1.xpose.msra.mxu0 0.0
        %1083 = vmatprep.subr.mxu0 0.0
        %1084 = vmatpush1.xpose.msra.mxu0 0.0
        %1085 = vmatprep.subr.mxu0 0.0
        %1086 = vmatpush1.xpose.msra.mxu0 0.0
        %1087 = vmatprep.subr.mxu0 0.0
        %1088 = vmatpush1.xpose.msra.mxu0 0.0
        %1089 = vmatprep.subr.mxu0 0.0
        %1090 = vmatpush1.xpose.msra.mxu0 0.0
        %1091 = vmatprep.subr.mxu0 0.0
        %1092 = vmatpush1.xpose.msra.mxu0 %v1059
        %1093 = vmatprep.subr.mxu0 0.0
        %1094 = vmatpush2.xpose.msra.mxu0 0.0
        %1095 = vmatprep.subr.mxu0 0.0
        %1096 = vmatpush2.xpose.msra.mxu0 0.0
        %1097 = vmatprep.subr.mxu0 0.0
        %1098 = vmatpush2.xpose.msra.mxu0 0.0
        %1099 = vmatprep.subr.mxu0 0.0
        %1100 = vmatpush2.xpose.msra.mxu0 0.0
        %1101 = vmatprep.subr.mxu0 0.0
        %1102 = vmatpush2.xpose.msra.mxu0 0.0
        %1103 = vmatprep.subr.mxu0 0.0
        %1104 = vmatpush2.xpose.msra.mxu0 0.0
        %1105 = vmatprep.subr.mxu0 0.0
        %1106 = vmatpush2.xpose.msra.mxu0 0.0
        %1107 = vmatprep.subr.mxu0 0.0
        %1108 = vmatpush2.xpose.msra.mxu0 0.0
        %1109 = vmatprep.subr.mxu0 0.0
        %1110 = vmatpush2.xpose.msra.mxu0 0.0
        %1111 = vmatprep.subr.mxu0 0.0
        %1112 = vmatpush2.xpose.msra.mxu0 0.0
        %1113 = vmatprep.subr.mxu0 0.0
        %1114 = vmatpush2.xpose.msra.mxu0 0.0
        %1115 = vmatprep.subr.mxu0 0.0
        %1116 = vmatpush2.xpose.msra.mxu0 0.0
        %1117 = vmatprep.subr.mxu0 0.0
        %1118 = vmatpush2.xpose.msra.mxu0 0.0
        %1119 = vmatprep.subr.mxu0 0.0
        %1120 = vmatpush2.xpose.msra.mxu0 0.0
        %1121 = vmatprep.subr.mxu0 0.0
        %1122 = vmatpush2.xpose.msra.mxu0 0.0
        %1123 = vmatprep.subr.mxu0 0.0
        %1124 = vmatpush2.xpose.msra.mxu0 0.0
        %1125 = vmatprep.mubr.f32.mxu0 0.0
        %1126 = vmatmul.mubr.f32.gmra.mxu0 %v1057
        %v1127 = vpop.f32.mrf.mxu0
        %v1128 = vadd.f32 0.0, %v1127
        %v1129 = vpop.f32.mrf.mxu0
        %1130 = vdwg.mxu0
        %v1131 = vmul.f32 %v1128, 0.35355338
        %v1132 = vadd.f32 %v1131, %v483
        %v1133 = vsel %vm573, %v1132, -inf
        %1134 = vmax.xlane.f32.xlu0 %v1133
        %v1135 = vpop.xlane.xlu0 %1134
        %v1136 = vsub.f32 %v1132, %v1135
        %v1137 = vmul.f32 %v1136, 1.442695
        %v1138 = vpow.pop %v1137
        %v1139 = vsel %vm573, %v1138, 0.0
        %1140 = vadd.xlane.f32.xlu0 %v1139
        %v1141 = vpop.xlane.xlu0 %1140
        %v1142 = vrcp.pop %v1141
        %v1143 = vmul.f32 %v1138, %v1142
        %1144 = vrot.lane.b32.xlu0 %v567, 48
        %v1145 = vpop.permute.xlu0 %1144
        %v1148 = vsel %vm573, %v1143, 0
        %1150 = vmatprep.subr.mxu0 0.0
        %1151 = vmatpush1.msra.mxu0 0.0
        %1152 = vmatprep.subr.mxu0 0.0
        %1153 = vmatpush1.msra.mxu0 0.0
        %1154 = vmatprep.subr.mxu0 0.0
        %1155 = vmatpush1.msra.mxu0 0.0
        %1156 = vmatprep.subr.mxu0 0.0
        %1157 = vmatpush1.msra.mxu0 0.0
        %1158 = vmatprep.subr.mxu0 0.0
        %1159 = vmatpush1.msra.mxu0 0.0
        %1160 = vmatprep.subr.mxu0 0.0
        %1161 = vmatpush1.msra.mxu0 0.0
        %1162 = vmatprep.subr.mxu0 0.0
        %1163 = vmatpush1.msra.mxu0 0.0
        %1164 = vmatprep.subr.mxu0 0.0
        %1165 = vmatpush1.msra.mxu0 0.0
        %1166 = vmatprep.subr.mxu0 0.0
        %1167 = vmatpush1.msra.mxu0 0.0
        %1168 = vmatprep.subr.mxu0 0.0
        %1169 = vmatpush1.msra.mxu0 0.0
        %1170 = vmatprep.subr.mxu0 0.0
        %1171 = vmatpush1.msra.mxu0 0.0
        %1172 = vmatprep.subr.mxu0 0.0
        %1173 = vmatpush1.msra.mxu0 0.0
        %1174 = vmatprep.subr.mxu0 0.0
        %1175 = vmatpush1.msra.mxu0 0.0
        %1176 = vmatprep.subr.mxu0 0.0
        %1177 = vmatpush1.msra.mxu0 0.0
        %1178 = vmatprep.subr.mxu0 0.0
        %1179 = vmatpush1.msra.mxu0 0.0
        %1180 = vmatprep.subr.mxu0 0.0
        %1181 = vmatpush1.msra.mxu0 %v1145
        %1182 = vmatprep.subr.mxu0 0.0
        %1183 = vmatpush2.msra.mxu0 0.0
        %1184 = vmatprep.subr.mxu0 0.0
        %1185 = vmatpush2.msra.mxu0 0.0
        %1186 = vmatprep.subr.mxu0 0.0
        %1187 = vmatpush2.msra.mxu0 0.0
        %1188 = vmatprep.subr.mxu0 0.0
        %1189 = vmatpush2.msra.mxu0 0.0
        %1190 = vmatprep.subr.mxu0 0.0
        %1191 = vmatpush2.msra.mxu0 0.0
        %1192 = vmatprep.subr.mxu0 0.0
        %1193 = vmatpush2.msra.mxu0 0.0
        %1194 = vmatprep.subr.mxu0 0.0
        %1195 = vmatpush2.msra.mxu0 0.0
        %1196 = vmatprep.subr.mxu0 0.0
        %1197 = vmatpush2.msra.mxu0 0.0
        %1198 = vmatprep.subr.mxu0 0.0
        %1199 = vmatpush2.msra.mxu0 0.0
        %1200 = vmatprep.subr.mxu0 0.0
        %1201 = vmatpush2.msra.mxu0 0.0
        %1202 = vmatprep.subr.mxu0 0.0
        %1203 = vmatpush2.msra.mxu0 0.0
        %1204 = vmatprep.subr.mxu0 0.0
        %1205 = vmatpush2.msra.mxu0 0.0
        %1206 = vmatprep.subr.mxu0 0.0
        %1207 = vmatpush2.msra.mxu0 0.0
        %1208 = vmatprep.subr.mxu0 0.0
        %1209 = vmatpush2.msra.mxu0 0.0
        %1210 = vmatprep.subr.mxu0 0.0
        %1211 = vmatpush2.msra.mxu0 0.0
        %1212 = vmatprep.subr.mxu0 0.0
        %1213 = vmatpush2.msra.mxu0 0.0
        %1214 = vmatprep.mubr.f32.mxu0 0.0
        %1215 = vmatmul.mubr.f32.gmra.mxu0 %v1148
        %v1216 = vpop.f32.mrf.mxu0
        %v1217 = vadd.f32 0.0, %v1216
        %v1218 = vpop.f32.mrf.mxu0
        %1219 = vdwg.mxu0
        %s1220 = scalar_lea.vmem %s4, 16
        %v1221 = vld [vmem:[%s1220] sm:$0xff]
        %v1223 = vsel %vm573, %v1217, 0
        %1225 = vmatprep.subr.mxu0 0.0
        %1226 = vmatpush1.msra.mxu0 0.0
        %1227 = vmatprep.subr.mxu0 0.0
        %1228 = vmatpush1.msra.mxu0 0.0
        %1229 = vmatprep.subr.mxu0 0.0
        %1230 = vmatpush1.msra.mxu0 0.0
        %1231 = vmatprep.subr.mxu0 0.0
        %1232 = vmatpush1.msra.mxu0 0.0
        %1233 = vmatprep.subr.mxu0 0.0
        %1234 = vmatpush1.msra.mxu0 0.0
        %1235 = vmatprep.subr.mxu0 0.0
        %1236 = vmatpush1.msra.mxu0 0.0
        %1237 = vmatprep.subr.mxu0 0.0
        %1238 = vmatpush1.msra.mxu0 0.0
        %1239 = vmatprep.subr.mxu0 0.0
        %1240 = vmatpush1.msra.mxu0 0.0
        %1241 = vmatprep.subr.mxu0 0.0
        %1242 = vmatpush1.msra.mxu0 0.0
        %1243 = vmatprep.subr.mxu0 0.0
        %1244 = vmatpush1.msra.mxu0 0.0
        %1245 = vmatprep.subr.mxu0 0.0
        %1246 = vmatpush1.msra.mxu0 0.0
        %1247 = vmatprep.subr.mxu0 0.0
        %1248 = vmatpush1.msra.mxu0 0.0
        %1249 = vmatprep.subr.mxu0 0.0
        %1250 = vmatpush1.msra.mxu0 0.0
        %1251 = vmatprep.subr.mxu0 0.0
        %1252 = vmatpush1.msra.mxu0 0.0
        %1253 = vmatprep.subr.mxu0 0.0
        %1254 = vmatpush1.msra.mxu0 0.0
        %1255 = vmatprep.subr.mxu0 0.0
        %1256 = vmatpush1.msra.mxu0 %v1221
        %1257 = vmatprep.subr.mxu0 0.0
        %1258 = vmatpush2.msra.mxu0 0.0
        %1259 = vmatprep.subr.mxu0 0.0
        %1260 = vmatpush2.msra.mxu0 0.0
        %1261 = vmatprep.subr.mxu0 0.0
        %1262 = vmatpush2.msra.mxu0 0.0
        %1263 = vmatprep.subr.mxu0 0.0
        %1264 = vmatpush2.msra.mxu0 0.0
        %1265 = vmatprep.subr.mxu0 0.0
        %1266 = vmatpush2.msra.mxu0 0.0
        %1267 = vmatprep.subr.mxu0 0.0
        %1268 = vmatpush2.msra.mxu0 0.0
        %1269 = vmatprep.subr.mxu0 0.0
        %1270 = vmatpush2.msra.mxu0 0.0
        %1271 = vmatprep.subr.mxu0 0.0
        %1272 = vmatpush2.msra.mxu0 0.0
        %1273 = vmatprep.subr.mxu0 0.0
        %1274 = vmatpush2.msra.mxu0 0.0
        %1275 = vmatprep.subr.mxu0 0.0
        %1276 = vmatpush2.msra.mxu0 0.0
        %1277 = vmatprep.subr.mxu0 0.0
        %1278 = vmatpush2.msra.mxu0 0.0
        %1279 = vmatprep.subr.mxu0 0.0
        %1280 = vmatpush2.msra.mxu0 0.0
        %1281 = vmatprep.subr.mxu0 0.0
        %1282 = vmatpush2.msra.mxu0 0.0
        %1283 = vmatprep.subr.mxu0 0.0
        %1284 = vmatpush2.msra.mxu0 0.0
        %1285 = vmatprep.subr.mxu0 0.0
        %1286 = vmatpush2.msra.mxu0 0.0
        %1287 = vmatprep.subr.mxu0 0.0
        %1288 = vmatpush2.msra.mxu0 0.0
        %1289 = vmatprep.mubr.f32.mxu0 0.0
        %1290 = vmatmul.mubr.f32.gmra.mxu0 %v1223
        %v1291 = vpop.f32.mrf.mxu0
        %v1292 = vadd.f32 0.0, %v1291
        %v1293 = vpop.f32.mrf.mxu0
        %1294 = vdwg.mxu0
        %v1295 = vadd.f32 %v1050, %v1292
        %1296 = vrot.lane.b32.xlu0 %v567, 104
        %v1297 = vpop.permute.xlu0 %1296
        %1298 = vrot.lane.b32.xlu0 %v567, 72
        %v1299 = vpop.permute.xlu0 %1298
        %v1300 = vsel %vm573, %v1297, 0
        %v1302 = vsel %vm573, %v1299, 0
        %1304 = vmatprep.subr.mxu0 0.0
        %1305 = vmatpush1.xpose.msra.mxu0 0.0
        %1306 = vmatprep.subr.mxu0 0.0
        %1307 = vmatpush1.xpose.msra.mxu0 0.0
        %1308 = vmatprep.subr.mxu0 0.0
        %1309 = vmatpush1.xpose.msra.mxu0 0.0
        %1310 = vmatprep.subr.mxu0 0.0
        %1311 = vmatpush1.xpose.msra.mxu0 0.0
        %1312 = vmatprep.subr.mxu0 0.0
        %1313 = vmatpush1.xpose.msra.mxu0 0.0
        %1314 = vmatprep.subr.mxu0 0.0
        %1315 = vmatpush1.xpose.msra.mxu0 0.0
        %1316 = vmatprep.subr.mxu0 0.0
        %1317 = vmatpush1.xpose.msra.mxu0 0.0
        %1318 = vmatprep.subr.mxu0 0.0
        %1319 = vmatpush1.xpose.msra.mxu0 0.0
        %1320 = vmatprep.subr.mxu0 0.0
        %1321 = vmatpush1.xpose.msra.mxu0 0.0
        %1322 = vmatprep.subr.mxu0 0.0
        %1323 = vmatpush1.xpose.msra.mxu0 0.0
        %1324 = vmatprep.subr.mxu0 0.0
        %1325 = vmatpush1.xpose.msra.mxu0 0.0
        %1326 = vmatprep.subr.mxu0 0.0
        %1327 = vmatpush1.xpose.msra.mxu0 0.0
        %1328 = vmatprep.subr.mxu0 0.0
        %1329 = vmatpush1.xpose.msra.mxu0 0.0
        %1330 = vmatprep.subr.mxu0 0.0
        %1331 = vmatpush1.xpose.msra.mxu0 0.0
        %1332 = vmatprep.subr.mxu0 0.0
        %1333 = vmatpush1.xpose.msra.mxu0 0.0
        %1334 = vmatprep.subr.mxu0 0.0
        %1335 = vmatpush1.xpose.msra.mxu0 %v1302
        %1336 = vmatprep.subr.mxu0 0.0
        %1337 = vmatpush2.xpose.msra.mxu0 0.0
        %1338 = vmatprep.subr.mxu0 0.0
        %1339 = vmatpush2.xpose.msra.mxu0 0.0
        %1340 = vmatprep.subr.mxu0 0.0
        %1341 = vmatpush2.xpose.msra.mxu0 0.0
        %1342 = vmatprep.subr.mxu0 0.0
        %1343 = vmatpush2.xpose.msra.mxu0 0.0
        %1344 = vmatprep.subr.mxu0 0.0
        %1345 = vmatpush2.xpose.msra.mxu0 0.0
        %1346 = vmatprep.subr.mxu0 0.0
        %1347 = vmatpush2.xpose.msra.mxu0 0.0
        %1348 = vmatprep.subr.mxu0 0.0
        %1349 = vmatpush2.xpose.msra.mxu0 0.0
        %1350 = vmatprep.subr.mxu0 0.0
        %1351 = vmatpush2.xpose.msra.mxu0 0.0
        %1352 = vmatprep.subr.mxu0 0.0
        %1353 = vmatpush2.xpose.msra.mxu0 0.0
        %1354 = vmatprep.subr.mxu0 0.0
        %1355 = vmatpush2.xpose.msra.mxu0 0.0
        %1356 = vmatprep.subr.mxu0 0.0
        %1357 = vmatpush2.xpose.msra.mxu0 0.0
        %1358 = vmatprep.subr.mxu0 0.0
        %1359 = vmatpush2.xpose.msra.mxu0 0.0
        %1360 = vmatprep.subr.mxu0 0.0
        %1361 = vmatpush2.xpose.msra.mxu0 0.0
        %1362 = vmatprep.subr.mxu0 0.0
        %1363 = vmatpush2.xpose.msra.mxu0 0.0
        %1364 = vmatprep.subr.mxu0 0.0
        %1365 = vmatpush2.xpose.msra.mxu0 0.0
        %1366 = vmatprep.subr.mxu0 0.0
        %1367 = vmatpush2.xpose.msra.mxu0 0.0
        %1368 = vmatprep.mubr.f32.mxu0 0.0
        %1369 = vmatmul.mubr.f32.gmra.mxu0 %v1300
        %v1370 = vpop.f32.mrf.mxu0
        %v1371 = vadd.f32 0.0, %v1370
        %v1372 = vpop.f32.mrf.mxu0
        %1373 = vdwg.mxu0
        %v1374 = vmul.f32 %v1371, 0.35355338
        %v1375 = vadd.f32 %v1374, %v483
        %v1376 = vsel %vm573, %v1375, -inf
        %1377 = vmax.xlane.f32.xlu0 %v1376
        %v1378 = vpop.xlane.xlu0 %1377
        %v1379 = vsub.f32 %v1375, %v1378
        %v1380 = vmul.f32 %v1379, 1.442695
        %v1381 = vpow.pop %v1380
        %v1382 = vsel %vm573, %v1381, 0.0
        %1383 = vadd.xlane.f32.xlu0 %v1382
        %v1384 = vpop.xlane.xlu0 %1383
        %v1385 = vrcp.pop %v1384
        %v1386 = vmul.f32 %v1381, %v1385
        %1387 = vrot.lane.b32.xlu0 %v567, 40
        %v1388 = vpop.permute.xlu0 %1387
        %v1391 = vsel %vm573, %v1386, 0
        %1393 = vmatprep.subr.mxu0 0.0
        %1394 = vmatpush1.msra.mxu0 0.0
        %1395 = vmatprep.subr.mxu0 0.0
        %1396 = vmatpush1.msra.mxu0 0.0
        %1397 = vmatprep.subr.mxu0 0.0
        %1398 = vmatpush1.msra.mxu0 0.0
        %1399 = vmatprep.subr.mxu0 0.0
        %1400 = vmatpush1.msra.mxu0 0.0
        %1401 = vmatprep.subr.mxu0 0.0
        %1402 = vmatpush1.msra.mxu0 0.0
        %1403 = vmatprep.subr.mxu0 0.0
        %1404 = vmatpush1.msra.mxu0 0.0
        %1405 = vmatprep.subr.mxu0 0.0
        %1406 = vmatpush1.msra.mxu0 0.0
        %1407 = vmatprep.subr.mxu0 0.0
        %1408 = vmatpush1.msra.mxu0 0.0
        %1409 = vmatprep.subr.mxu0 0.0
        %1410 = vmatpush1.msra.mxu0 0.0
        %1411 = vmatprep.subr.mxu0 0.0
        %1412 = vmatpush1.msra.mxu0 0.0
        %1413 = vmatprep.subr.mxu0 0.0
        %1414 = vmatpush1.msra.mxu0 0.0
        %1415 = vmatprep.subr.mxu0 0.0
        %1416 = vmatpush1.msra.mxu0 0.0
        %1417 = vmatprep.subr.mxu0 0.0
        %1418 = vmatpush1.msra.mxu0 0.0
        %1419 = vmatprep.subr.mxu0 0.0
        %1420 = vmatpush1.msra.mxu0 0.0
        %1421 = vmatprep.subr.mxu0 0.0
        %1422 = vmatpush1.msra.mxu0 0.0
        %1423 = vmatprep.subr.mxu0 0.0
        %1424 = vmatpush1.msra.mxu0 %v1388
        %1425 = vmatprep.subr.mxu0 0.0
        %1426 = vmatpush2.msra.mxu0 0.0
        %1427 = vmatprep.subr.mxu0 0.0
        %1428 = vmatpush2.msra.mxu0 0.0
        %1429 = vmatprep.subr.mxu0 0.0
        %1430 = vmatpush2.msra.mxu0 0.0
        %1431 = vmatprep.subr.mxu0 0.0
        %1432 = vmatpush2.msra.mxu0 0.0
        %1433 = vmatprep.subr.mxu0 0.0
        %1434 = vmatpush2.msra.mxu0 0.0
        %1435 = vmatprep.subr.mxu0 0.0
        %1436 = vmatpush2.msra.mxu0 0.0
        %1437 = vmatprep.subr.mxu0 0.0
        %1438 = vmatpush2.msra.mxu0 0.0
        %1439 = vmatprep.subr.mxu0 0.0
        %1440 = vmatpush2.msra.mxu0 0.0
        %1441 = vmatprep.subr.mxu0 0.0
        %1442 = vmatpush2.msra.mxu0 0.0
        %1443 = vmatprep.subr.mxu0 0.0
        %1444 = vmatpush2.msra.mxu0 0.0
        %1445 = vmatprep.subr.mxu0 0.0
        %1446 = vmatpush2.msra.mxu0 0.0
        %1447 = vmatprep.subr.mxu0 0.0
        %1448 = vmatpush2.msra.mxu0 0.0
        %1449 = vmatprep.subr.mxu0 0.0
        %1450 = vmatpush2.msra.mxu0 0.0
        %1451 = vmatprep.subr.mxu0 0.0
        %1452 = vmatpush2.msra.mxu0 0.0
        %1453 = vmatprep.subr.mxu0 0.0
        %1454 = vmatpush2.msra.mxu0 0.0
        %1455 = vmatprep.subr.mxu0 0.0
        %1456 = vmatpush2.msra.mxu0 0.0
        %1457 = vmatprep.mubr.f32.mxu0 0.0
        %1458 = vmatmul.mubr.f32.gmra.mxu0 %v1391
        %v1459 = vpop.f32.mrf.mxu0
        %v1460 = vadd.f32 0.0, %v1459
        %v1461 = vpop.f32.mrf.mxu0
        %1462 = vdwg.mxu0
        %s1463 = scalar_lea.vmem %s4, 24
        %v1464 = vld [vmem:[%s1463] sm:$0xff]
        %v1466 = vsel %vm573, %v1460, 0
        %1468 = vmatprep.subr.mxu0 0.0
        %1469 = vmatpush1.msra.mxu0 0.0
        %1470 = vmatprep.subr.mxu0 0.0
        %1471 = vmatpush1.msra.mxu0 0.0
        %1472 = vmatprep.subr.mxu0 0.0
        %1473 = vmatpush1.msra.mxu0 0.0
        %1474 = vmatprep.subr.mxu0 0.0
        %1475 = vmatpush1.msra.mxu0 0.0
        %1476 = vmatprep.subr.mxu0 0.0
        %1477 = vmatpush1.msra.mxu0 0.0
        %1478 = vmatprep.subr.mxu0 0.0
        %1479 = vmatpush1.msra.mxu0 0.0
        %1480 = vmatprep.subr.mxu0 0.0
        %1481 = vmatpush1.msra.mxu0 0.0
        %1482 = vmatprep.subr.mxu0 0.0
        %1483 = vmatpush1.msra.mxu0 0.0
        %1484 = vmatprep.subr.mxu0 0.0
        %1485 = vmatpush1.msra.mxu0 0.0
        %1486 = vmatprep.subr.mxu0 0.0
        %1487 = vmatpush1.msra.mxu0 0.0
        %1488 = vmatprep.subr.mxu0 0.0
        %1489 = vmatpush1.msra.mxu0 0.0
        %1490 = vmatprep.subr.mxu0 0.0
        %1491 = vmatpush1.msra.mxu0 0.0
        %1492 = vmatprep.subr.mxu0 0.0
        %1493 = vmatpush1.msra.mxu0 0.0
        %1494 = vmatprep.subr.mxu0 0.0
        %1495 = vmatpush1.msra.mxu0 0.0
        %1496 = vmatprep.subr.mxu0 0.0
        %1497 = vmatpush1.msra.mxu0 0.0
        %1498 = vmatprep.subr.mxu0 0.0
        %1499 = vmatpush1.msra.mxu0 %v1464
        %1500 = vmatprep.subr.mxu0 0.0
        %1501 = vmatpush2.msra.mxu0 0.0
        %1502 = vmatprep.subr.mxu0 0.0
        %1503 = vmatpush2.msra.mxu0 0.0
        %1504 = vmatprep.subr.mxu0 0.0
        %1505 = vmatpush2.msra.mxu0 0.0
        %1506 = vmatprep.subr.mxu0 0.0
        %1507 = vmatpush2.msra.mxu0 0.0
        %1508 = vmatprep.subr.mxu0 0.0
        %1509 = vmatpush2.msra.mxu0 0.0
        %1510 = vmatprep.subr.mxu0 0.0
        %1511 = vmatpush2.msra.mxu0 0.0
        %1512 = vmatprep.subr.mxu0 0.0
        %1513 = vmatpush2.msra.mxu0 0.0
        %1514 = vmatprep.subr.mxu0 0.0
        %1515 = vmatpush2.msra.mxu0 0.0
        %1516 = vmatprep.subr.mxu0 0.0
        %1517 = vmatpush2.msra.mxu0 0.0
        %1518 = vmatprep.subr.mxu0 0.0
        %1519 = vmatpush2.msra.mxu0 0.0
        %1520 = vmatprep.subr.mxu0 0.0
        %1521 = vmatpush2.msra.mxu0 0.0
        %1522 = vmatprep.subr.mxu0 0.0
        %1523 = vmatpush2.msra.mxu0 0.0
        %1524 = vmatprep.subr.mxu0 0.0
        %1525 = vmatpush2.msra.mxu0 0.0
        %1526 = vmatprep.subr.mxu0 0.0
        %1527 = vmatpush2.msra.mxu0 0.0
        %1528 = vmatprep.subr.mxu0 0.0
        %1529 = vmatpush2.msra.mxu0 0.0
        %1530 = vmatprep.subr.mxu0 0.0
        %1531 = vmatpush2.msra.mxu0 0.0
        %1532 = vmatprep.mubr.f32.mxu0 0.0
        %1533 = vmatmul.mubr.f32.gmra.mxu0 %v1466
        %v1534 = vpop.f32.mrf.mxu0
        %v1535 = vadd.f32 0.0, %v1534
        %v1536 = vpop.f32.mrf.mxu0
        %1537 = vdwg.mxu0
        %v1538 = vadd.f32 %v1295, %v1535
        %v1539 = vld [vmem:[%s5] sm:$0x1]
        %v1541 = vlaneseq
        %v1542 = vshrl.u32 %v1541, 7
        %v1543 = vsub.s32 0, %v1542
        %v1544 = vrot.slane %v1539, %v1543
        %v1546 = vadd.f32 %v1538, %v1544
        %v1547 = vadd.f32 %v477, %v1546
        %v1548 = vld [vmem:[%s6] sm:$0x1]
        %v1549 = vld [vmem:[%s7] sm:$0x1]
        %v1550 = vsel %vm496, %v1547, 0.0
        %1551 = vadd.xlane.f32.xlu0 %v1550
        %v1552 = vpop.xlane.xlu0 %1551
        %v1553 = vrcp.pop 32.0
        %v1554 = vmul.f32 %v1552, %v1553
        %v1555 = vsub.f32 %v1547, %v1554
        %v1556 = vmul.f32 %v1555, %v1555
        %v1557 = vsel %vm496, %v1556, 0.0
        %1558 = vadd.xlane.f32.xlu0 %v1557
        %v1559 = vpop.xlane.xlu0 %1558
        %v1560 = vmul.f32 %v1559, %v1553
        %v1561 = vadd.f32 %v1560, 1e-05
        %v1562 = vrsqrt.pop %v1561
        %v1563 = vmul.f32 %v1555, %v1562
        %v1565 = vlaneseq
        %v1566 = vshrl.u32 %v1565, 7
        %v1567 = vsub.s32 0, %v1566
        %v1568 = vrot.slane %v1548, %v1567
        %v1570 = vmul.f32 %v1563, %v1568
        %v1572 = vlaneseq
        %v1573 = vshrl.u32 %v1572, 7
        %v1574 = vsub.s32 0, %v1573
        %v1575 = vrot.slane %v1549, %v1574
        %v1577 = vadd.f32 %v1570, %v1575
        %v1578 = vld [vmem:[%s8] sm:$0xff]
        %v1579 = vld [vmem:[%s8 + $0x8] sm:$0xff]
        %v1580 = vld [vmem:[%s8 + $0x10] sm:$0xff]
        %v1581 = vld [vmem:[%s8 + $0x18] sm:$0xff]
        %v1582 = vld [vmem:[%s8 + $0x20] sm:$0xff]
        %v1583 = vld [vmem:[%s8 + $0x28] sm:$0xff]
        %v1584 = vld [vmem:[%s8 + $0x30] sm:$0xff]
        %v1585 = vld [vmem:[%s8 + $0x38] sm:$0xff]
        %v1586 = vld [vmem:[%s8 + $0x40] sm:$0xff]
        %v1587 = vld [vmem:[%s8 + $0x48] sm:$0xff]
        %v1588 = vld [vmem:[%s8 + $0x50] sm:$0xff]
        %v1589 = vld [vmem:[%s8 + $0x58] sm:$0xff]
        %v1590 = vld [vmem:[%s8 + $0x60] sm:$0xff]
        %v1591 = vld [vmem:[%s8 + $0x68] sm:$0xff]
        %v1592 = vld [vmem:[%s8 + $0x70] sm:$0xff]
        %v1593 = vld [vmem:[%s8 + $0x78] sm:$0xff]
        %v1594 = vld [vmem:[%s9] sm:$0xf]
        %v1596 = vlaneseq
        %v1597 = vshrl.u32 %v1596, 7
        %v1598 = vsub.s32 0, %v1597
        %v1599 = vrot.slane %v1594, %v1598
        %v1600 = vlaneseq
        %v1601 = vshrl.u32 %v1600, 7
        %v1602 = vsub.s32 1, %v1601
        %v1603 = vrot.slane %v1594, %v1602
        %v1604 = vlaneseq
        %v1605 = vshrl.u32 %v1604, 7
        %v1606 = vsub.s32 2, %v1605
        %v1607 = vrot.slane %v1594, %v1606
        %v1608 = vlaneseq
        %v1609 = vshrl.u32 %v1608, 7
        %v1610 = vsub.s32 3, %v1609
        %v1611 = vrot.slane %v1594, %v1610
        %v1617 = vsel %vm496, %v1577, 0
        %1619 = vmatprep.subr.mxu0 0.0
        %1620 = vmatpush1.msra.mxu0 0.0
        %1621 = vmatprep.subr.mxu0 0.0
        %1622 = vmatpush1.msra.mxu0 0.0
        %1623 = vmatprep.subr.mxu0 0.0
        %1624 = vmatpush1.msra.mxu0 0.0
        %1625 = vmatprep.subr.mxu0 0.0
        %1626 = vmatpush1.msra.mxu0 0.0
        %1627 = vmatprep.subr.mxu0 0.0
        %1628 = vmatpush1.msra.mxu0 0.0
        %1629 = vmatprep.subr.mxu0 0.0
        %1630 = vmatpush1.msra.mxu0 0.0
        %1631 = vmatprep.subr.mxu0 0.0
        %1632 = vmatpush1.msra.mxu0 0.0
        %1633 = vmatprep.subr.mxu0 0.0
        %1634 = vmatpush1.msra.mxu0 0.0
        %1635 = vmatprep.subr.mxu0 0.0
        %1636 = vmatpush1.msra.mxu0 0.0
        %1637 = vmatprep.subr.mxu0 0.0
        %1638 = vmatpush1.msra.mxu0 0.0
        %1639 = vmatprep.subr.mxu0 0.0
        %1640 = vmatpush1.msra.mxu0 0.0
        %1641 = vmatprep.subr.mxu0 0.0
        %1642 = vmatpush1.msra.mxu0 0.0
        %1643 = vmatprep.subr.mxu0 %v1591
        %1644 = vmatpush1.msra.mxu0 %v1590
        %1645 = vmatprep.subr.mxu0 %v1587
        %1646 = vmatpush1.msra.mxu0 %v1586
        %1647 = vmatprep.subr.mxu0 %v1583
        %1648 = vmatpush1.msra.mxu0 %v1582
        %1649 = vmatprep.subr.mxu0 %v1579
        %1650 = vmatpush1.msra.mxu0 %v1578
        %1651 = vmatprep.subr.mxu0 0.0
        %1652 = vmatpush2.msra.mxu0 0.0
        %1653 = vmatprep.subr.mxu0 0.0
        %1654 = vmatpush2.msra.mxu0 0.0
        %1655 = vmatprep.subr.mxu0 0.0
        %1656 = vmatpush2.msra.mxu0 0.0
        %1657 = vmatprep.subr.mxu0 0.0
        %1658 = vmatpush2.msra.mxu0 0.0
        %1659 = vmatprep.subr.mxu0 0.0
        %1660 = vmatpush2.msra.mxu0 0.0
        %1661 = vmatprep.subr.mxu0 0.0
        %1662 = vmatpush2.msra.mxu0 0.0
        %1663 = vmatprep.subr.mxu0 0.0
        %1664 = vmatpush2.msra.mxu0 0.0
        %1665 = vmatprep.subr.mxu0 0.0
        %1666 = vmatpush2.msra.mxu0 0.0
        %1667 = vmatprep.subr.mxu0 0.0
        %1668 = vmatpush2.msra.mxu0 0.0
        %1669 = vmatprep.subr.mxu0 0.0
        %1670 = vmatpush2.msra.mxu0 0.0
        %1671 = vmatprep.subr.mxu0 0.0
        %1672 = vmatpush2.msra.mxu0 0.0
        %1673 = vmatprep.subr.mxu0 0.0
        %1674 = vmatpush2.msra.mxu0 0.0
        %1675 = vmatprep.subr.mxu0 0.0
        %1676 = vmatpush2.msra.mxu0 0.0
        %1677 = vmatprep.subr.mxu0 0.0
        %1678 = vmatpush2.msra.mxu0 0.0
        %1679 = vmatprep.subr.mxu0 0.0
        %1680 = vmatpush2.msra.mxu0 0.0
        %1681 = vmatprep.subr.mxu0 0.0
        %1682 = vmatpush2.msra.mxu0 0.0
        %1683 = vmatprep.mubr.f32.mxu0 0.0
        %1684 = vmatmul.mubr.f32.gmra.mxu0 %v1617
        %v1685 = vpop.f32.mrf.mxu0
        %v1686 = vadd.f32 %v1599, %v1685
        %v1687 = vpop.f32.mrf.mxu0
        %v1688 = vadd.f32 %v1603, %v1687
        %1689 = vdwg.mxu0
        %1690 = vmatprep.subr.mxu0 0.0
        %1691 = vmatpush1.msra.mxu0 0.0
        %1692 = vmatprep.subr.mxu0 0.0
        %1693 = vmatpush1.msra.mxu0 0.0
        %1694 = vmatprep.subr.mxu0 0.0
        %1695 = vmatpush1.msra.mxu0 0.0
        %1696 = vmatprep.subr.mxu0 0.0
        %1697 = vmatpush1.msra.mxu0 0.0
        %1698 = vmatprep.subr.mxu0 0.0
        %1699 = vmatpush1.msra.mxu0 0.0
        %1700 = vmatprep.subr.mxu0 0.0
        %1701 = vmatpush1.msra.mxu0 0.0
        %1702 = vmatprep.subr.mxu0 0.0
        %1703 = vmatpush1.msra.mxu0 0.0
        %1704 = vmatprep.subr.mxu0 0.0
        %1705 = vmatpush1.msra.mxu0 0.0
        %1706 = vmatprep.subr.mxu0 0.0
        %1707 = vmatpush1.msra.mxu0 0.0
        %1708 = vmatprep.subr.mxu0 0.0
        %1709 = vmatpush1.msra.mxu0 0.0
        %1710 = vmatprep.subr.mxu0 0.0
        %1711 = vmatpush1.msra.mxu0 0.0
        %1712 = vmatprep.subr.mxu0 0.0
        %1713 = vmatpush1.msra.mxu0 0.0
        %1714 = vmatprep.subr.mxu0 %v1593
        %1715 = vmatpush1.msra.mxu0 %v1592
        %1716 = vmatprep.subr.mxu0 %v1589
        %1717 = vmatpush1.msra.mxu0 %v1588
        %1718 = vmatprep.subr.mxu0 %v1585
        %1719 = vmatpush1.msra.mxu0 %v1584
        %1720 = vmatprep.subr.mxu0 %v1581
        %1721 = vmatpush1.msra.mxu0 %v1580
        %1722 = vmatprep.subr.mxu0 0.0
        %1723 = vmatpush2.msra.mxu0 0.0
        %1724 = vmatprep.subr.mxu0 0.0
        %1725 = vmatpush2.msra.mxu0 0.0
        %1726 = vmatprep.subr.mxu0 0.0
        %1727 = vmatpush2.msra.mxu0 0.0
        %1728 = vmatprep.subr.mxu0 0.0
        %1729 = vmatpush2.msra.mxu0 0.0
        %1730 = vmatprep.subr.mxu0 0.0
        %1731 = vmatpush2.msra.mxu0 0.0
        %1732 = vmatprep.subr.mxu0 0.0
        %1733 = vmatpush2.msra.mxu0 0.0
        %1734 = vmatprep.subr.mxu0 0.0
        %1735 = vmatpush2.msra.mxu0 0.0
        %1736 = vmatprep.subr.mxu0 0.0
        %1737 = vmatpush2.msra.mxu0 0.0
        %1738 = vmatprep.subr.mxu0 0.0
        %1739 = vmatpush2.msra.mxu0 0.0
        %1740 = vmatprep.subr.mxu0 0.0
        %1741 = vmatpush2.msra.mxu0 0.0
        %1742 = vmatprep.subr.mxu0 0.0
        %1743 = vmatpush2.msra.mxu0 0.0
        %1744 = vmatprep.subr.mxu0 0.0
        %1745 = vmatpush2.msra.mxu0 0.0
        %1746 = vmatprep.subr.mxu0 0.0
        %1747 = vmatpush2.msra.mxu0 0.0
        %1748 = vmatprep.subr.mxu0 0.0
        %1749 = vmatpush2.msra.mxu0 0.0
        %1750 = vmatprep.subr.mxu0 0.0
        %1751 = vmatpush2.msra.mxu0 0.0
        %1752 = vmatprep.subr.mxu0 0.0
        %1753 = vmatpush2.msra.mxu0 0.0
        %1754 = vmatprep.mubr.f32.mxu0 0.0
        %1755 = vmatmul.mubr.f32.gmra.mxu0 %v1617
        %v1756 = vpop.f32.mrf.mxu0
        %v1757 = vadd.f32 %v1607, %v1756
        %v1758 = vpop.f32.mrf.mxu0
        %v1759 = vadd.f32 %v1611, %v1758
        %1760 = vdwg.mxu0
        %v1761 = vmax.f32 %v1686, 0.0
        %v1762 = vmax.f32 %v1688, 0.0
        %v1763 = vmax.f32 %v1757, 0.0
        %v1764 = vmax.f32 %v1759, 0.0
        %v1765 = vld [vmem:[%s10] sm:$0xff]
        %v1766 = vld [vmem:[%s10 + $0x8] sm:$0xff]
        %v1767 = vld [vmem:[%s10 + $0x10] sm:$0xff]
        %v1768 = vld [vmem:[%s10 + $0x18] sm:$0xff]
        %v1769 = vld [vmem:[%s10 + $0x20] sm:$0xff]
        %v1770 = vld [vmem:[%s10 + $0x28] sm:$0xff]
        %v1771 = vld [vmem:[%s10 + $0x30] sm:$0xff]
        %v1772 = vld [vmem:[%s10 + $0x38] sm:$0xff]
        %v1773 = vld [vmem:[%s10 + $0x40] sm:$0xff]
        %v1774 = vld [vmem:[%s10 + $0x48] sm:$0xff]
        %v1775 = vld [vmem:[%s10 + $0x50] sm:$0xff]
        %v1776 = vld [vmem:[%s10 + $0x58] sm:$0xff]
        %v1777 = vld [vmem:[%s10 + $0x60] sm:$0xff]
        %v1778 = vld [vmem:[%s10 + $0x68] sm:$0xff]
        %v1779 = vld [vmem:[%s10 + $0x70] sm:$0xff]
        %v1780 = vld [vmem:[%s10 + $0x78] sm:$0xff]
        %v1781 = vld [vmem:[%s10 + $0x80] sm:$0xff]
        %v1782 = vld [vmem:[%s10 + $0x88] sm:$0xff]
        %v1783 = vld [vmem:[%s10 + $0x90] sm:$0xff]
        %v1784 = vld [vmem:[%s10 + $0x98] sm:$0xff]
        %v1785 = vld [vmem:[%s10 + $0xa0] sm:$0xff]
        %v1786 = vld [vmem:[%s10 + $0xa8] sm:$0xff]
        %v1787 = vld [vmem:[%s10 + $0xb0] sm:$0xff]
        %v1788 = vld [vmem:[%s10 + $0xb8] sm:$0xff]
        %v1789 = vld [vmem:[%s10 + $0xc0] sm:$0xff]
        %v1790 = vld [vmem:[%s10 + $0xc8] sm:$0xff]
        %v1791 = vld [vmem:[%s10 + $0xd0] sm:$0xff]
        %v1792 = vld [vmem:[%s10 + $0xd8] sm:$0xff]
        %v1793 = vld [vmem:[%s10 + $0xe0] sm:$0xff]
        %v1794 = vld [vmem:[%s10 + $0xe8] sm:$0xff]
        %v1795 = vld [vmem:[%s10 + $0xf0] sm:$0xff]
        %v1796 = vld [vmem:[%s10 + $0xf8] sm:$0xff]
        %v1797 = vld [vmem:[%s10 + $0x100] sm:$0xff]
        %v1798 = vld [vmem:[%s10 + $0x108] sm:$0xff]
        %v1799 = vld [vmem:[%s10 + $0x110] sm:$0xff]
        %v1800 = vld [vmem:[%s10 + $0x118] sm:$0xff]
        %v1801 = vld [vmem:[%s10 + $0x120] sm:$0xff]
        %v1802 = vld [vmem:[%s10 + $0x128] sm:$0xff]
        %v1803 = vld [vmem:[%s10 + $0x130] sm:$0xff]
        %v1804 = vld [vmem:[%s10 + $0x138] sm:$0xff]
        %v1805 = vld [vmem:[%s10 + $0x140] sm:$0xff]
        %v1806 = vld [vmem:[%s10 + $0x148] sm:$0xff]
        %v1807 = vld [vmem:[%s10 + $0x150] sm:$0xff]
        %v1808 = vld [vmem:[%s10 + $0x158] sm:$0xff]
        %v1809 = vld [vmem:[%s10 + $0x160] sm:$0xff]
        %v1810 = vld [vmem:[%s10 + $0x168] sm:$0xff]
        %v1811 = vld [vmem:[%s10 + $0x170] sm:$0xff]
        %v1812 = vld [vmem:[%s10 + $0x178] sm:$0xff]
        %v1813 = vld [vmem:[%s10 + $0x180] sm:$0xff]
        %v1814 = vld [vmem:[%s10 + $0x188] sm:$0xff]
        %v1815 = vld [vmem:[%s10 + $0x190] sm:$0xff]
        %v1816 = vld [vmem:[%s10 + $0x198] sm:$0xff]
        %v1817 = vld [vmem:[%s10 + $0x1a0] sm:$0xff]
        %v1818 = vld [vmem:[%s10 + $0x1a8] sm:$0xff]
        %v1819 = vld [vmem:[%s10 + $0x1b0] sm:$0xff]
        %v1820 = vld [vmem:[%s10 + $0x1b8] sm:$0xff]
        %v1821 = vld [vmem:[%s10 + $0x1c0] sm:$0xff]
        %v1822 = vld [vmem:[%s10 + $0x1c8] sm:$0xff]
        %v1823 = vld [vmem:[%s10 + $0x1d0] sm:$0xff]
        %v1824 = vld [vmem:[%s10 + $0x1d8] sm:$0xff]
        %v1825 = vld [vmem:[%s10 + $0x1e0] sm:$0xff]
        %v1826 = vld [vmem:[%s10 + $0x1e8] sm:$0xff]
        %v1827 = vld [vmem:[%s10 + $0x1f0] sm:$0xff]
        %v1828 = vld [vmem:[%s10 + $0x1f8] sm:$0xff]
        %v1829 = vld [vmem:[%s11] sm:$0x1]
        %v1831 = vlaneseq
        %v1832 = vshrl.u32 %v1831, 7
        %v1833 = vsub.s32 0, %v1832
        %v1834 = vrot.slane %v1829, %v1833
        %1836 = vmatprep.subr.mxu0 0.0
        %1837 = vmatpush1.msra.mxu0 %v1780
        %1838 = vmatprep.subr.mxu0 0.0
        %1839 = vmatpush1.msra.mxu0 %v1779
        %1840 = vmatprep.subr.mxu0 0.0
        %1841 = vmatpush1.msra.mxu0 %v1778
        %1842 = vmatprep.subr.mxu0 0.0
        %1843 = vmatpush1.msra.mxu0 %v1777
        %1844 = vmatprep.subr.mxu0 0.0
        %1845 = vmatpush1.msra.mxu0 %v1776
        %1846 = vmatprep.subr.mxu0 0.0
        %1847 = vmatpush1.msra.mxu0 %v1775
        %1848 = vmatprep.subr.mxu0 0.0
        %1849 = vmatpush1.msra.mxu0 %v1774
        %1850 = vmatprep.subr.mxu0 0.0
        %1851 = vmatpush1.msra.mxu0 %v1773
        %1852 = vmatprep.subr.mxu0 0.0
        %1853 = vmatpush1.msra.mxu0 %v1772
        %1854 = vmatprep.subr.mxu0 0.0
        %1855 = vmatpush1.msra.mxu0 %v1771
        %1856 = vmatprep.subr.mxu0 0.0
        %1857 = vmatpush1.msra.mxu0 %v1770
        %1858 = vmatprep.subr.mxu0 0.0
        %1859 = vmatpush1.msra.mxu0 %v1769
        %1860 = vmatprep.subr.mxu0 0.0
        %1861 = vmatpush1.msra.mxu0 %v1768
        %1862 = vmatprep.subr.mxu0 0.0
        %1863 = vmatpush1.msra.mxu0 %v1767
        %1864 = vmatprep.subr.mxu0 0.0
        %1865 = vmatpush1.msra.mxu0 %v1766
        %1866 = vmatprep.subr.mxu0 0.0
        %1867 = vmatpush1.msra.mxu0 %v1765
        %1868 = vmatprep.subr.mxu0 0.0
        %1869 = vmatpush2.msra.mxu0 %v1796
        %1870 = vmatprep.subr.mxu0 0.0
        %1871 = vmatpush2.msra.mxu0 %v1795
        %1872 = vmatprep.subr.mxu0 0.0
        %1873 = vmatpush2.msra.mxu0 %v1794
        %1874 = vmatprep.subr.mxu0 0.0
        %1875 = vmatpush2.msra.mxu0 %v1793
        %1876 = vmatprep.subr.mxu0 0.0
        %1877 = vmatpush2.msra.mxu0 %v1792
        %1878 = vmatprep.subr.mxu0 0.0
        %1879 = vmatpush2.msra.mxu0 %v1791
        %1880 = vmatprep.subr.mxu0 0.0
        %1881 = vmatpush2.msra.mxu0 %v1790
        %1882 = vmatprep.subr.mxu0 0.0
        %1883 = vmatpush2.msra.mxu0 %v1789
        %1884 = vmatprep.subr.mxu0 0.0
        %1885 = vmatpush2.msra.mxu0 %v1788
        %1886 = vmatprep.subr.mxu0 0.0
        %1887 = vmatpush2.msra.mxu0 %v1787
        %1888 = vmatprep.subr.mxu0 0.0
        %1889 = vmatpush2.msra.mxu0 %v1786
        %1890 = vmatprep.subr.mxu0 0.0
        %1891 = vmatpush2.msra.mxu0 %v1785
        %1892 = vmatprep.subr.mxu0 0.0
        %1893 = vmatpush2.msra.mxu0 %v1784
        %1894 = vmatprep.subr.mxu0 0.0
        %1895 = vmatpush2.msra.mxu0 %v1783
        %1896 = vmatprep.subr.mxu0 0.0
        %1897 = vmatpush2.msra.mxu0 %v1782
        %1898 = vmatprep.subr.mxu0 0.0
        %1899 = vmatpush2.msra.mxu0 %v1781
        %1900 = vmatprep.mubr.f32.mxu0 %v1762
        %1901 = vmatmul.mubr.f32.gmra.mxu0 %v1761
        %v1902 = vpop.f32.mrf.mxu0
        %v1903 = vadd.f32 %v1834, %v1902
        %v1904 = vpop.f32.mrf.mxu0
        %1905 = vdwg.mxu0
        %1906 = vmatprep.subr.mxu0 0.0
        %1907 = vmatpush1.msra.mxu0 %v1812
        %1908 = vmatprep.subr.mxu0 0.0
        %1909 = vmatpush1.msra.mxu0 %v1811
        %1910 = vmatprep.subr.mxu0 0.0
        %1911 = vmatpush1.msra.mxu0 %v1810
        %1912 = vmatprep.subr.mxu0 0.0
        %1913 = vmatpush1.msra.mxu0 %v1809
        %1914 = vmatprep.subr.mxu0 0.0
        %1915 = vmatpush1.msra.mxu0 %v1808
        %1916 = vmatprep.subr.mxu0 0.0
        %1917 = vmatpush1.msra.mxu0 %v1807
        %1918 = vmatprep.subr.mxu0 0.0
        %1919 = vmatpush1.msra.mxu0 %v1806
        %1920 = vmatprep.subr.mxu0 0.0
        %1921 = vmatpush1.msra.mxu0 %v1805
        %1922 = vmatprep.subr.mxu0 0.0
        %1923 = vmatpush1.msra.mxu0 %v1804
        %1924 = vmatprep.subr.mxu0 0.0
        %1925 = vmatpush1.msra.mxu0 %v1803
        %1926 = vmatprep.subr.mxu0 0.0
        %1927 = vmatpush1.msra.mxu0 %v1802
        %1928 = vmatprep.subr.mxu0 0.0
        %1929 = vmatpush1.msra.mxu0 %v1801
        %1930 = vmatprep.subr.mxu0 0.0
        %1931 = vmatpush1.msra.mxu0 %v1800
        %1932 = vmatprep.subr.mxu0 0.0
        %1933 = vmatpush1.msra.mxu0 %v1799
        %1934 = vmatprep.subr.mxu0 0.0
        %1935 = vmatpush1.msra.mxu0 %v1798
        %1936 = vmatprep.subr.mxu0 0.0
        %1937 = vmatpush1.msra.mxu0 %v1797
        %1938 = vmatprep.subr.mxu0 0.0
        %1939 = vmatpush2.msra.mxu0 %v1828
        %1940 = vmatprep.subr.mxu0 0.0
        %1941 = vmatpush2.msra.mxu0 %v1827
        %1942 = vmatprep.subr.mxu0 0.0
        %1943 = vmatpush2.msra.mxu0 %v1826
        %1944 = vmatprep.subr.mxu0 0.0
        %1945 = vmatpush2.msra.mxu0 %v1825
        %1946 = vmatprep.subr.mxu0 0.0
        %1947 = vmatpush2.msra.mxu0 %v1824
        %1948 = vmatprep.subr.mxu0 0.0
        %1949 = vmatpush2.msra.mxu0 %v1823
        %1950 = vmatprep.subr.mxu0 0.0
        %1951 = vmatpush2.msra.mxu0 %v1822
        %1952 = vmatprep.subr.mxu0 0.0
        %1953 = vmatpush2.msra.mxu0 %v1821
        %1954 = vmatprep.subr.mxu0 0.0
        %1955 = vmatpush2.msra.mxu0 %v1820
        %1956 = vmatprep.subr.mxu0 0.0
        %1957 = vmatpush2.msra.mxu0 %v1819
        %1958 = vmatprep.subr.mxu0 0.0
        %1959 = vmatpush2.msra.mxu0 %v1818
        %1960 = vmatprep.subr.mxu0 0.0
        %1961 = vmatpush2.msra.mxu0 %v1817
        %1962 = vmatprep.subr.mxu0 0.0
        %1963 = vmatpush2.msra.mxu0 %v1816
        %1964 = vmatprep.subr.mxu0 0.0
        %1965 = vmatpush2.msra.mxu0 %v1815
        %1966 = vmatprep.subr.mxu0 0.0
        %1967 = vmatpush2.msra.mxu0 %v1814
        %1968 = vmatprep.subr.mxu0 0.0
        %1969 = vmatpush2.msra.mxu0 %v1813
        %1970 = vmatprep.mubr.f32.mxu0 %v1764
        %1971 = vmatmul.mubr.f32.gmra.mxu0 %v1763
        %v1972 = vpop.f32.mrf.mxu0
        %v1973 = vadd.f32 %v1903, %v1972
        %v1974 = vpop.f32.mrf.mxu0
        %1975 = vdwg.mxu0
        %v1976 = vadd.f32 %v1577, %v1973
        %v1977 = vld [vmem:[%s12] sm:$0x1]
        %v1978 = vld [vmem:[%s13] sm:$0x1]
        %v1979 = vsel %vm496, %v1976, 0.0
        %1980 = vadd.xlane.f32.xlu0 %v1979
        %v1981 = vpop.xlane.xlu0 %1980
        %v1982 = vmul.f32 %v1981, %v1553
        %v1983 = vsub.f32 %v1976, %v1982
        %v1984 = vmul.f32 %v1983, %v1983
        %v1985 = vsel %vm496, %v1984, 0.0
        %1986 = vadd.xlane.f32.xlu0 %v1985
        %v1987 = vpop.xlane.xlu0 %1986
        %v1988 = vmul.f32 %v1987, %v1553
        %v1989 = vadd.f32 %v1988, 1e-05
        %v1990 = vrsqrt.pop %v1989
        %v1991 = vmul.f32 %v1983, %v1990
        %v1993 = vlaneseq
        %v1994 = vshrl.u32 %v1993, 7
        %v1995 = vsub.s32 0, %v1994
        %v1996 = vrot.slane %v1977, %v1995
        %v1998 = vmul.f32 %v1991, %v1996
        %v2000 = vlaneseq
        %v2001 = vshrl.u32 %v2000, 7
        %v2002 = vsub.s32 0, %v2001
        %v2003 = vrot.slane %v1978, %v2002
        %v2005 = vadd.f32 %v1998, %v2003
        %s2006 = scalar_lea.vmem %s2, 32
        %v2007 = vld [vmem:[%s2006] sm:$0xff]
        %v2008 = vld [vmem:[%s2006 + $0x8] sm:$0xff]
        %v2009 = vld [vmem:[%s2006 + $0x10] sm:$0xff]
        %v2010 = vld [vmem:[%s2006 + $0x18] sm:$0xff]
        %s2011 = scalar_lea.vmem %s3, 1
        %v2012 = vld [vmem:[%s2011] sm:$0x1]
        %v2014 = vlaneseq
        %v2015 = vshrl.u32 %v2014, 7
        %v2016 = vsub.s32 0, %v2015
        %v2017 = vrot.slane %v2012, %v2016
        %v2020 = vsel %vm496, %v2005, 0
        %2022 = vmatprep.subr.mxu0 0.0
        %2023 = vmatpush1.msra.mxu0 0.0
        %2024 = vmatprep.subr.mxu0 0.0
        %2025 = vmatpush1.msra.mxu0 0.0
        %2026 = vmatprep.subr.mxu0 0.0
        %2027 = vmatpush1.msra.mxu0 0.0
        %2028 = vmatprep.subr.mxu0 0.0
        %2029 = vmatpush1.msra.mxu0 0.0
        %2030 = vmatprep.subr.mxu0 0.0
        %2031 = vmatpush1.msra.mxu0 0.0
        %2032 = vmatprep.subr.mxu0 0.0
        %2033 = vmatpush1.msra.mxu0 0.0
        %2034 = vmatprep.subr.mxu0 0.0
        %2035 = vmatpush1.msra.mxu0 0.0
        %2036 = vmatprep.subr.mxu0 0.0
        %2037 = vmatpush1.msra.mxu0 0.0
        %2038 = vmatprep.subr.mxu0 0.0
        %2039 = vmatpush1.msra.mxu0 0.0
        %2040 = vmatprep.subr.mxu0 0.0
        %2041 = vmatpush1.msra.mxu0 0.0
        %2042 = vmatprep.subr.mxu0 0.0
        %2043 = vmatpush1.msra.mxu0 0.0
        %2044 = vmatprep.subr.mxu0 0.0
        %2045 = vmatpush1.msra.mxu0 0.0
        %2046 = vmatprep.subr.mxu0 0.0
        %2047 = vmatpush1.msra.mxu0 %v2010
        %2048 = vmatprep.subr.mxu0 0.0
        %2049 = vmatpush1.msra.mxu0 %v2009
        %2050 = vmatprep.subr.mxu0 0.0
        %2051 = vmatpush1.msra.mxu0 %v2008
        %2052 = vmatprep.subr.mxu0 0.0
        %2053 = vmatpush1.msra.mxu0 %v2007
        %2054 = vmatprep.subr.mxu0 0.0
        %2055 = vmatpush2.msra.mxu0 0.0
        %2056 = vmatprep.subr.mxu0 0.0
        %2057 = vmatpush2.msra.mxu0 0.0
        %2058 = vmatprep.subr.mxu0 0.0
        %2059 = vmatpush2.msra.mxu0 0.0
        %2060 = vmatprep.subr.mxu0 0.0
        %2061 = vmatpush2.msra.mxu0 0.0
        %2062 = vmatprep.subr.mxu0 0.0
        %2063 = vmatpush2.msra.mxu0 0.0
        %2064 = vmatprep.subr.mxu0 0.0
        %2065 = vmatpush2.msra.mxu0 0.0
        %2066 = vmatprep.subr.mxu0 0.0
        %2067 = vmatpush2.msra.mxu0 0.0
        %2068 = vmatprep.subr.mxu0 0.0
        %2069 = vmatpush2.msra.mxu0 0.0
        %2070 = vmatprep.subr.mxu0 0.0
        %2071 = vmatpush2.msra.mxu0 0.0
        %2072 = vmatprep.subr.mxu0 0.0
        %2073 = vmatpush2.msra.mxu0 0.0
        %2074 = vmatprep.subr.mxu0 0.0
        %2075 = vmatpush2.msra.mxu0 0.0
        %2076 = vmatprep.subr.mxu0 0.0
        %2077 = vmatpush2.msra.mxu0 0.0
        %2078 = vmatprep.subr.mxu0 0.0
        %2079 = vmatpush2.msra.mxu0 0.0
        %2080 = vmatprep.subr.mxu0 0.0
        %2081 = vmatpush2.msra.mxu0 0.0
        %2082 = vmatprep.subr.mxu0 0.0
        %2083 = vmatpush2.msra.mxu0 0.0
        %2084 = vmatprep.subr.mxu0 0.0
        %2085 = vmatpush2.msra.mxu0 0.0
        %2086 = vmatprep.mubr.f32.mxu0 0.0
        %2087 = vmatmul.mubr.f32.gmra.mxu0 %v2020
        %v2088 = vpop.f32.mrf.mxu0
        %v2089 = vadd.f32 %v2017, %v2088
        %v2090 = vpop.f32.mrf.mxu0
        %2091 = vdwg.mxu0
        %2093 = vrot.lane.b32.xlu0 %v2089, 96
        %v2094 = vpop.permute.xlu0 %2093
        %v2095 = vsel %vm573, %v2089, 0
        %v2097 = vsel %vm573, %v2094, 0
        %2099 = vmatprep.subr.mxu0 0.0
        %2100 = vmatpush1.xpose.msra.mxu0 0.0
        %2101 = vmatprep.subr.mxu0 0.0
        %2102 = vmatpush1.xpose.msra.mxu0 0.0
        %2103 = vmatprep.subr.mxu0 0.0
        %2104 = vmatpush1.xpose.msra.mxu0 0.0
        %2105 = vmatprep.subr.mxu0 0.0
        %2106 = vmatpush1.xpose.msra.mxu0 0.0
        %2107 = vmatprep.subr.mxu0 0.0
        %2108 = vmatpush1.xpose.msra.mxu0 0.0
        %2109 = vmatprep.subr.mxu0 0.0
        %2110 = vmatpush1.xpose.msra.mxu0 0.0
        %2111 = vmatprep.subr.mxu0 0.0
        %2112 = vmatpush1.xpose.msra.mxu0 0.0
        %2113 = vmatprep.subr.mxu0 0.0
        %2114 = vmatpush1.xpose.msra.mxu0 0.0
        %2115 = vmatprep.subr.mxu0 0.0
        %2116 = vmatpush1.xpose.msra.mxu0 0.0
        %2117 = vmatprep.subr.mxu0 0.0
        %2118 = vmatpush1.xpose.msra.mxu0 0.0
        %2119 = vmatprep.subr.mxu0 0.0
        %2120 = vmatpush1.xpose.msra.mxu0 0.0
        %2121 = vmatprep.subr.mxu0 0.0
        %2122 = vmatpush1.xpose.msra.mxu0 0.0
        %2123 = vmatprep.subr.mxu0 0.0
        %2124 = vmatpush1.xpose.msra.mxu0 0.0
        %2125 = vmatprep.subr.mxu0 0.0
        %2126 = vmatpush1.xpose.msra.mxu0 0.0
        %2127 = vmatprep.subr.mxu0 0.0
        %2128 = vmatpush1.xpose.msra.mxu0 0.0
        %2129 = vmatprep.subr.mxu0 0.0
        %2130 = vmatpush1.xpose.msra.mxu0 %v2097
        %2131 = vmatprep.subr.mxu0 0.0
        %2132 = vmatpush2.xpose.msra.mxu0 0.0
        %2133 = vmatprep.subr.mxu0 0.0
        %2134 = vmatpush2.xpose.msra.mxu0 0.0
        %2135 = vmatprep.subr.mxu0 0.0
        %2136 = vmatpush2.xpose.msra.mxu0 0.0
        %2137 = vmatprep.subr.mxu0 0.0
        %2138 = vmatpush2.xpose.msra.mxu0 0.0
        %2139 = vmatprep.subr.mxu0 0.0
        %2140 = vmatpush2.xpose.msra.mxu0 0.0
        %2141 = vmatprep.subr.mxu0 0.0
        %2142 = vmatpush2.xpose.msra.mxu0 0.0
        %2143 = vmatprep.subr.mxu0 0.0
        %2144 = vmatpush2.xpose.msra.mxu0 0.0
        %2145 = vmatprep.subr.mxu0 0.0
        %2146 = vmatpush2.xpose.msra.mxu0 0.0
        %2147 = vmatprep.subr.mxu0 0.0
        %2148 = vmatpush2.xpose.msra.mxu0 0.0
        %2149 = vmatprep.subr.mxu0 0.0
        %2150 = vmatpush2.xpose.msra.mxu0 0.0
        %2151 = vmatprep.subr.mxu0 0.0
        %2152 = vmatpush2.xpose.msra.mxu0 0.0
        %2153 = vmatprep.subr.mxu0 0.0
        %2154 = vmatpush2.xpose.msra.mxu0 0.0
        %2155 = vmatprep.subr.mxu0 0.0
        %2156 = vmatpush2.xpose.msra.mxu0 0.0
        %2157 = vmatprep.subr.mxu0 0.0
        %2158 = vmatpush2.xpose.msra.mxu0 0.0
        %2159 = vmatprep.subr.mxu0 0.0
        %2160 = vmatpush2.xpose.msra.mxu0 0.0
        %2161 = vmatprep.subr.mxu0 0.0
        %2162 = vmatpush2.xpose.msra.mxu0 0.0
        %2163 = vmatprep.mubr.f32.mxu0 0.0
        %2164 = vmatmul.mubr.f32.gmra.mxu0 %v2095
        %v2165 = vpop.f32.mrf.mxu0
        %v2166 = vadd.f32 0.0, %v2165
        %v2167 = vpop.f32.mrf.mxu0
        %2168 = vdwg.mxu0
        %v2169 = vmul.f32 %v2166, 0.35355338
        %v2170 = vadd.f32 %v2169, %v483
        %v2171 = vsel %vm573, %v2170, -inf
        %2172 = vmax.xlane.f32.xlu0 %v2171
        %v2173 = vpop.xlane.xlu0 %2172
        %v2174 = vsub.f32 %v2170, %v2173
        %v2175 = vmul.f32 %v2174, 1.442695
        %v2176 = vpow.pop %v2175
        %v2177 = vsel %vm573, %v2176, 0.0
        %2178 = vadd.xlane.f32.xlu0 %v2177
        %v2179 = vpop.xlane.xlu0 %2178
        %v2180 = vrcp.pop %v2179
        %v2181 = vmul.f32 %v2176, %v2180
        %2182 = vrot.lane.b32.xlu0 %v2089, 64
        %v2183 = vpop.permute.xlu0 %2182
        %v2186 = vsel %vm573, %v2181, 0
        %2188 = vmatprep.subr.mxu0 0.0
        %2189 = vmatpush1.msra.mxu0 0.0
        %2190 = vmatprep.subr.mxu0 0.0
        %2191 = vmatpush1.msra.mxu0 0.0
        %2192 = vmatprep.subr.mxu0 0.0
        %2193 = vmatpush1.msra.mxu0 0.0
        %2194 = vmatprep.subr.mxu0 0.0
        %2195 = vmatpush1.msra.mxu0 0.0
        %2196 = vmatprep.subr.mxu0 0.0
        %2197 = vmatpush1.msra.mxu0 0.0
        %2198 = vmatprep.subr.mxu0 0.0
        %2199 = vmatpush1.msra.mxu0 0.0
        %2200 = vmatprep.subr.mxu0 0.0
        %2201 = vmatpush1.msra.mxu0 0.0
        %2202 = vmatprep.subr.mxu0 0.0
        %2203 = vmatpush1.msra.mxu0 0.0
        %2204 = vmatprep.subr.mxu0 0.0
        %2205 = vmatpush1.msra.mxu0 0.0
        %2206 = vmatprep.subr.mxu0 0.0
        %2207 = vmatpush1.msra.mxu0 0.0
        %2208 = vmatprep.subr.mxu0 0.0
        %2209 = vmatpush1.msra.mxu0 0.0
        %2210 = vmatprep.subr.mxu0 0.0
        %2211 = vmatpush1.msra.mxu0 0.0
        %2212 = vmatprep.subr.mxu0 0.0
        %2213 = vmatpush1.msra.mxu0 0.0
        %2214 = vmatprep.subr.mxu0 0.0
        %2215 = vmatpush1.msra.mxu0 0.0
        %2216 = vmatprep.subr.mxu0 0.0
        %2217 = vmatpush1.msra.mxu0 0.0
        %2218 = vmatprep.subr.mxu0 0.0
        %2219 = vmatpush1.msra.mxu0 %v2183
        %2220 = vmatprep.subr.mxu0 0.0
        %2221 = vmatpush2.msra.mxu0 0.0
        %2222 = vmatprep.subr.mxu0 0.0
        %2223 = vmatpush2.msra.mxu0 0.0
        %2224 = vmatprep.subr.mxu0 0.0
        %2225 = vmatpush2.msra.mxu0 0.0
        %2226 = vmatprep.subr.mxu0 0.0
        %2227 = vmatpush2.msra.mxu0 0.0
        %2228 = vmatprep.subr.mxu0 0.0
        %2229 = vmatpush2.msra.mxu0 0.0
        %2230 = vmatprep.subr.mxu0 0.0
        %2231 = vmatpush2.msra.mxu0 0.0
        %2232 = vmatprep.subr.mxu0 0.0
        %2233 = vmatpush2.msra.mxu0 0.0
        %2234 = vmatprep.subr.mxu0 0.0
        %2235 = vmatpush2.msra.mxu0 0.0
        %2236 = vmatprep.subr.mxu0 0.0
        %2237 = vmatpush2.msra.mxu0 0.0
        %2238 = vmatprep.subr.mxu0 0.0
        %2239 = vmatpush2.msra.mxu0 0.0
        %2240 = vmatprep.subr.mxu0 0.0
        %2241 = vmatpush2.msra.mxu0 0.0
        %2242 = vmatprep.subr.mxu0 0.0
        %2243 = vmatpush2.msra.mxu0 0.0
        %2244 = vmatprep.subr.mxu0 0.0
        %2245 = vmatpush2.msra.mxu0 0.0
        %2246 = vmatprep.subr.mxu0 0.0
        %2247 = vmatpush2.msra.mxu0 0.0
        %2248 = vmatprep.subr.mxu0 0.0
        %2249 = vmatpush2.msra.mxu0 0.0
        %2250 = vmatprep.subr.mxu0 0.0
        %2251 = vmatpush2.msra.mxu0 0.0
        %2252 = vmatprep.mubr.f32.mxu0 0.0
        %2253 = vmatmul.mubr.f32.gmra.mxu0 %v2186
        %v2254 = vpop.f32.mrf.mxu0
        %v2255 = vadd.f32 0.0, %v2254
        %v2256 = vpop.f32.mrf.mxu0
        %2257 = vdwg.mxu0
        %s2258 = scalar_lea.vmem %s4, 32
        %v2259 = vld [vmem:[%s2258] sm:$0xff]
        %2260 = vrot.lane.b32.xlu0 %v2089, 120
        %v2261 = vpop.permute.xlu0 %2260
        %2262 = vrot.lane.b32.xlu0 %v2089, 88
        %v2263 = vpop.permute.xlu0 %2262
        %v2264 = vsel %vm573, %v2261, 0
        %v2266 = vsel %vm573, %v2263, 0
        %2268 = vmatprep.subr.mxu0 0.0
        %2269 = vmatpush1.xpose.msra.mxu0 0.0
        %2270 = vmatprep.subr.mxu0 0.0
        %2271 = vmatpush1.xpose.msra.mxu0 0.0
        %2272 = vmatprep.subr.mxu0 0.0
        %2273 = vmatpush1.xpose.msra.mxu0 0.0
        %2274 = vmatprep.subr.mxu0 0.0
        %2275 = vmatpush1.xpose.msra.mxu0 0.0
        %2276 = vmatprep.subr.mxu0 0.0
        %2277 = vmatpush1.xpose.msra.mxu0 0.0
        %2278 = vmatprep.subr.mxu0 0.0
        %2279 = vmatpush1.xpose.msra.mxu0 0.0
        %2280 = vmatprep.subr.mxu0 0.0
        %2281 = vmatpush1.xpose.msra.mxu0 0.0
        %2282 = vmatprep.subr.mxu0 0.0
        %2283 = vmatpush1.xpose.msra.mxu0 0.0
        %2284 = vmatprep.subr.mxu0 0.0
        %2285 = vmatpush1.xpose.msra.mxu0 0.0
        %2286 = vmatprep.subr.mxu0 0.0
        %2287 = vmatpush1.xpose.msra.mxu0 0.0
        %2288 = vmatprep.subr.mxu0 0.0
        %2289 = vmatpush1.xpose.msra.mxu0 0.0
        %2290 = vmatprep.subr.mxu0 0.0
        %2291 = vmatpush1.xpose.msra.mxu0 0.0
        %2292 = vmatprep.subr.mxu0 0.0
        %2293 = vmatpush1.xpose.msra.mxu0 0.0
        %2294 = vmatprep.subr.mxu0 0.0
        %2295 = vmatpush1.xpose.msra.mxu0 0.0
        %2296 = vmatprep.subr.mxu0 0.0
        %2297 = vmatpush1.xpose.msra.mxu0 0.0
        %2298 = vmatprep.subr.mxu0 0.0
        %2299 = vmatpush1.xpose.msra.mxu0 %v2266
        %2300 = vmatprep.subr.mxu0 0.0
        %2301 = vmatpush2.xpose.msra.mxu0 0.0
        %2302 = vmatprep.subr.mxu0 0.0
        %2303 = vmatpush2.xpose.msra.mxu0 0.0
        %2304 = vmatprep.subr.mxu0 0.0
        %2305 = vmatpush2.xpose.msra.mxu0 0.0
        %2306 = vmatprep.subr.mxu0 0.0
        %2307 = vmatpush2.xpose.msra.mxu0 0.0
        %2308 = vmatprep.subr.mxu0 0.0
        %2309 = vmatpush2.xpose.msra.mxu0 0.0
        %2310 = vmatprep.subr.mxu0 0.0
        %2311 = vmatpush2.xpose.msra.mxu0 0.0
        %2312 = vmatprep.subr.mxu0 0.0
        %2313 = vmatpush2.xpose.msra.mxu0 0.0
        %2314 = vmatprep.subr.mxu0 0.0
        %2315 = vmatpush2.xpose.msra.mxu0 0.0
        %2316 = vmatprep.subr.mxu0 0.0
        %2317 = vmatpush2.xpose.msra.mxu0 0.0
        %2318 = vmatprep.subr.mxu0 0.0
        %2319 = vmatpush2.xpose.msra.mxu0 0.0
        %2320 = vmatprep.subr.mxu0 0.0
        %2321 = vmatpush2.xpose.msra.mxu0 0.0
        %2322 = vmatprep.subr.mxu0 0.0
        %2323 = vmatpush2.xpose.msra.mxu0 0.0
        %2324 = vmatprep.subr.mxu0 0.0
        %2325 = vmatpush2.xpose.msra.mxu0 0.0
        %2326 = vmatprep.subr.mxu0 0.0
        %2327 = vmatpush2.xpose.msra.mxu0 0.0
        %2328 = vmatprep.subr.mxu0 0.0
        %2329 = vmatpush2.xpose.msra.mxu0 0.0
        %2330 = vmatprep.subr.mxu0 0.0
        %2331 = vmatpush2.xpose.msra.mxu0 0.0
        %2332 = vmatprep.mubr.f32.mxu0 0.0
        %2333 = vmatmul.mubr.f32.gmra.mxu0 %v2264
        %v2334 = vpop.f32.mrf.mxu0
        %v2335 = vadd.f32 0.0, %v2334
        %v2336 = vpop.f32.mrf.mxu0
        %2337 = vdwg.mxu0
        %v2338 = vmul.f32 %v2335, 0.35355338
        %v2339 = vadd.f32 %v2338, %v483
        %v2340 = vsel %vm573, %v2339, -inf
        %2341 = vmax.xlane.f32.xlu0 %v2340
        %v2342 = vpop.xlane.xlu0 %2341
        %v2343 = vsub.f32 %v2339, %v2342
        %v2344 = vmul.f32 %v2343, 1.442695
        %v2345 = vpow.pop %v2344
        %v2346 = vsel %vm573, %v2345, 0.0
        %2347 = vadd.xlane.f32.xlu0 %v2346
        %v2348 = vpop.xlane.xlu0 %2347
        %v2349 = vrcp.pop %v2348
        %v2350 = vmul.f32 %v2345, %v2349
        %2351 = vrot.lane.b32.xlu0 %v2089, 56
        %v2352 = vpop.permute.xlu0 %2351
        %v2355 = vsel %vm573, %v2350, 0
        %2357 = vmatprep.subr.mxu0 0.0
        %2358 = vmatpush1.msra.mxu0 0.0
        %2359 = vmatprep.subr.mxu0 0.0
        %2360 = vmatpush1.msra.mxu0 0.0
        %2361 = vmatprep.subr.mxu0 0.0
        %2362 = vmatpush1.msra.mxu0 0.0
        %2363 = vmatprep.subr.mxu0 0.0
        %2364 = vmatpush1.msra.mxu0 0.0
        %2365 = vmatprep.subr.mxu0 0.0
        %2366 = vmatpush1.msra.mxu0 0.0
        %2367 = vmatprep.subr.mxu0 0.0
        %2368 = vmatpush1.msra.mxu0 0.0
        %2369 = vmatprep.subr.mxu0 0.0
        %2370 = vmatpush1.msra.mxu0 0.0
        %2371 = vmatprep.subr.mxu0 0.0
        %2372 = vmatpush1.msra.mxu0 0.0
        %2373 = vmatprep.subr.mxu0 0.0
        %2374 = vmatpush1.msra.mxu0 0.0
        %2375 = vmatprep.subr.mxu0 0.0
        %2376 = vmatpush1.msra.mxu0 0.0
        %2377 = vmatprep.subr.mxu0 0.0
        %2378 = vmatpush1.msra.mxu0 0.0
        %2379 = vmatprep.subr.mxu0 0.0
        %2380 = vmatpush1.msra.mxu0 0.0
        %2381 = vmatprep.subr.mxu0 0.0
        %2382 = vmatpush1.msra.mxu0 0.0
        %2383 = vmatprep.subr.mxu0 0.0
        %2384 = vmatpush1.msra.mxu0 0.0
        %2385 = vmatprep.subr.mxu0 0.0
        %2386 = vmatpush1.msra.mxu0 0.0
        %2387 = vmatprep.subr.mxu0 0.0
        %2388 = vmatpush1.msra.mxu0 %v2352
        %2389 = vmatprep.subr.mxu0 0.0
        %2390 = vmatpush2.msra.mxu0 0.0
        %2391 = vmatprep.subr.mxu0 0.0
        %2392 = vmatpush2.msra.mxu0 0.0
        %2393 = vmatprep.subr.mxu0 0.0
        %2394 = vmatpush2.msra.mxu0 0.0
        %2395 = vmatprep.subr.mxu0 0.0
        %2396 = vmatpush2.msra.mxu0 0.0
        %2397 = vmatprep.subr.mxu0 0.0
        %2398 = vmatpush2.msra.mxu0 0.0
        %2399 = vmatprep.subr.mxu0 0.0
        %2400 = vmatpush2.msra.mxu0 0.0
        %2401 = vmatprep.subr.mxu0 0.0
        %2402 = vmatpush2.msra.mxu0 0.0
        %2403 = vmatprep.subr.mxu0 0.0
        %2404 = vmatpush2.msra.mxu0 0.0
        %2405 = vmatprep.subr.mxu0 0.0
        %2406 = vmatpush2.msra.mxu0 0.0
        %2407 = vmatprep.subr.mxu0 0.0
        %2408 = vmatpush2.msra.mxu0 0.0
        %2409 = vmatprep.subr.mxu0 0.0
        %2410 = vmatpush2.msra.mxu0 0.0
        %2411 = vmatprep.subr.mxu0 0.0
        %2412 = vmatpush2.msra.mxu0 0.0
        %2413 = vmatprep.subr.mxu0 0.0
        %2414 = vmatpush2.msra.mxu0 0.0
        %2415 = vmatprep.subr.mxu0 0.0
        %2416 = vmatpush2.msra.mxu0 0.0
        %2417 = vmatprep.subr.mxu0 0.0
        %2418 = vmatpush2.msra.mxu0 0.0
        %2419 = vmatprep.subr.mxu0 0.0
        %2420 = vmatpush2.msra.mxu0 0.0
        %2421 = vmatprep.mubr.f32.mxu0 0.0
        %2422 = vmatmul.mubr.f32.gmra.mxu0 %v2355
        %v2423 = vpop.f32.mrf.mxu0
        %v2424 = vadd.f32 0.0, %v2423
        %v2425 = vpop.f32.mrf.mxu0
        %2426 = vdwg.mxu0
        %s2427 = scalar_lea.vmem %s4, 40
        %v2428 = vld [vmem:[%s2427] sm:$0xff]
        %v2430 = vsel %vm573, %v2424, 0
        %2432 = vmatprep.subr.mxu0 0.0
        %2433 = vmatpush1.msra.mxu0 0.0
        %2434 = vmatprep.subr.mxu0 0.0
        %2435 = vmatpush1.msra.mxu0 0.0
        %2436 = vmatprep.subr.mxu0 0.0
        %2437 = vmatpush1.msra.mxu0 0.0
        %2438 = vmatprep.subr.mxu0 0.0
        %2439 = vmatpush1.msra.mxu0 0.0
        %2440 = vmatprep.subr.mxu0 0.0
        %2441 = vmatpush1.msra.mxu0 0.0
        %2442 = vmatprep.subr.mxu0 0.0
        %2443 = vmatpush1.msra.mxu0 0.0
        %2444 = vmatprep.subr.mxu0 0.0
        %2445 = vmatpush1.msra.mxu0 0.0
        %2446 = vmatprep.subr.mxu0 0.0
        %2447 = vmatpush1.msra.mxu0 0.0
        %2448 = vmatprep.subr.mxu0 0.0
        %2449 = vmatpush1.msra.mxu0 0.0
        %2450 = vmatprep.subr.mxu0 0.0
        %2451 = vmatpush1.msra.mxu0 0.0
        %2452 = vmatprep.subr.mxu0 0.0
        %2453 = vmatpush1.msra.mxu0 0.0
        %2454 = vmatprep.subr.mxu0 0.0
        %2455 = vmatpush1.msra.mxu0 0.0
        %2456 = vmatprep.subr.mxu0 0.0
        %2457 = vmatpush1.msra.mxu0 0.0
        %2458 = vmatprep.subr.mxu0 0.0
        %2459 = vmatpush1.msra.mxu0 0.0
        %2460 = vmatprep.subr.mxu0 0.0
        %2461 = vmatpush1.msra.mxu0 0.0
        %2462 = vmatprep.subr.mxu0 0.0
        %2463 = vmatpush1.msra.mxu0 %v2428
        %2464 = vmatprep.subr.mxu0 0.0
        %2465 = vmatpush2.msra.mxu0 0.0
        %2466 = vmatprep.subr.mxu0 0.0
        %2467 = vmatpush2.msra.mxu0 0.0
        %2468 = vmatprep.subr.mxu0 0.0
        %2469 = vmatpush2.msra.mxu0 0.0
        %2470 = vmatprep.subr.mxu0 0.0
        %2471 = vmatpush2.msra.mxu0 0.0
        %2472 = vmatprep.subr.mxu0 0.0
        %2473 = vmatpush2.msra.mxu0 0.0
        %2474 = vmatprep.subr.mxu0 0.0
        %2475 = vmatpush2.msra.mxu0 0.0
        %2476 = vmatprep.subr.mxu0 0.0
        %2477 = vmatpush2.msra.mxu0 0.0
        %2478 = vmatprep.subr.mxu0 0.0
        %2479 = vmatpush2.msra.mxu0 0.0
        %2480 = vmatprep.subr.mxu0 0.0
        %2481 = vmatpush2.msra.mxu0 0.0
        %2482 = vmatprep.subr.mxu0 0.0
        %2483 = vmatpush2.msra.mxu0 0.0
        %2484 = vmatprep.subr.mxu0 0.0
        %2485 = vmatpush2.msra.mxu0 0.0
        %2486 = vmatprep.subr.mxu0 0.0
        %2487 = vmatpush2.msra.mxu0 0.0
        %2488 = vmatprep.subr.mxu0 0.0
        %2489 = vmatpush2.msra.mxu0 0.0
        %2490 = vmatprep.subr.mxu0 0.0
        %2491 = vmatpush2.msra.mxu0 0.0
        %2492 = vmatprep.subr.mxu0 0.0
        %2493 = vmatpush2.msra.mxu0 0.0
        %2494 = vmatprep.subr.mxu0 0.0
        %2495 = vmatpush2.msra.mxu0 0.0
        %2496 = vmatprep.mubr.f32.mxu0 0.0
        %2497 = vmatmul.mubr.f32.gmra.mxu0 %v2430
        %v2498 = vpop.f32.mrf.mxu0
        %v2499 = vadd.f32 0.0, %v2498
        %v2500 = vpop.f32.mrf.mxu0
        %2501 = vdwg.mxu0
        %v2503 = vsel %vm573, %v2255, 0
        %2505 = vmatprep.subr.mxu0 0.0
        %2506 = vmatpush1.msra.mxu0 0.0
        %2507 = vmatprep.subr.mxu0 0.0
        %2508 = vmatpush1.msra.mxu0 0.0
        %2509 = vmatprep.subr.mxu0 0.0
        %2510 = vmatpush1.msra.mxu0 0.0
        %2511 = vmatprep.subr.mxu0 0.0
        %2512 = vmatpush1.msra.mxu0 0.0
        %2513 = vmatprep.subr.mxu0 0.0
        %2514 = vmatpush1.msra.mxu0 0.0
        %2515 = vmatprep.subr.mxu0 0.0
        %2516 = vmatpush1.msra.mxu0 0.0
        %2517 = vmatprep.subr.mxu0 0.0
        %2518 = vmatpush1.msra.mxu0 0.0
        %2519 = vmatprep.subr.mxu0 0.0
        %2520 = vmatpush1.msra.mxu0 0.0
        %2521 = vmatprep.subr.mxu0 0.0
        %2522 = vmatpush1.msra.mxu0 0.0
        %2523 = vmatprep.subr.mxu0 0.0
        %2524 = vmatpush1.msra.mxu0 0.0
        %2525 = vmatprep.subr.mxu0 0.0
        %2526 = vmatpush1.msra.mxu0 0.0
        %2527 = vmatprep.subr.mxu0 0.0
        %2528 = vmatpush1.msra.mxu0 0.0
        %2529 = vmatprep.subr.mxu0 0.0
        %2530 = vmatpush1.msra.mxu0 0.0
        %2531 = vmatprep.subr.mxu0 0.0
        %2532 = vmatpush1.msra.mxu0 0.0
        %2533 = vmatprep.subr.mxu0 0.0
        %2534 = vmatpush1.msra.mxu0 0.0
        %2535 = vmatprep.subr.mxu0 0.0
        %2536 = vmatpush1.msra.mxu0 %v2259
        %2537 = vmatprep.subr.mxu0 0.0
        %2538 = vmatpush2.msra.mxu0 0.0
        %2539 = vmatprep.subr.mxu0 0.0
        %2540 = vmatpush2.msra.mxu0 0.0
        %2541 = vmatprep.subr.mxu0 0.0
        %2542 = vmatpush2.msra.mxu0 0.0
        %2543 = vmatprep.subr.mxu0 0.0
        %2544 = vmatpush2.msra.mxu0 0.0
        %2545 = vmatprep.subr.mxu0 0.0
        %2546 = vmatpush2.msra.mxu0 0.0
        %2547 = vmatprep.subr.mxu0 0.0
        %2548 = vmatpush2.msra.mxu0 0.0
        %2549 = vmatprep.subr.mxu0 0.0
        %2550 = vmatpush2.msra.mxu0 0.0
        %2551 = vmatprep.subr.mxu0 0.0
        %2552 = vmatpush2.msra.mxu0 0.0
        %2553 = vmatprep.subr.mxu0 0.0
        %2554 = vmatpush2.msra.mxu0 0.0
        %2555 = vmatprep.subr.mxu0 0.0
        %2556 = vmatpush2.msra.mxu0 0.0
        %2557 = vmatprep.subr.mxu0 0.0
        %2558 = vmatpush2.msra.mxu0 0.0
        %2559 = vmatprep.subr.mxu0 0.0
        %2560 = vmatpush2.msra.mxu0 0.0
        %2561 = vmatprep.subr.mxu0 0.0
        %2562 = vmatpush2.msra.mxu0 0.0
        %2563 = vmatprep.subr.mxu0 0.0
        %2564 = vmatpush2.msra.mxu0 0.0
        %2565 = vmatprep.subr.mxu0 0.0
        %2566 = vmatpush2.msra.mxu0 0.0
        %2567 = vmatprep.subr.mxu0 0.0
        %2568 = vmatpush2.msra.mxu0 0.0
        %2569 = vmatprep.mubr.f32.mxu0 0.0
        %2570 = vmatmul.mubr.f32.gmra.mxu0 %v2503
        %v2571 = vpop.f32.mrf.mxu0
        %v2572 = vadd.f32 %v2499, %v2571
        %v2573 = vpop.f32.mrf.mxu0
        %2574 = vdwg.mxu0
        %2575 = vrot.lane.b32.xlu0 %v2089, 112
        %v2576 = vpop.permute.xlu0 %2575
        %2577 = vrot.lane.b32.xlu0 %v2089, 80
        %v2578 = vpop.permute.xlu0 %2577
        %v2579 = vsel %vm573, %v2576, 0
        %v2581 = vsel %vm573, %v2578, 0
        %2583 = vmatprep.subr.mxu0 0.0
        %2584 = vmatpush1.xpose.msra.mxu0 0.0
        %2585 = vmatprep.subr.mxu0 0.0
        %2586 = vmatpush1.xpose.msra.mxu0 0.0
        %2587 = vmatprep.subr.mxu0 0.0
        %2588 = vmatpush1.xpose.msra.mxu0 0.0
        %2589 = vmatprep.subr.mxu0 0.0
        %2590 = vmatpush1.xpose.msra.mxu0 0.0
        %2591 = vmatprep.subr.mxu0 0.0
        %2592 = vmatpush1.xpose.msra.mxu0 0.0
        %2593 = vmatprep.subr.mxu0 0.0
        %2594 = vmatpush1.xpose.msra.mxu0 0.0
        %2595 = vmatprep.subr.mxu0 0.0
        %2596 = vmatpush1.xpose.msra.mxu0 0.0
        %2597 = vmatprep.subr.mxu0 0.0
        %2598 = vmatpush1.xpose.msra.mxu0 0.0
        %2599 = vmatprep.subr.mxu0 0.0
        %2600 = vmatpush1.xpose.msra.mxu0 0.0
        %2601 = vmatprep.subr.mxu0 0.0
        %2602 = vmatpush1.xpose.msra.mxu0 0.0
        %2603 = vmatprep.subr.mxu0 0.0
        %2604 = vmatpush1.xpose.msra.mxu0 0.0
        %2605 = vmatprep.subr.mxu0 0.0
        %2606 = vmatpush1.xpose.msra.mxu0 0.0
        %2607 = vmatprep.subr.mxu0 0.0
        %2608 = vmatpush1.xpose.msra.mxu0 0.0
        %2609 = vmatprep.subr.mxu0 0.0
        %2610 = vmatpush1.xpose.msra.mxu0 0.0
        %2611 = vmatprep.subr.mxu0 0.0
        %2612 = vmatpush1.xpose.msra.mxu0 0.0
        %2613 = vmatprep.subr.mxu0 0.0
        %2614 = vmatpush1.xpose.msra.mxu0 %v2581
        %2615 = vmatprep.subr.mxu0 0.0
        %2616 = vmatpush2.xpose.msra.mxu0 0.0
        %2617 = vmatprep.subr.mxu0 0.0
        %2618 = vmatpush2.xpose.msra.mxu0 0.0
        %2619 = vmatprep.subr.mxu0 0.0
        %2620 = vmatpush2.xpose.msra.mxu0 0.0
        %2621 = vmatprep.subr.mxu0 0.0
        %2622 = vmatpush2.xpose.msra.mxu0 0.0
        %2623 = vmatprep.subr.mxu0 0.0
        %2624 = vmatpush2.xpose.msra.mxu0 0.0
        %2625 = vmatprep.subr.mxu0 0.0
        %2626 = vmatpush2.xpose.msra.mxu0 0.0
        %2627 = vmatprep.subr.mxu0 0.0
        %2628 = vmatpush2.xpose.msra.mxu0 0.0
        %2629 = vmatprep.subr.mxu0 0.0
        %2630 = vmatpush2.xpose.msra.mxu0 0.0
        %2631 = vmatprep.subr.mxu0 0.0
        %2632 = vmatpush2.xpose.msra.mxu0 0.0
        %2633 = vmatprep.subr.mxu0 0.0
        %2634 = vmatpush2.xpose.msra.mxu0 0.0
        %2635 = vmatprep.subr.mxu0 0.0
        %2636 = vmatpush2.xpose.msra.mxu0 0.0
        %2637 = vmatprep.subr.mxu0 0.0
        %2638 = vmatpush2.xpose.msra.mxu0 0.0
        %2639 = vmatprep.subr.mxu0 0.0
        %2640 = vmatpush2.xpose.msra.mxu0 0.0
        %2641 = vmatprep.subr.mxu0 0.0
        %2642 = vmatpush2.xpose.msra.mxu0 0.0
        %2643 = vmatprep.subr.mxu0 0.0
        %2644 = vmatpush2.xpose.msra.mxu0 0.0
        %2645 = vmatprep.subr.mxu0 0.0
        %2646 = vmatpush2.xpose.msra.mxu0 0.0
        %2647 = vmatprep.mubr.f32.mxu0 0.0
        %2648 = vmatmul.mubr.f32.gmra.mxu0 %v2579
        %v2649 = vpop.f32.mrf.mxu0
        %v2650 = vadd.f32 0.0, %v2649
        %v2651 = vpop.f32.mrf.mxu0
        %2652 = vdwg.mxu0
        %v2653 = vmul.f32 %v2650, 0.35355338
        %v2654 = vadd.f32 %v2653, %v483
        %v2655 = vsel %vm573, %v2654, -inf
        %2656 = vmax.xlane.f32.xlu0 %v2655
        %v2657 = vpop.xlane.xlu0 %2656
        %v2658 = vsub.f32 %v2654, %v2657
        %v2659 = vmul.f32 %v2658, 1.442695
        %v2660 = vpow.pop %v2659
        %v2661 = vsel %vm573, %v2660, 0.0
        %2662 = vadd.xlane.f32.xlu0 %v2661
        %v2663 = vpop.xlane.xlu0 %2662
        %v2664 = vrcp.pop %v2663
        %v2665 = vmul.f32 %v2660, %v2664
        %2666 = vrot.lane.b32.xlu0 %v2089, 48
        %v2667 = vpop.permute.xlu0 %2666
        %v2670 = vsel %vm573, %v2665, 0
        %2672 = vmatprep.subr.mxu0 0.0
        %2673 = vmatpush1.msra.mxu0 0.0
        %2674 = vmatprep.subr.mxu0 0.0
        %2675 = vmatpush1.msra.mxu0 0.0
        %2676 = vmatprep.subr.mxu0 0.0
        %2677 = vmatpush1.msra.mxu0 0.0
        %2678 = vmatprep.subr.mxu0 0.0
        %2679 = vmatpush1.msra.mxu0 0.0
        %2680 = vmatprep.subr.mxu0 0.0
        %2681 = vmatpush1.msra.mxu0 0.0
        %2682 = vmatprep.subr.mxu0 0.0
        %2683 = vmatpush1.msra.mxu0 0.0
        %2684 = vmatprep.subr.mxu0 0.0
        %2685 = vmatpush1.msra.mxu0 0.0
        %2686 = vmatprep.subr.mxu0 0.0
        %2687 = vmatpush1.msra.mxu0 0.0
        %2688 = vmatprep.subr.mxu0 0.0
        %2689 = vmatpush1.msra.mxu0 0.0
        %2690 = vmatprep.subr.mxu0 0.0
        %2691 = vmatpush1.msra.mxu0 0.0
        %2692 = vmatprep.subr.mxu0 0.0
        %2693 = vmatpush1.msra.mxu0 0.0
        %2694 = vmatprep.subr.mxu0 0.0
        %2695 = vmatpush1.msra.mxu0 0.0
        %2696 = vmatprep.subr.mxu0 0.0
        %2697 = vmatpush1.msra.mxu0 0.0
        %2698 = vmatprep.subr.mxu0 0.0
        %2699 = vmatpush1.msra.mxu0 0.0
        %2700 = vmatprep.subr.mxu0 0.0
        %2701 = vmatpush1.msra.mxu0 0.0
        %2702 = vmatprep.subr.mxu0 0.0
        %2703 = vmatpush1.msra.mxu0 %v2667
        %2704 = vmatprep.subr.mxu0 0.0
        %2705 = vmatpush2.msra.mxu0 0.0
        %2706 = vmatprep.subr.mxu0 0.0
        %2707 = vmatpush2.msra.mxu0 0.0
        %2708 = vmatprep.subr.mxu0 0.0
        %2709 = vmatpush2.msra.mxu0 0.0
        %2710 = vmatprep.subr.mxu0 0.0
        %2711 = vmatpush2.msra.mxu0 0.0
        %2712 = vmatprep.subr.mxu0 0.0
        %2713 = vmatpush2.msra.mxu0 0.0
        %2714 = vmatprep.subr.mxu0 0.0
        %2715 = vmatpush2.msra.mxu0 0.0
        %2716 = vmatprep.subr.mxu0 0.0
        %2717 = vmatpush2.msra.mxu0 0.0
        %2718 = vmatprep.subr.mxu0 0.0
        %2719 = vmatpush2.msra.mxu0 0.0
        %2720 = vmatprep.subr.mxu0 0.0
        %2721 = vmatpush2.msra.mxu0 0.0
        %2722 = vmatprep.subr.mxu0 0.0
        %2723 = vmatpush2.msra.mxu0 0.0
        %2724 = vmatprep.subr.mxu0 0.0
        %2725 = vmatpush2.msra.mxu0 0.0
        %2726 = vmatprep.subr.mxu0 0.0
        %2727 = vmatpush2.msra.mxu0 0.0
        %2728 = vmatprep.subr.mxu0 0.0
        %2729 = vmatpush2.msra.mxu0 0.0
        %2730 = vmatprep.subr.mxu0 0.0
        %2731 = vmatpush2.msra.mxu0 0.0
        %2732 = vmatprep.subr.mxu0 0.0
        %2733 = vmatpush2.msra.mxu0 0.0
        %2734 = vmatprep.subr.mxu0 0.0
        %2735 = vmatpush2.msra.mxu0 0.0
        %2736 = vmatprep.mubr.f32.mxu0 0.0
        %2737 = vmatmul.mubr.f32.gmra.mxu0 %v2670
        %v2738 = vpop.f32.mrf.mxu0
        %v2739 = vadd.f32 0.0, %v2738
        %v2740 = vpop.f32.mrf.mxu0
        %2741 = vdwg.mxu0
        %s2742 = scalar_lea.vmem %s4, 48
        %v2743 = vld [vmem:[%s2742] sm:$0xff]
        %v2745 = vsel %vm573, %v2739, 0
        %2747 = vmatprep.subr.mxu0 0.0
        %2748 = vmatpush1.msra.mxu0 0.0
        %2749 = vmatprep.subr.mxu0 0.0
        %2750 = vmatpush1.msra.mxu0 0.0
        %2751 = vmatprep.subr.mxu0 0.0
        %2752 = vmatpush1.msra.mxu0 0.0
        %2753 = vmatprep.subr.mxu0 0.0
        %2754 = vmatpush1.msra.mxu0 0.0
        %2755 = vmatprep.subr.mxu0 0.0
        %2756 = vmatpush1.msra.mxu0 0.0
        %2757 = vmatprep.subr.mxu0 0.0
        %2758 = vmatpush1.msra.mxu0 0.0
        %2759 = vmatprep.subr.mxu0 0.0
        %2760 = vmatpush1.msra.mxu0 0.0
        %2761 = vmatprep.subr.mxu0 0.0
        %2762 = vmatpush1.msra.mxu0 0.0
        %2763 = vmatprep.subr.mxu0 0.0
        %2764 = vmatpush1.msra.mxu0 0.0
        %2765 = vmatprep.subr.mxu0 0.0
        %2766 = vmatpush1.msra.mxu0 0.0
        %2767 = vmatprep.subr.mxu0 0.0
        %2768 = vmatpush1.msra.mxu0 0.0
        %2769 = vmatprep.subr.mxu0 0.0
        %2770 = vmatpush1.msra.mxu0 0.0
        %2771 = vmatprep.subr.mxu0 0.0
        %2772 = vmatpush1.msra.mxu0 0.0
        %2773 = vmatprep.subr.mxu0 0.0
        %2774 = vmatpush1.msra.mxu0 0.0
        %2775 = vmatprep.subr.mxu0 0.0
        %2776 = vmatpush1.msra.mxu0 0.0
        %2777 = vmatprep.subr.mxu0 0.0
        %2778 = vmatpush1.msra.mxu0 %v2743
        %2779 = vmatprep.subr.mxu0 0.0
        %2780 = vmatpush2.msra.mxu0 0.0
        %2781 = vmatprep.subr.mxu0 0.0
        %2782 = vmatpush2.msra.mxu0 0.0
        %2783 = vmatprep.subr.mxu0 0.0
        %2784 = vmatpush2.msra.mxu0 0.0
        %2785 = vmatprep.subr.mxu0 0.0
        %2786 = vmatpush2.msra.mxu0 0.0
        %2787 = vmatprep.subr.mxu0 0.0
        %2788 = vmatpush2.msra.mxu0 0.0
        %2789 = vmatprep.subr.mxu0 0.0
        %2790 = vmatpush2.msra.mxu0 0.0
        %2791 = vmatprep.subr.mxu0 0.0
        %2792 = vmatpush2.msra.mxu0 0.0
        %2793 = vmatprep.subr.mxu0 0.0
        %2794 = vmatpush2.msra.mxu0 0.0
        %2795 = vmatprep.subr.mxu0 0.0
        %2796 = vmatpush2.msra.mxu0 0.0
        %2797 = vmatprep.subr.mxu0 0.0
        %2798 = vmatpush2.msra.mxu0 0.0
        %2799 = vmatprep.subr.mxu0 0.0
        %2800 = vmatpush2.msra.mxu0 0.0
        %2801 = vmatprep.subr.mxu0 0.0
        %2802 = vmatpush2.msra.mxu0 0.0
        %2803 = vmatprep.subr.mxu0 0.0
        %2804 = vmatpush2.msra.mxu0 0.0
        %2805 = vmatprep.subr.mxu0 0.0
        %2806 = vmatpush2.msra.mxu0 0.0
        %2807 = vmatprep.subr.mxu0 0.0
        %2808 = vmatpush2.msra.mxu0 0.0
        %2809 = vmatprep.subr.mxu0 0.0
        %2810 = vmatpush2.msra.mxu0 0.0
        %2811 = vmatprep.mubr.f32.mxu0 0.0
        %2812 = vmatmul.mubr.f32.gmra.mxu0 %v2745
        %v2813 = vpop.f32.mrf.mxu0
        %v2814 = vadd.f32 0.0, %v2813
        %v2815 = vpop.f32.mrf.mxu0
        %2816 = vdwg.mxu0
        %v2817 = vadd.f32 %v2572, %v2814
        %2818 = vrot.lane.b32.xlu0 %v2089, 104
        %v2819 = vpop.permute.xlu0 %2818
        %2820 = vrot.lane.b32.xlu0 %v2089, 72
        %v2821 = vpop.permute.xlu0 %2820
        %v2822 = vsel %vm573, %v2819, 0
        %v2824 = vsel %vm573, %v2821, 0
        %2826 = vmatprep.subr.mxu0 0.0
        %2827 = vmatpush1.xpose.msra.mxu0 0.0
        %2828 = vmatprep.subr.mxu0 0.0
        %2829 = vmatpush1.xpose.msra.mxu0 0.0
        %2830 = vmatprep.subr.mxu0 0.0
        %2831 = vmatpush1.xpose.msra.mxu0 0.0
        %2832 = vmatprep.subr.mxu0 0.0
        %2833 = vmatpush1.xpose.msra.mxu0 0.0
        %2834 = vmatprep.subr.mxu0 0.0
        %2835 = vmatpush1.xpose.msra.mxu0 0.0
        %2836 = vmatprep.subr.mxu0 0.0
        %2837 = vmatpush1.xpose.msra.mxu0 0.0
        %2838 = vmatprep.subr.mxu0 0.0
        %2839 = vmatpush1.xpose.msra.mxu0 0.0
        %2840 = vmatprep.subr.mxu0 0.0
        %2841 = vmatpush1.xpose.msra.mxu0 0.0
        %2842 = vmatprep.subr.mxu0 0.0
        %2843 = vmatpush1.xpose.msra.mxu0 0.0
        %2844 = vmatprep.subr.mxu0 0.0
        %2845 = vmatpush1.xpose.msra.mxu0 0.0
        %2846 = vmatprep.subr.mxu0 0.0
        %2847 = vmatpush1.xpose.msra.mxu0 0.0
        %2848 = vmatprep.subr.mxu0 0.0
        %2849 = vmatpush1.xpose.msra.mxu0 0.0
        %2850 = vmatprep.subr.mxu0 0.0
        %2851 = vmatpush1.xpose.msra.mxu0 0.0
        %2852 = vmatprep.subr.mxu0 0.0
        %2853 = vmatpush1.xpose.msra.mxu0 0.0
        %2854 = vmatprep.subr.mxu0 0.0
        %2855 = vmatpush1.xpose.msra.mxu0 0.0
        %2856 = vmatprep.subr.mxu0 0.0
        %2857 = vmatpush1.xpose.msra.mxu0 %v2824
        %2858 = vmatprep.subr.mxu0 0.0
        %2859 = vmatpush2.xpose.msra.mxu0 0.0
        %2860 = vmatprep.subr.mxu0 0.0
        %2861 = vmatpush2.xpose.msra.mxu0 0.0
        %2862 = vmatprep.subr.mxu0 0.0
        %2863 = vmatpush2.xpose.msra.mxu0 0.0
        %2864 = vmatprep.subr.mxu0 0.0
        %2865 = vmatpush2.xpose.msra.mxu0 0.0
        %2866 = vmatprep.subr.mxu0 0.0
        %2867 = vmatpush2.xpose.msra.mxu0 0.0
        %2868 = vmatprep.subr.mxu0 0.0
        %2869 = vmatpush2.xpose.msra.mxu0 0.0
        %2870 = vmatprep.subr.mxu0 0.0
        %2871 = vmatpush2.xpose.msra.mxu0 0.0
        %2872 = vmatprep.subr.mxu0 0.0
        %2873 = vmatpush2.xpose.msra.mxu0 0.0
        %2874 = vmatprep.subr.mxu0 0.0
        %2875 = vmatpush2.xpose.msra.mxu0 0.0
        %2876 = vmatprep.subr.mxu0 0.0
        %2877 = vmatpush2.xpose.msra.mxu0 0.0
        %2878 = vmatprep.subr.mxu0 0.0
        %2879 = vmatpush2.xpose.msra.mxu0 0.0
        %2880 = vmatprep.subr.mxu0 0.0
        %2881 = vmatpush2.xpose.msra.mxu0 0.0
        %2882 = vmatprep.subr.mxu0 0.0
        %2883 = vmatpush2.xpose.msra.mxu0 0.0
        %2884 = vmatprep.subr.mxu0 0.0
        %2885 = vmatpush2.xpose.msra.mxu0 0.0
        %2886 = vmatprep.subr.mxu0 0.0
        %2887 = vmatpush2.xpose.msra.mxu0 0.0
        %2888 = vmatprep.subr.mxu0 0.0
        %2889 = vmatpush2.xpose.msra.mxu0 0.0
        %2890 = vmatprep.mubr.f32.mxu0 0.0
        %2891 = vmatmul.mubr.f32.gmra.mxu0 %v2822
        %v2892 = vpop.f32.mrf.mxu0
        %v2893 = vadd.f32 0.0, %v2892
        %v2894 = vpop.f32.mrf.mxu0
        %2895 = vdwg.mxu0
        %v2896 = vmul.f32 %v2893, 0.35355338
        %v2897 = vadd.f32 %v2896, %v483
        %v2898 = vsel %vm573, %v2897, -inf
        %2899 = vmax.xlane.f32.xlu0 %v2898
        %v2900 = vpop.xlane.xlu0 %2899
        %v2901 = vsub.f32 %v2897, %v2900
        %v2902 = vmul.f32 %v2901, 1.442695
        %v2903 = vpow.pop %v2902
        %v2904 = vsel %vm573, %v2903, 0.0
        %2905 = vadd.xlane.f32.xlu0 %v2904
        %v2906 = vpop.xlane.xlu0 %2905
        %v2907 = vrcp.pop %v2906
        %v2908 = vmul.f32 %v2903, %v2907
        %2909 = vrot.lane.b32.xlu0 %v2089, 40
        %v2910 = vpop.permute.xlu0 %2909
        %v2913 = vsel %vm573, %v2908, 0
        %2915 = vmatprep.subr.mxu0 0.0
        %2916 = vmatpush1.msra.mxu0 0.0
        %2917 = vmatprep.subr.mxu0 0.0
        %2918 = vmatpush1.msra.mxu0 0.0
        %2919 = vmatprep.subr.mxu0 0.0
        %2920 = vmatpush1.msra.mxu0 0.0
        %2921 = vmatprep.subr.mxu0 0.0
        %2922 = vmatpush1.msra.mxu0 0.0
        %2923 = vmatprep.subr.mxu0 0.0
        %2924 = vmatpush1.msra.mxu0 0.0
        %2925 = vmatprep.subr.mxu0 0.0
        %2926 = vmatpush1.msra.mxu0 0.0
        %2927 = vmatprep.subr.mxu0 0.0
        %2928 = vmatpush1.msra.mxu0 0.0
        %2929 = vmatprep.subr.mxu0 0.0
        %2930 = vmatpush1.msra.mxu0 0.0
        %2931 = vmatprep.subr.mxu0 0.0
        %2932 = vmatpush1.msra.mxu0 0.0
        %2933 = vmatprep.subr.mxu0 0.0
        %2934 = vmatpush1.msra.mxu0 0.0
        %2935 = vmatprep.subr.mxu0 0.0
        %2936 = vmatpush1.msra.mxu0 0.0
        %2937 = vmatprep.subr.mxu0 0.0
        %2938 = vmatpush1.msra.mxu0 0.0
        %2939 = vmatprep.subr.mxu0 0.0
        %2940 = vmatpush1.msra.mxu0 0.0
        %2941 = vmatprep.subr.mxu0 0.0
        %2942 = vmatpush1.msra.mxu0 0.0
        %2943 = vmatprep.subr.mxu0 0.0
        %2944 = vmatpush1.msra.mxu0 0.0
        %2945 = vmatprep.subr.mxu0 0.0
        %2946 = vmatpush1.msra.mxu0 %v2910
        %2947 = vmatprep.subr.mxu0 0.0
        %2948 = vmatpush2.msra.mxu0 0.0
        %2949 = vmatprep.subr.mxu0 0.0
        %2950 = vmatpush2.msra.mxu0 0.0
        %2951 = vmatprep.subr.mxu0 0.0
        %2952 = vmatpush2.msra.mxu0 0.0
        %2953 = vmatprep.subr.mxu0 0.0
        %2954 = vmatpush2.msra.mxu0 0.0
        %2955 = vmatprep.subr.mxu0 0.0
        %2956 = vmatpush2.msra.mxu0 0.0
        %2957 = vmatprep.subr.mxu0 0.0
        %2958 = vmatpush2.msra.mxu0 0.0
        %2959 = vmatprep.subr.mxu0 0.0
        %2960 = vmatpush2.msra.mxu0 0.0
        %2961 = vmatprep.subr.mxu0 0.0
        %2962 = vmatpush2.msra.mxu0 0.0
        %2963 = vmatprep.subr.mxu0 0.0
        %2964 = vmatpush2.msra.mxu0 0.0
        %2965 = vmatprep.subr.mxu0 0.0
        %2966 = vmatpush2.msra.mxu0 0.0
        %2967 = vmatprep.subr.mxu0 0.0
        %2968 = vmatpush2.msra.mxu0 0.0
        %2969 = vmatprep.subr.mxu0 0.0
        %2970 = vmatpush2.msra.mxu0 0.0
        %2971 = vmatprep.subr.mxu0 0.0
        %2972 = vmatpush2.msra.mxu0 0.0
        %2973 = vmatprep.subr.mxu0 0.0
        %2974 = vmatpush2.msra.mxu0 0.0
        %2975 = vmatprep.subr.mxu0 0.0
        %2976 = vmatpush2.msra.mxu0 0.0
        %2977 = vmatprep.subr.mxu0 0.0
        %2978 = vmatpush2.msra.mxu0 0.0
        %2979 = vmatprep.mubr.f32.mxu0 0.0
        %2980 = vmatmul.mubr.f32.gmra.mxu0 %v2913
        %v2981 = vpop.f32.mrf.mxu0
        %v2982 = vadd.f32 0.0, %v2981
        %v2983 = vpop.f32.mrf.mxu0
        %2984 = vdwg.mxu0
        %s2985 = scalar_lea.vmem %s4, 56
        %v2986 = vld [vmem:[%s2985] sm:$0xff]
        %v2988 = vsel %vm573, %v2982, 0
        %2990 = vmatprep.subr.mxu0 0.0
        %2991 = vmatpush1.msra.mxu0 0.0
        %2992 = vmatprep.subr.mxu0 0.0
        %2993 = vmatpush1.msra.mxu0 0.0
        %2994 = vmatprep.subr.mxu0 0.0
        %2995 = vmatpush1.msra.mxu0 0.0
        %2996 = vmatprep.subr.mxu0 0.0
        %2997 = vmatpush1.msra.mxu0 0.0
        %2998 = vmatprep.subr.mxu0 0.0
        %2999 = vmatpush1.msra.mxu0 0.0
        %3000 = vmatprep.subr.mxu0 0.0
        %3001 = vmatpush1.msra.mxu0 0.0
        %3002 = vmatprep.subr.mxu0 0.0
        %3003 = vmatpush1.msra.mxu0 0.0
        %3004 = vmatprep.subr.mxu0 0.0
        %3005 = vmatpush1.msra.mxu0 0.0
        %3006 = vmatprep.subr.mxu0 0.0
        %3007 = vmatpush1.msra.mxu0 0.0
        %3008 = vmatprep.subr.mxu0 0.0
        %3009 = vmatpush1.msra.mxu0 0.0
        %3010 = vmatprep.subr.mxu0 0.0
        %3011 = vmatpush1.msra.mxu0 0.0
        %3012 = vmatprep.subr.mxu0 0.0
        %3013 = vmatpush1.msra.mxu0 0.0
        %3014 = vmatprep.subr.mxu0 0.0
        %3015 = vmatpush1.msra.mxu0 0.0
        %3016 = vmatprep.subr.mxu0 0.0
        %3017 = vmatpush1.msra.mxu0 0.0
        %3018 = vmatprep.subr.mxu0 0.0
        %3019 = vmatpush1.msra.mxu0 0.0
        %3020 = vmatprep.subr.mxu0 0.0
        %3021 = vmatpush1.msra.mxu0 %v2986
        %3022 = vmatprep.subr.mxu0 0.0
        %3023 = vmatpush2.msra.mxu0 0.0
        %3024 = vmatprep.subr.mxu0 0.0
        %3025 = vmatpush2.msra.mxu0 0.0
        %3026 = vmatprep.subr.mxu0 0.0
        %3027 = vmatpush2.msra.mxu0 0.0
        %3028 = vmatprep.subr.mxu0 0.0
        %3029 = vmatpush2.msra.mxu0 0.0
        %3030 = vmatprep.subr.mxu0 0.0
        %3031 = vmatpush2.msra.mxu0 0.0
        %3032 = vmatprep.subr.mxu0 0.0
        %3033 = vmatpush2.msra.mxu0 0.0
        %3034 = vmatprep.subr.mxu0 0.0
        %3035 = vmatpush2.msra.mxu0 0.0
        %3036 = vmatprep.subr.mxu0 0.0
        %3037 = vmatpush2.msra.mxu0 0.0
        %3038 = vmatprep.subr.mxu0 0.0
        %3039 = vmatpush2.msra.mxu0 0.0
        %3040 = vmatprep.subr.mxu0 0.0
        %3041 = vmatpush2.msra.mxu0 0.0
        %3042 = vmatprep.subr.mxu0 0.0
        %3043 = vmatpush2.msra.mxu0 0.0
        %3044 = vmatprep.subr.mxu0 0.0
        %3045 = vmatpush2.msra.mxu0 0.0
        %3046 = vmatprep.subr.mxu0 0.0
        %3047 = vmatpush2.msra.mxu0 0.0
        %3048 = vmatprep.subr.mxu0 0.0
        %3049 = vmatpush2.msra.mxu0 0.0
        %3050 = vmatprep.subr.mxu0 0.0
        %3051 = vmatpush2.msra.mxu0 0.0
        %3052 = vmatprep.subr.mxu0 0.0
        %3053 = vmatpush2.msra.mxu0 0.0
        %3054 = vmatprep.mubr.f32.mxu0 0.0
        %3055 = vmatmul.mubr.f32.gmra.mxu0 %v2988
        %v3056 = vpop.f32.mrf.mxu0
        %v3057 = vadd.f32 0.0, %v3056
        %v3058 = vpop.f32.mrf.mxu0
        %3059 = vdwg.mxu0
        %v3060 = vadd.f32 %v2817, %v3057
        %s3061 = scalar_lea.vmem %s5, 1
        %v3062 = vld [vmem:[%s3061] sm:$0x1]
        %v3064 = vlaneseq
        %v3065 = vshrl.u32 %v3064, 7
        %v3066 = vsub.s32 0, %v3065
        %v3067 = vrot.slane %v3062, %v3066
        %v3069 = vadd.f32 %v3060, %v3067
        %v3070 = vadd.f32 %v2005, %v3069
        %s3071 = scalar_lea.vmem %s6, 1
        %v3072 = vld [vmem:[%s3071] sm:$0x1]
        %s3073 = scalar_lea.vmem %s7, 1
        %v3074 = vld [vmem:[%s3073] sm:$0x1]
        %v3075 = vsel %vm496, %v3070, 0.0
        %3076 = vadd.xlane.f32.xlu0 %v3075
        %v3077 = vpop.xlane.xlu0 %3076
        %v3078 = vmul.f32 %v3077, %v1553
        %v3079 = vsub.f32 %v3070, %v3078
        %v3080 = vmul.f32 %v3079, %v3079
        %v3081 = vsel %vm496, %v3080, 0.0
        %3082 = vadd.xlane.f32.xlu0 %v3081
        %v3083 = vpop.xlane.xlu0 %3082
        %v3084 = vmul.f32 %v3083, %v1553
        %v3085 = vadd.f32 %v3084, 1e-05
        %v3086 = vrsqrt.pop %v3085
        %v3087 = vmul.f32 %v3079, %v3086
        %v3089 = vlaneseq
        %v3090 = vshrl.u32 %v3089, 7
        %v3091 = vsub.s32 0, %v3090
        %v3092 = vrot.slane %v3072, %v3091
        %v3094 = vmul.f32 %v3087, %v3092
        %v3096 = vlaneseq
        %v3097 = vshrl.u32 %v3096, 7
        %v3098 = vsub.s32 0, %v3097
        %v3099 = vrot.slane %v3074, %v3098
        %v3101 = vadd.f32 %v3094, %v3099
        %s3102 = scalar_lea.vmem %s8, 128
        %v3103 = vld [vmem:[%s3102] sm:$0xff]
        %v3104 = vld [vmem:[%s3102 + $0x8] sm:$0xff]
        %v3105 = vld [vmem:[%s3102 + $0x10] sm:$0xff]
        %v3106 = vld [vmem:[%s3102 + $0x18] sm:$0xff]
        %v3107 = vld [vmem:[%s3102 + $0x20] sm:$0xff]
        %v3108 = vld [vmem:[%s3102 + $0x28] sm:$0xff]
        %v3109 = vld [vmem:[%s3102 + $0x30] sm:$0xff]
        %v3110 = vld [vmem:[%s3102 + $0x38] sm:$0xff]
        %v3111 = vld [vmem:[%s3102 + $0x40] sm:$0xff]
        %v3112 = vld [vmem:[%s3102 + $0x48] sm:$0xff]
        %v3113 = vld [vmem:[%s3102 + $0x50] sm:$0xff]
        %v3114 = vld [vmem:[%s3102 + $0x58] sm:$0xff]
        %v3115 = vld [vmem:[%s3102 + $0x60] sm:$0xff]
        %v3116 = vld [vmem:[%s3102 + $0x68] sm:$0xff]
        %v3117 = vld [vmem:[%s3102 + $0x70] sm:$0xff]
        %v3118 = vld [vmem:[%s3102 + $0x78] sm:$0xff]
        %s3119 = scalar_lea.vmem %s9, 4
        %v3120 = vld [vmem:[%s3119] sm:$0xf]
        %v3122 = vlaneseq
        %v3123 = vshrl.u32 %v3122, 7
        %v3124 = vsub.s32 0, %v3123
        %v3125 = vrot.slane %v3120, %v3124
        %v3126 = vlaneseq
        %v3127 = vshrl.u32 %v3126, 7
        %v3128 = vsub.s32 1, %v3127
        %v3129 = vrot.slane %v3120, %v3128
        %v3130 = vlaneseq
        %v3131 = vshrl.u32 %v3130, 7
        %v3132 = vsub.s32 2, %v3131
        %v3133 = vrot.slane %v3120, %v3132
        %v3134 = vlaneseq
        %v3135 = vshrl.u32 %v3134, 7
        %v3136 = vsub.s32 3, %v3135
        %v3137 = vrot.slane %v3120, %v3136
        %v3143 = vsel %vm496, %v3101, 0
        %3145 = vmatprep.subr.mxu0 0.0
        %3146 = vmatpush1.msra.mxu0 0.0
        %3147 = vmatprep.subr.mxu0 0.0
        %3148 = vmatpush1.msra.mxu0 0.0
        %3149 = vmatprep.subr.mxu0 0.0
        %3150 = vmatpush1.msra.mxu0 0.0
        %3151 = vmatprep.subr.mxu0 0.0
        %3152 = vmatpush1.msra.mxu0 0.0
        %3153 = vmatprep.subr.mxu0 0.0
        %3154 = vmatpush1.msra.mxu0 0.0
        %3155 = vmatprep.subr.mxu0 0.0
        %3156 = vmatpush1.msra.mxu0 0.0
        %3157 = vmatprep.subr.mxu0 0.0
        %3158 = vmatpush1.msra.mxu0 0.0
        %3159 = vmatprep.subr.mxu0 0.0
        %3160 = vmatpush1.msra.mxu0 0.0
        %3161 = vmatprep.subr.mxu0 0.0
        %3162 = vmatpush1.msra.mxu0 0.0
        %3163 = vmatprep.subr.mxu0 0.0
        %3164 = vmatpush1.msra.mxu0 0.0
        %3165 = vmatprep.subr.mxu0 0.0
        %3166 = vmatpush1.msra.mxu0 0.0
        %3167 = vmatprep.subr.mxu0 0.0
        %3168 = vmatpush1.msra.mxu0 0.0
        %3169 = vmatprep.subr.mxu0 %v3116
        %3170 = vmatpush1.msra.mxu0 %v3115
        %3171 = vmatprep.subr.mxu0 %v3112
        %3172 = vmatpush1.msra.mxu0 %v3111
        %3173 = vmatprep.subr.mxu0 %v3108
        %3174 = vmatpush1.msra.mxu0 %v3107
        %3175 = vmatprep.subr.mxu0 %v3104
        %3176 = vmatpush1.msra.mxu0 %v3103
        %3177 = vmatprep.subr.mxu0 0.0
        %3178 = vmatpush2.msra.mxu0 0.0
        %3179 = vmatprep.subr.mxu0 0.0
        %3180 = vmatpush2.msra.mxu0 0.0
        %3181 = vmatprep.subr.mxu0 0.0
        %3182 = vmatpush2.msra.mxu0 0.0
        %3183 = vmatprep.subr.mxu0 0.0
        %3184 = vmatpush2.msra.mxu0 0.0
        %3185 = vmatprep.subr.mxu0 0.0
        %3186 = vmatpush2.msra.mxu0 0.0
        %3187 = vmatprep.subr.mxu0 0.0
        %3188 = vmatpush2.msra.mxu0 0.0
        %3189 = vmatprep.subr.mxu0 0.0
        %3190 = vmatpush2.msra.mxu0 0.0
        %3191 = vmatprep.subr.mxu0 0.0
        %3192 = vmatpush2.msra.mxu0 0.0
        %3193 = vmatprep.subr.mxu0 0.0
        %3194 = vmatpush2.msra.mxu0 0.0
        %3195 = vmatprep.subr.mxu0 0.0
        %3196 = vmatpush2.msra.mxu0 0.0
        %3197 = vmatprep.subr.mxu0 0.0
        %3198 = vmatpush2.msra.mxu0 0.0
        %3199 = vmatprep.subr.mxu0 0.0
        %3200 = vmatpush2.msra.mxu0 0.0
        %3201 = vmatprep.subr.mxu0 0.0
        %3202 = vmatpush2.msra.mxu0 0.0
        %3203 = vmatprep.subr.mxu0 0.0
        %3204 = vmatpush2.msra.mxu0 0.0
        %3205 = vmatprep.subr.mxu0 0.0
        %3206 = vmatpush2.msra.mxu0 0.0
        %3207 = vmatprep.subr.mxu0 0.0
        %3208 = vmatpush2.msra.mxu0 0.0
        %3209 = vmatprep.mubr.f32.mxu0 0.0
        %3210 = vmatmul.mubr.f32.gmra.mxu0 %v3143
        %v3211 = vpop.f32.mrf.mxu0
        %v3212 = vadd.f32 %v3125, %v3211
        %v3213 = vpop.f32.mrf.mxu0
        %v3214 = vadd.f32 %v3129, %v3213
        %3215 = vdwg.mxu0
        %3216 = vmatprep.subr.mxu0 0.0
        %3217 = vmatpush1.msra.mxu0 0.0
        %3218 = vmatprep.subr.mxu0 0.0
        %3219 = vmatpush1.msra.mxu0 0.0
        %3220 = vmatprep.subr.mxu0 0.0
        %3221 = vmatpush1.msra.mxu0 0.0
        %3222 = vmatprep.subr.mxu0 0.0
        %3223 = vmatpush1.msra.mxu0 0.0
        %3224 = vmatprep.subr.mxu0 0.0
        %3225 = vmatpush1.msra.mxu0 0.0
        %3226 = vmatprep.subr.mxu0 0.0
        %3227 = vmatpush1.msra.mxu0 0.0
        %3228 = vmatprep.subr.mxu0 0.0
        %3229 = vmatpush1.msra.mxu0 0.0
        %3230 = vmatprep.subr.mxu0 0.0
        %3231 = vmatpush1.msra.mxu0 0.0
        %3232 = vmatprep.subr.mxu0 0.0
        %3233 = vmatpush1.msra.mxu0 0.0
        %3234 = vmatprep.subr.mxu0 0.0
        %3235 = vmatpush1.msra.mxu0 0.0
        %3236 = vmatprep.subr.mxu0 0.0
        %3237 = vmatpush1.msra.mxu0 0.0
        %3238 = vmatprep.subr.mxu0 0.0
        %3239 = vmatpush1.msra.mxu0 0.0
        %3240 = vmatprep.subr.mxu0 %v3118
        %3241 = vmatpush1.msra.mxu0 %v3117
        %3242 = vmatprep.subr.mxu0 %v3114
        %3243 = vmatpush1.msra.mxu0 %v3113
        %3244 = vmatprep.subr.mxu0 %v3110
        %3245 = vmatpush1.msra.mxu0 %v3109
        %3246 = vmatprep.subr.mxu0 %v3106
        %3247 = vmatpush1.msra.mxu0 %v3105
        %3248 = vmatprep.subr.mxu0 0.0
        %3249 = vmatpush2.msra.mxu0 0.0
        %3250 = vmatprep.subr.mxu0 0.0
        %3251 = vmatpush2.msra.mxu0 0.0
        %3252 = vmatprep.subr.mxu0 0.0
        %3253 = vmatpush2.msra.mxu0 0.0
        %3254 = vmatprep.subr.mxu0 0.0
        %3255 = vmatpush2.msra.mxu0 0.0
        %3256 = vmatprep.subr.mxu0 0.0
        %3257 = vmatpush2.msra.mxu0 0.0
        %3258 = vmatprep.subr.mxu0 0.0
        %3259 = vmatpush2.msra.mxu0 0.0
        %3260 = vmatprep.subr.mxu0 0.0
        %3261 = vmatpush2.msra.mxu0 0.0
        %3262 = vmatprep.subr.mxu0 0.0
        %3263 = vmatpush2.msra.mxu0 0.0
        %3264 = vmatprep.subr.mxu0 0.0
        %3265 = vmatpush2.msra.mxu0 0.0
        %3266 = vmatprep.subr.mxu0 0.0
        %3267 = vmatpush2.msra.mxu0 0.0
        %3268 = vmatprep.subr.mxu0 0.0
        %3269 = vmatpush2.msra.mxu0 0.0
        %3270 = vmatprep.subr.mxu0 0.0
        %3271 = vmatpush2.msra.mxu0 0.0
        %3272 = vmatprep.subr.mxu0 0.0
        %3273 = vmatpush2.msra.mxu0 0.0
        %3274 = vmatprep.subr.mxu0 0.0
        %3275 = vmatpush2.msra.mxu0 0.0
        %3276 = vmatprep.subr.mxu0 0.0
        %3277 = vmatpush2.msra.mxu0 0.0
        %3278 = vmatprep.subr.mxu0 0.0
        %3279 = vmatpush2.msra.mxu0 0.0
        %3280 = vmatprep.mubr.f32.mxu0 0.0
        %3281 = vmatmul.mubr.f32.gmra.mxu0 %v3143
        %v3282 = vpop.f32.mrf.mxu0
        %v3283 = vadd.f32 %v3133, %v3282
        %v3284 = vpop.f32.mrf.mxu0
        %v3285 = vadd.f32 %v3137, %v3284
        %3286 = vdwg.mxu0
        %v3287 = vmax.f32 %v3212, 0.0
        %v3288 = vmax.f32 %v3214, 0.0
        %v3289 = vmax.f32 %v3283, 0.0
        %v3290 = vmax.f32 %v3285, 0.0
        %s3291 = scalar_lea.vmem %s10, 512
        %v3292 = vld [vmem:[%s3291] sm:$0xff]
        %v3293 = vld [vmem:[%s3291 + $0x8] sm:$0xff]
        %v3294 = vld [vmem:[%s3291 + $0x10] sm:$0xff]
        %v3295 = vld [vmem:[%s3291 + $0x18] sm:$0xff]
        %v3296 = vld [vmem:[%s3291 + $0x20] sm:$0xff]
        %v3297 = vld [vmem:[%s3291 + $0x28] sm:$0xff]
        %v3298 = vld [vmem:[%s3291 + $0x30] sm:$0xff]
        %v3299 = vld [vmem:[%s3291 + $0x38] sm:$0xff]
        %v3300 = vld [vmem:[%s3291 + $0x40] sm:$0xff]
        %v3301 = vld [vmem:[%s3291 + $0x48] sm:$0xff]
        %v3302 = vld [vmem:[%s3291 + $0x50] sm:$0xff]
        %v3303 = vld [vmem:[%s3291 + $0x58] sm:$0xff]
        %v3304 = vld [vmem:[%s3291 + $0x60] sm:$0xff]
        %v3305 = vld [vmem:[%s3291 + $0x68] sm:$0xff]
        %v3306 = vld [vmem:[%s3291 + $0x70] sm:$0xff]
        %v3307 = vld [vmem:[%s3291 + $0x78] sm:$0xff]
        %v3308 = vld [vmem:[%s3291 + $0x80] sm:$0xff]
        %v3309 = vld [vmem:[%s3291 + $0x88] sm:$0xff]
        %v3310 = vld [vmem:[%s3291 + $0x90] sm:$0xff]
        %v3311 = vld [vmem:[%s3291 + $0x98] sm:$0xff]
        %v3312 = vld [vmem:[%s3291 + $0xa0] sm:$0xff]
        %v3313 = vld [vmem:[%s3291 + $0xa8] sm:$0xff]
        %v3314 = vld [vmem:[%s3291 + $0xb0] sm:$0xff]
        %v3315 = vld [vmem:[%s3291 + $0xb8] sm:$0xff]
        %v3316 = vld [vmem:[%s3291 + $0xc0] sm:$0xff]
        %v3317 = vld [vmem:[%s3291 + $0xc8] sm:$0xff]
        %v3318 = vld [vmem:[%s3291 + $0xd0] sm:$0xff]
        %v3319 = vld [vmem:[%s3291 + $0xd8] sm:$0xff]
        %v3320 = vld [vmem:[%s3291 + $0xe0] sm:$0xff]
        %v3321 = vld [vmem:[%s3291 + $0xe8] sm:$0xff]
        %v3322 = vld [vmem:[%s3291 + $0xf0] sm:$0xff]
        %v3323 = vld [vmem:[%s3291 + $0xf8] sm:$0xff]
        %v3324 = vld [vmem:[%s3291 + $0x100] sm:$0xff]
        %v3325 = vld [vmem:[%s3291 + $0x108] sm:$0xff]
        %v3326 = vld [vmem:[%s3291 + $0x110] sm:$0xff]
        %v3327 = vld [vmem:[%s3291 + $0x118] sm:$0xff]
        %v3328 = vld [vmem:[%s3291 + $0x120] sm:$0xff]
        %v3329 = vld [vmem:[%s3291 + $0x128] sm:$0xff]
        %v3330 = vld [vmem:[%s3291 + $0x130] sm:$0xff]
        %v3331 = vld [vmem:[%s3291 + $0x138] sm:$0xff]
        %v3332 = vld [vmem:[%s3291 + $0x140] sm:$0xff]
        %v3333 = vld [vmem:[%s3291 + $0x148] sm:$0xff]
        %v3334 = vld [vmem:[%s3291 + $0x150] sm:$0xff]
        %v3335 = vld [vmem:[%s3291 + $0x158] sm:$0xff]
        %v3336 = vld [vmem:[%s3291 + $0x160] sm:$0xff]
        %v3337 = vld [vmem:[%s3291 + $0x168] sm:$0xff]
        %v3338 = vld [vmem:[%s3291 + $0x170] sm:$0xff]
        %v3339 = vld [vmem:[%s3291 + $0x178] sm:$0xff]
        %v3340 = vld [vmem:[%s3291 + $0x180] sm:$0xff]
        %v3341 = vld [vmem:[%s3291 + $0x188] sm:$0xff]
        %v3342 = vld [vmem:[%s3291 + $0x190] sm:$0xff]
        %v3343 = vld [vmem:[%s3291 + $0x198] sm:$0xff]
        %v3344 = vld [vmem:[%s3291 + $0x1a0] sm:$0xff]
        %v3345 = vld [vmem:[%s3291 + $0x1a8] sm:$0xff]
        %v3346 = vld [vmem:[%s3291 + $0x1b0] sm:$0xff]
        %v3347 = vld [vmem:[%s3291 + $0x1b8] sm:$0xff]
        %v3348 = vld [vmem:[%s3291 + $0x1c0] sm:$0xff]
        %v3349 = vld [vmem:[%s3291 + $0x1c8] sm:$0xff]
        %v3350 = vld [vmem:[%s3291 + $0x1d0] sm:$0xff]
        %v3351 = vld [vmem:[%s3291 + $0x1d8] sm:$0xff]
        %v3352 = vld [vmem:[%s3291 + $0x1e0] sm:$0xff]
        %v3353 = vld [vmem:[%s3291 + $0x1e8] sm:$0xff]
        %v3354 = vld [vmem:[%s3291 + $0x1f0] sm:$0xff]
        %v3355 = vld [vmem:[%s3291 + $0x1f8] sm:$0xff]
        %s3356 = scalar_lea.vmem %s11, 1
        %v3357 = vld [vmem:[%s3356] sm:$0x1]
        %v3359 = vlaneseq
        %v3360 = vshrl.u32 %v3359, 7
        %v3361 = vsub.s32 0, %v3360
        %v3362 = vrot.slane %v3357, %v3361
        %3364 = vmatprep.subr.mxu0 0.0
        %3365 = vmatpush1.msra.mxu0 %v3307
        %3366 = vmatprep.subr.mxu0 0.0
        %3367 = vmatpush1.msra.mxu0 %v3306
        %3368 = vmatprep.subr.mxu0 0.0
        %3369 = vmatpush1.msra.mxu0 %v3305
        %3370 = vmatprep.subr.mxu0 0.0
        %3371 = vmatpush1.msra.mxu0 %v3304
        %3372 = vmatprep.subr.mxu0 0.0
        %3373 = vmatpush1.msra.mxu0 %v3303
        %3374 = vmatprep.subr.mxu0 0.0
        %3375 = vmatpush1.msra.mxu0 %v3302
        %3376 = vmatprep.subr.mxu0 0.0
        %3377 = vmatpush1.msra.mxu0 %v3301
        %3378 = vmatprep.subr.mxu0 0.0
        %3379 = vmatpush1.msra.mxu0 %v3300
        %3380 = vmatprep.subr.mxu0 0.0
        %3381 = vmatpush1.msra.mxu0 %v3299
        %3382 = vmatprep.subr.mxu0 0.0
        %3383 = vmatpush1.msra.mxu0 %v3298
        %3384 = vmatprep.subr.mxu0 0.0
        %3385 = vmatpush1.msra.mxu0 %v3297
        %3386 = vmatprep.subr.mxu0 0.0
        %3387 = vmatpush1.msra.mxu0 %v3296
        %3388 = vmatprep.subr.mxu0 0.0
        %3389 = vmatpush1.msra.mxu0 %v3295
        %3390 = vmatprep.subr.mxu0 0.0
        %3391 = vmatpush1.msra.mxu0 %v3294
        %3392 = vmatprep.subr.mxu0 0.0
        %3393 = vmatpush1.msra.mxu0 %v3293
        %3394 = vmatprep.subr.mxu0 0.0
        %3395 = vmatpush1.msra.mxu0 %v3292
        %3396 = vmatprep.subr.mxu0 0.0
        %3397 = vmatpush2.msra.mxu0 %v3323
        %3398 = vmatprep.subr.mxu0 0.0
        %3399 = vmatpush2.msra.mxu0 %v3322
        %3400 = vmatprep.subr.mxu0 0.0
        %3401 = vmatpush2.msra.mxu0 %v3321
        %3402 = vmatprep.subr.mxu0 0.0
        %3403 = vmatpush2.msra.mxu0 %v3320
        %3404 = vmatprep.subr.mxu0 0.0
        %3405 = vmatpush2.msra.mxu0 %v3319
        %3406 = vmatprep.subr.mxu0 0.0
        %3407 = vmatpush2.msra.mxu0 %v3318
        %3408 = vmatprep.subr.mxu0 0.0
        %3409 = vmatpush2.msra.mxu0 %v3317
        %3410 = vmatprep.subr.mxu0 0.0
        %3411 = vmatpush2.msra.mxu0 %v3316
        %3412 = vmatprep.subr.mxu0 0.0
        %3413 = vmatpush2.msra.mxu0 %v3315
        %3414 = vmatprep.subr.mxu0 0.0
        %3415 = vmatpush2.msra.mxu0 %v3314
        %3416 = vmatprep.subr.mxu0 0.0
        %3417 = vmatpush2.msra.mxu0 %v3313
        %3418 = vmatprep.subr.mxu0 0.0
        %3419 = vmatpush2.msra.mxu0 %v3312
        %3420 = vmatprep.subr.mxu0 0.0
        %3421 = vmatpush2.msra.mxu0 %v3311
        %3422 = vmatprep.subr.mxu0 0.0
        %3423 = vmatpush2.msra.mxu0 %v3310
        %3424 = vmatprep.subr.mxu0 0.0
        %3425 = vmatpush2.msra.mxu0 %v3309
        %3426 = vmatprep.subr.mxu0 0.0
        %3427 = vmatpush2.msra.mxu0 %v3308
        %3428 = vmatprep.mubr.f32.mxu0 %v3288
        %3429 = vmatmul.mubr.f32.gmra.mxu0 %v3287
        %v3430 = vpop.f32.mrf.mxu0
        %v3431 = vadd.f32 %v3362, %v3430
        %v3432 = vpop.f32.mrf.mxu0
        %3433 = vdwg.mxu0
        %3434 = vmatprep.subr.mxu0 0.0
        %3435 = vmatpush1.msra.mxu0 %v3339
        %3436 = vmatprep.subr.mxu0 0.0
        %3437 = vmatpush1.msra.mxu0 %v3338
        %3438 = vmatprep.subr.mxu0 0.0
        %3439 = vmatpush1.msra.mxu0 %v3337
        %3440 = vmatprep.subr.mxu0 0.0
        %3441 = vmatpush1.msra.mxu0 %v3336
        %3442 = vmatprep.subr.mxu0 0.0
        %3443 = vmatpush1.msra.mxu0 %v3335
        %3444 = vmatprep.subr.mxu0 0.0
        %3445 = vmatpush1.msra.mxu0 %v3334
        %3446 = vmatprep.subr.mxu0 0.0
        %3447 = vmatpush1.msra.mxu0 %v3333
        %3448 = vmatprep.subr.mxu0 0.0
        %3449 = vmatpush1.msra.mxu0 %v3332
        %3450 = vmatprep.subr.mxu0 0.0
        %3451 = vmatpush1.msra.mxu0 %v3331
        %3452 = vmatprep.subr.mxu0 0.0
        %3453 = vmatpush1.msra.mxu0 %v3330
        %3454 = vmatprep.subr.mxu0 0.0
        %3455 = vmatpush1.msra.mxu0 %v3329
        %3456 = vmatprep.subr.mxu0 0.0
        %3457 = vmatpush1.msra.mxu0 %v3328
        %3458 = vmatprep.subr.mxu0 0.0
        %3459 = vmatpush1.msra.mxu0 %v3327
        %3460 = vmatprep.subr.mxu0 0.0
        %3461 = vmatpush1.msra.mxu0 %v3326
        %3462 = vmatprep.subr.mxu0 0.0
        %3463 = vmatpush1.msra.mxu0 %v3325
        %3464 = vmatprep.subr.mxu0 0.0
        %3465 = vmatpush1.msra.mxu0 %v3324
        %3466 = vmatprep.subr.mxu0 0.0
        %3467 = vmatpush2.msra.mxu0 %v3355
        %3468 = vmatprep.subr.mxu0 0.0
        %3469 = vmatpush2.msra.mxu0 %v3354
        %3470 = vmatprep.subr.mxu0 0.0
        %3471 = vmatpush2.msra.mxu0 %v3353
        %3472 = vmatprep.subr.mxu0 0.0
        %3473 = vmatpush2.msra.mxu0 %v3352
        %3474 = vmatprep.subr.mxu0 0.0
        %3475 = vmatpush2.msra.mxu0 %v3351
        %3476 = vmatprep.subr.mxu0 0.0
        %3477 = vmatpush2.msra.mxu0 %v3350
        %3478 = vmatprep.subr.mxu0 0.0
        %3479 = vmatpush2.msra.mxu0 %v3349
        %3480 = vmatprep.subr.mxu0 0.0
        %3481 = vmatpush2.msra.mxu0 %v3348
        %3482 = vmatprep.subr.mxu0 0.0
        %3483 = vmatpush2.msra.mxu0 %v3347
        %3484 = vmatprep.subr.mxu0 0.0
        %3485 = vmatpush2.msra.mxu0 %v3346
        %3486 = vmatprep.subr.mxu0 0.0
        %3487 = vmatpush2.msra.mxu0 %v3345
        %3488 = vmatprep.subr.mxu0 0.0
        %3489 = vmatpush2.msra.mxu0 %v3344
        %3490 = vmatprep.subr.mxu0 0.0
        %3491 = vmatpush2.msra.mxu0 %v3343
        %3492 = vmatprep.subr.mxu0 0.0
        %3493 = vmatpush2.msra.mxu0 %v3342
        %3494 = vmatprep.subr.mxu0 0.0
        %3495 = vmatpush2.msra.mxu0 %v3341
        %3496 = vmatprep.subr.mxu0 0.0
        %3497 = vmatpush2.msra.mxu0 %v3340
        %3498 = vmatprep.mubr.f32.mxu0 %v3290
        %3499 = vmatmul.mubr.f32.gmra.mxu0 %v3289
        %v3500 = vpop.f32.mrf.mxu0
        %v3501 = vadd.f32 %v3431, %v3500
        %v3502 = vpop.f32.mrf.mxu0
        %3503 = vdwg.mxu0
        %v3504 = vadd.f32 %v3101, %v3501
        %s3505 = scalar_lea.vmem %s12, 1
        %v3506 = vld [vmem:[%s3505] sm:$0x1]
        %s3507 = scalar_lea.vmem %s13, 1
        %v3508 = vld [vmem:[%s3507] sm:$0x1]
        %v3509 = vsel %vm496, %v3504, 0.0
        %3510 = vadd.xlane.f32.xlu0 %v3509
        %v3511 = vpop.xlane.xlu0 %3510
        %v3512 = vmul.f32 %v3511, %v1553
        %v3513 = vsub.f32 %v3504, %v3512
        %v3514 = vmul.f32 %v3513, %v3513
        %v3515 = vsel %vm496, %v3514, 0.0
        %3516 = vadd.xlane.f32.xlu0 %v3515
        %v3517 = vpop.xlane.xlu0 %3516
        %v3518 = vmul.f32 %v3517, %v1553
        %v3519 = vadd.f32 %v3518, 1e-05
        %v3520 = vrsqrt.pop %v3519
        %v3521 = vmul.f32 %v3513, %v3520
        %v3523 = vlaneseq
        %v3524 = vshrl.u32 %v3523, 7
        %v3525 = vsub.s32 0, %v3524
        %v3526 = vrot.slane %v3506, %v3525
        %v3528 = vmul.f32 %v3521, %v3526
        %v3530 = vlaneseq
        %v3531 = vshrl.u32 %v3530, 7
        %v3532 = vsub.s32 0, %v3531
        %v3533 = vrot.slane %v3508, %v3532
        %v3535 = vadd.f32 %v3528, %v3533
        %3536 = vst.msk [vmem:[%s469] sm:$0xff] %vm496, %v3535
        %s3537 = sand.u32 %s340, 1
        %s3538 = scalar_lea.sflag [#allocation3], %s3537
        %s3539 = sand.u32 %s340, 1
        %s3540 = smul.addr %s3539, 8
        %s3541 = scalar_lea.vmem [#allocation2], %s3540
        // Predicated region
        $region77: #{self_attn_enc.1} parent=75 // pred_check
          %p3542 = pneg %p350
        $region78: #{self_attn_enc.1} parent=75 // pred_check_branch
          %3544 = sbr.rel (%p3542) target = $region80
        $region79: #{self_attn_enc.1} parent=75 // pred_region
          %s3546 = ssub.s32 128, 128
          %3547 = vsyncadd %s3538, %s3546
          %s3548 = smul.addr %s28, 128
          %s3549 = scalar_lea.hbm %s14, %s3548
          %s3551 = sshll.u32 %s3541, 4
          %s3552 = int_to_ptr.vmem [resolvable:$true] %s3551
          %3554 = dma.vmem_to_hbm [thread:$0]  %s3552, 128, %s3549, %s3538
        $region80: #{self_attn_enc.1} parent=75 // pred_fallthru
          _
      $region76: #{self_attn_enc.1} parent=5 // pred_fallthru
        _
      %p3555 = scmp.le.s32.totalorder 2, %s23
      // Predicated region
      $region81: #{self_attn_enc.1} parent=5 // pred_check
        %p3556 = pneg %p3555
      $region82: #{self_attn_enc.1} parent=5 // pred_check_branch
        %3558 = sbr.rel (%p3556) target = $region84
      $region83: #{self_attn_enc.1} parent=5 // pred_region
        %s3559 = ssub.s32 %s23, 2
        // Predicated region
        $region85: #{self_attn_enc.1} parent=83 // pred_check
          %p3560 = pneg %p356
        $region86: #{self_attn_enc.1} parent=83 // pred_check_branch
          %3562 = sbr.rel (%p3560) target = $region88
        $region87: #{self_attn_enc.1} parent=83 // pred_region
          %s3563 = sand.u32 %s341, 1
          %s3564 = scalar_lea.sflag [#allocation3], %s3563
          %s3565 = sand.u32 %s341, 1
          %s3566 = smul.addr %s3565, 8
          %s3567 = scalar_lea.vmem [#allocation2], %s3566
          %3568 = dma.done %s3564, 128
        $region88: #{self_attn_enc.1} parent=83 // pred_fallthru
          _
      $region84: #{self_attn_enc.1} parent=5 // pred_fallthru
        _
    $region6: #{self_attn_enc.1} parent=1 // loop_footer
      %s27 = sadd.s32 1, %s23
    $region7: #{self_attn_enc.1} parent=1 // loop_footer_branch
      %22 = sbr.rel target = $region3
    $region8: #{self_attn_enc.1} parent=1 // loop_exit
      _
    %3569 = vsyncpa [#allocation3], 1
    %s3570 = scalar_lea.sflag [#allocation3], 1
    %3571 = vsyncpa %s3570, 1

</llo_original>
